<compile_context>
chip_gen: v6e
topology: v6e:2x2x1
jax: 0.10.0
libtpu: 0.0.40
codegen_flags: <defaults>
</compile_context>

<pallas_src>
import functools

import jax
import jax.numpy as jnp
from jax import lax
from jax.experimental import pallas as pl
from jax.experimental.pallas import tpu as pltpu

LANE = 128                      # lane width / channel padding multiple
TM = 512                        # row tile for 1x1-conv matmuls (review: 256->512)
ROW_BLOCK_PIXELS = 512          # target flattened pixels per 3x3 row block
VMEM_LIMIT = 32 * 1024 * 1024   # raise v5e's 16 MiB scoped default; fits v6e/v7x
# TODO(synk): re-derive TM / ROW_BLOCK_PIXELS per generation (v7x: 64 MiB VMEM,
# 2 TCs; v5e: 128-deep MXU) instead of one constant.


def _round_up(x, m):
    return (x + m - 1) // m * m


def _largest_divisor_leq(n, cap):
    cap = max(1, min(n, cap))
    for d in range(cap, 0, -1):
        if n % d == 0:
            return d
    return 1


# ----------------------------------------------------------------------------
# Kernel 1: tiled (TM, K) @ (K, Cout) + bias (+ ReLU).  BN scale pre-folded.
# ----------------------------------------------------------------------------
def _mm_bias_kernel(x_ref, w_ref, b_ref, o_ref, *, apply_relu):
    y = jnp.dot(x_ref[...], w_ref[...], preferred_element_type=jnp.float32)
    y = y + b_ref[...]
    if apply_relu:
        y = jnp.maximum(y, 0.0)
    o_ref[...] = y.astype(o_ref.dtype)


def matmul_bias(x2d, w, b, *, relu, out_dtype):
    M, K = x2d.shape
    Cout = w.shape[1]
    tm = min(TM, M)                      # partial last block handled by Pallas
    grid = (pl.cdiv(M, tm),)
    flops = 2 * M * K * Cout
    bytes_accessed = (M * K * x2d.dtype.itemsize + K * Cout * w.dtype.itemsize
                      + Cout * 4 + M * Cout * jnp.dtype(out_dtype).itemsize)
    # TODO(synk): could write directly into the spatially-padded conv2 input
    # buffer via input_output_aliases to save one pass over y1.
    return pl.pallas_call(
        functools.partial(_mm_bias_kernel, apply_relu=relu),
        out_shape=jax.ShapeDtypeStruct((M, Cout), out_dtype),
        grid=grid,
        in_specs=[
            pl.BlockSpec((tm, K), lambda i: (i, 0)),      # streamed row tiles
            pl.BlockSpec((K, Cout), lambda i: (0, 0)),    # weights VMEM-resident
            pl.BlockSpec((1, Cout), lambda i: (0, 0)),    # bias   VMEM-resident
        ],
        out_specs=pl.BlockSpec((tm, Cout), lambda i: (i, 0)),
        compiler_params=pltpu.CompilerParams(
            dimension_semantics=("parallel",), vmem_limit_bytes=VMEM_LIMIT),
        cost_estimate=pl.CostEstimate(flops=flops, transcendentals=0,
                                      bytes_accessed=bytes_accessed),
    )(x2d, w, b)


# ----------------------------------------------------------------------------
# Kernel 2: 3x3 conv (pad=1) + bn + relu.
#   Input is the per-image spatially padded, row-FLATTENED image (L, C).
#   For output row block starting at flat offset `base`, tap (dh, dw) is the
#   contiguous slice [base + dh*Wp + dw, +rb*Wp) -- a pure row shift, no 2D
#   crop.  All 9 taps are lane-concatenated -> one (rb*Wp, 9C) @ (9C, Cout)
#   matmul (deep MXU contraction).  Junk columns (w >= Wo) are cropped once
#   at the store.
# ----------------------------------------------------------------------------
def _conv3x3_kernel(x_ref, w_ref, b_ref, o_ref, *, rb, Wp, Wo, n_rb):
    C = x_ref.shape[-1]
    Cout = w_ref.shape[-1]
    rbw = rb * Wp
    if n_rb == 1:
        base = 0                                   # fully static offsets
    else:
        base = pl.program_id(1) * rbw
        if rbw % 8 == 0:
            base = pl.multiple_of(base, 8)         # aligned sublane loads
    taps = []
    for t in range(9):
        dh, dw = t // 3, t % 3
        taps.append(x_ref[0, pl.ds(base + dh * Wp + dw, rbw), :])
    xcat = jnp.concatenate(taps, axis=-1)          # (rbw, 9C) bf16, lane concat
    y = jnp.dot(xcat, w_ref[...], preferred_element_type=jnp.float32)
    y = jnp.maximum(y + b_ref[...], 0.0)
    y = y.reshape(rb, Wp, Cout)[:, :Wo, :]         # crop the 2 junk columns once
    o_ref[...] = y[None].astype(o_ref.dtype)


def conv3x3_bn_relu(y_nhwc, w9, b):
    # y_nhwc: (N, H, W, C) bf16 ; w9: (9*C, Cout) bf16 ; b: (1, Cout) f32
    N, H, W, C = y_nhwc.shape
    Cout = w9.shape[-1]
    Wp = W + 2
    # 1 top halo row, (1 halo + 1 slack) bottom rows so the last tap slice of
    # the last row block stays in-bounds after flattening; zero padded.
    xp = jnp.pad(y_nhwc, ((0, 0), (1, 2), (1, 1), (0, 0)))
    L = (H + 3) * Wp
    xflat = xp.reshape(N, L, C)

    rb = _largest_divisor_leq(H, max(1, ROW_BLOCK_PIXELS // Wp))
    n_rb = H // rb
    flops = 2 * N * H * W * 9 * C * Cout
    bytes_accessed = (N * L * C * 2 + 9 * C * Cout * 2
                      + N * H * W * Cout * 2 + Cout * 4)
    kernel = functools.partial(_conv3x3_kernel, rb=rb, Wp=Wp, Wo=W, n_rb=n_rb)
    return pl.pallas_call(
        kernel,
        out_shape=jax.ShapeDtypeStruct((N, H, W, Cout), jnp.bfloat16),
        grid=(N, n_rb),                      # N x row-blocks: feeds both v7x TCs
        in_specs=[
            # whole flat padded image; block index constant over j -> no re-DMA
            pl.BlockSpec((1, L, C), lambda n, j: (n, 0, 0)),
            pl.BlockSpec((9 * C, Cout), lambda n, j: (0, 0)),   # resident weights
            pl.BlockSpec((1, Cout), lambda n, j: (0, 0)),
        ],
        out_specs=pl.BlockSpec((1, rb, W, Cout), lambda n, j: (n, j, 0, 0)),
        compiler_params=pltpu.CompilerParams(
            dimension_semantics=("parallel", "parallel"),
            vmem_limit_bytes=VMEM_LIMIT),
        cost_estimate=pl.CostEstimate(flops=flops, transcendentals=0,
                                      bytes_accessed=bytes_accessed),
    )(xflat, w9, b)


# ----------------------------------------------------------------------------
# Kernel 3: conv3 (1x1) + bn3 + shortcut + residual add + relu, fully fused.
# Outputs bf16 (halves the largest HBM writeback); accumulate/epilogue in f32.
# ----------------------------------------------------------------------------
def _conv1x1_identity_add_kernel(y_ref, r_ref, w_ref, b_ref, o_ref):
    y = jnp.dot(y_ref[...], w_ref[...], preferred_element_type=jnp.float32)
    y = y + b_ref[...] + r_ref[...].astype(jnp.float32)
    o_ref[...] = jnp.maximum(y, 0.0).astype(o_ref.dtype)


def _conv1x1_proj_add_kernel(y_ref, xs_ref, w_ref, b_ref, wsc_ref, bsc_ref,
                             o_ref):
    y = jnp.dot(y_ref[...], w_ref[...], preferred_element_type=jnp.float32)
    r = jnp.dot(xs_ref[...], wsc_ref[...], preferred_element_type=jnp.float32)
    y = y + b_ref[...] + r + bsc_ref[...]
    o_ref[...] = jnp.maximum(y, 0.0).astype(o_ref.dtype)


def conv1x1_identity_add(y2d, r2d, w, b):
    M, K = y2d.shape
    Cout = w.shape[1]
    tm = min(TM, M)
    flops = 2 * M * K * Cout
    bytes_accessed = (M * K * 2 + M * Cout * r2d.dtype.itemsize
                      + K * Cout * 2 + Cout * 4 + M * Cout * 2)
    return pl.pallas_call(
        _conv1x1_identity_add_kernel,
        out_shape=jax.ShapeDtypeStruct((M, Cout), jnp.bfloat16),
        grid=(pl.cdiv(M, tm),),
        in_specs=[
            pl.BlockSpec((tm, K), lambda i: (i, 0)),
            pl.BlockSpec((tm, Cout), lambda i: (i, 0)),      # f32 residual
            pl.BlockSpec((K, Cout), lambda i: (0, 0)),
            pl.BlockSpec((1, Cout), lambda i: (0, 0)),
        ],
        out_specs=pl.BlockSpec((tm, Cout), lambda i: (i, 0)),
        compiler_params=pltpu.CompilerParams(
            dimension_semantics=("parallel",), vmem_limit_bytes=VMEM_LIMIT),
        cost_estimate=pl.CostEstimate(flops=flops, transcendentals=0,
                                      bytes_accessed=bytes_accessed),
    )(y2d, r2d, w, b)


def conv1x1_proj_add(y2d, xs2d, w, b, wsc, bsc):
    M, K = y2d.shape
    Ksc = xs2d.shape[1]
    Cout = w.shape[1]
    tm = min(TM, M)
    flops = 2 * M * (K + Ksc) * Cout
    bytes_accessed = (M * K * 2 + M * Ksc * 2 + K * Cout * 2 + Ksc * Cout * 2
                      + 2 * Cout * 4 + M * Cout * 2)
    # TODO(synk): add a Cout grid axis for very wide (Co_p >= 1024) layer4-style
    # blocks so weight slabs stream instead of staying fully resident (v7x VMEM).
    return pl.pallas_call(
        _conv1x1_proj_add_kernel,
        out_shape=jax.ShapeDtypeStruct((M, Cout), jnp.bfloat16),
        grid=(pl.cdiv(M, tm),),
        in_specs=[
            pl.BlockSpec((tm, K), lambda i: (i, 0)),
            pl.BlockSpec((tm, Ksc), lambda i: (i, 0)),
            pl.BlockSpec((K, Cout), lambda i: (0, 0)),
            pl.BlockSpec((1, Cout), lambda i: (0, 0)),
            pl.BlockSpec((Ksc, Cout), lambda i: (0, 0)),
            pl.BlockSpec((1, Cout), lambda i: (0, 0)),
        ],
        out_specs=pl.BlockSpec((tm, Cout), lambda i: (i, 0)),
        compiler_params=pltpu.CompilerParams(
            dimension_semantics=("parallel",), vmem_limit_bytes=VMEM_LIMIT),
        cost_estimate=pl.CostEstimate(flops=flops, transcendentals=0,
                                      bytes_accessed=bytes_accessed),
    )(y2d, xs2d, w, b, wsc, bsc)


# ----------------------------------------------------------------------------
# Bottleneck forward (Pallas) — jit'ed so all glue (transpose/pad/cast/slice)
# fuses and dispatch gaps between the three pallas_calls disappear.
# ----------------------------------------------------------------------------
@functools.partial(jax.jit, static_argnames=("stride",))
def bottleneck_forward(params, x_nchw, *, stride):
    x = jnp.transpose(x_nchw, (0, 2, 3, 1))                     # NHWC f32
    N, H, W, Cin = x.shape
    planes = params["w1"].shape[1]
    out_planes = params["w3"].shape[1]

    Cin_p = _round_up(Cin, LANE)
    P_p = _round_up(planes, LANE)
    Co_p = _round_up(out_planes, LANE)

    # Fold BN scale into conv weights (f32), then cast to bf16 BEFORE padding.
    w1 = jnp.pad((params["w1"] * params["s1"]).astype(jnp.bfloat16),
                 ((0, Cin_p - Cin), (0, P_p - planes)))
    b1 = jnp.pad(params["b1"], ((0, 0), (0, P_p - planes)))
    w2 = (params["w2"].reshape(3, 3, planes, planes)
          * params["s2"].reshape(1, 1, 1, planes)).astype(jnp.bfloat16)
    w2 = jnp.pad(w2, ((0, 0), (0, 0), (0, P_p - planes), (0, P_p - planes)))
    w2 = w2.reshape(9 * P_p, P_p)                                # (9C, Cout)
    b2 = jnp.pad(params["b2"], ((0, 0), (0, P_p - planes)))
    w3 = jnp.pad((params["w3"] * params["s3"]).astype(jnp.bfloat16),
                 ((0, P_p - planes), (0, Co_p - out_planes)))
    b3 = jnp.pad(params["b3"], ((0, 0), (0, Co_p - out_planes)))

    x_bf = jnp.pad(x.astype(jnp.bfloat16),                       # cast-then-pad
                   ((0, 0), (0, 0), (0, 0), (0, Cin_p - Cin)))

    Ho = (H - 1) // stride + 1
    Wo = (W - 1) // stride + 1

    # conv1 (1x1) + bn1 + relu
    M1 = N * H * W
    y1 = matmul_bias(x_bf.reshape(M1, Cin_p), w1, b1,
                     relu=True, out_dtype=jnp.bfloat16)
    y1 = y1.reshape(N, H, W, P_p)

    # conv2 (3x3, pad=1) + bn2 + relu
    y2 = conv3x3_bn_relu(y1, w2, b2)                             # (N, H, W, P_p)
    if stride != 1:
        # TODO(synk): polyphase stride path would avoid the wasted (s^2-1)/s^2
        # 3x3 MACs; subsampling the full stride-1 output is simple and exact.
        y2 = y2[:, ::stride, ::stride, :]
    M2 = N * Ho * Wo
    y2 = y2.reshape(M2, P_p)

    # conv3 (1x1) + bn3 + shortcut + residual + relu, fused in one kernel
    if "w_sc" in params:
        wsc = jnp.pad((params["w_sc"] * params["s_sc"]).astype(jnp.bfloat16),
                      ((0, Cin_p - Cin), (0, Co_p - out_planes)))
        bsc = jnp.pad(params["b_sc"], ((0, 0), (0, Co_p - out_planes)))
        xs = x_bf[:, ::stride, ::stride, :].reshape(M2, Cin_p)
        out = conv1x1_proj_add(y2, xs, w3, b3, wsc, bsc)
    else:
        # identity shortcut kept in f32 (matches PyTorch's f32 skip add)
        res = jnp.pad(x, ((0, 0), (0, 0), (0, 0),
                          (0, Co_p - out_planes))).reshape(M2, Co_p)
        out = conv1x1_identity_add(y2, res, w3, b3)

    out = out[:, :out_planes].reshape(N, Ho, Wo, out_planes).astype(jnp.float32)
    return jnp.transpose(out, (0, 3, 1, 2))                      # back to NCHW


# ----------------------------------------------------------------------------
# Deterministic parameter init (synthetic; matches nn.Module shapes)
# ----------------------------------------------------------------------------
def init_params(key, in_planes, planes, stride):
    expansion = 4
    out_planes = expansion * planes
    ks = jax.random.split(key, 8)

    def conv_w(k, kin, kout):
        return jax.random.normal(k, (kin, kout), jnp.float32) / jnp.sqrt(kin)

    def bn_fold(k, n):
        # TODO(synk): PyTorch BatchNorm in train() mode uses batch statistics;
        # here BN is folded with (synthetic) running stats = inference mode.
        k1, k2, k3, k4 = jax.random.split(k, 4)
        gamma = jax.random.uniform(k1, (n,), jnp.float32, 0.5, 1.5)
        beta = 0.1 * jax.random.normal(k2, (n,), jnp.float32)
        mean = 0.1 * jax.random.normal(k3, (n,), jnp.float32)
        var = jax.random.uniform(k4, (n,), jnp.float32, 0.5, 1.5)
        scale = gamma / jnp.sqrt(var + 1e-5)
        bias = beta - mean * scale
        return scale.reshape(1, n), bias.reshape(1, n)

    params = {}
    params["w1"] = conv_w(ks[0], in_planes, planes)                 # 1x1
    params["s1"], params["b1"] = bn_fold(ks[1], planes)
    params["w2"] = conv_w(ks[2], 9 * planes, planes)                # 3x3 (HWIO flat)
    params["s2"], params["b2"] = bn_fold(ks[3], planes)
    params["w3"] = conv_w(ks[4], planes, out_planes)                # 1x1
    params["s3"], params["b3"] = bn_fold(ks[5], out_planes)
    if stride != 1 or in_planes != out_planes:
        params["w_sc"] = conv_w(ks[6], in_planes, out_planes)       # 1x1 (stride)
        params["s_sc"], params["b_sc"] = bn_fold(ks[7], out_planes)
    return params


# ----------------------------------------------------------------------------
# Pure-JAX reference (XLA convs, f32) for correctness
# ----------------------------------------------------------------------------
def bottleneck_reference(params, x_nchw, stride):
    x = jnp.transpose(x_nchw, (0, 2, 3, 1)).astype(jnp.float32)
    dn = ("NHWC", "HWIO", "NHWC")

    def bn(y, s, b):
        return y * s.reshape(1, 1, 1, -1) + b.reshape(1, 1, 1, -1)

    planes = params["w1"].shape[1]
    out = jax.nn.relu(bn(lax.conv_general_dilated(
        x, params["w1"].reshape(1, 1, *params["w1"].shape), (1, 1), "VALID",
        dimension_numbers=dn), params["s1"], params["b1"]))
    w2 = params["w2"].reshape(3, 3, planes, planes)
    out = jax.nn.relu(bn(lax.conv_general_dilated(
        out, w2, (stride, stride), ((1, 1), (1, 1)),
        dimension_numbers=dn), params["s2"], params["b2"]))
    out = bn(lax.conv_general_dilated(
        out, params["w3"].reshape(1, 1, *params["w3"].shape), (1, 1), "VALID",
        dimension_numbers=dn), params["s3"], params["b3"])
    if "w_sc" in params:
        sc = bn(lax.conv_general_dilated(
            x, params["w_sc"].reshape(1, 1, *params["w_sc"].shape),
            (stride, stride), "VALID", dimension_numbers=dn),
            params["s_sc"], params["b_sc"])
    else:
        sc = x
    out = jax.nn.relu(out + sc)
    return jnp.transpose(out, (0, 3, 1, 2))


if __name__ == "__main__":
    def run_case(name, in_planes, planes, stride, seed):
        kx, kp = jax.random.split(jax.random.PRNGKey(seed))
        x = jax.random.normal(kx, (2, in_planes, 16, 16), jnp.float32)  # NCHW
        params = init_params(kp, in_planes, planes, stride)
        out = jax.block_until_ready(bottleneck_forward(params, x, stride=stride))
        ho = (16 - 1) // stride + 1
        assert out.shape == (2, 4 * planes, ho, ho), (name, out.shape)
        ref = bottleneck_reference(params, x, stride)
        # bf16 MXU operands / bf16 activations -> looser tolerance than f32 ref.
        assert jnp.allclose(out, ref, atol=1e-1, rtol=1e-1), (
            name, float(jnp.max(jnp.abs(out - ref))))

    # Primary small case consistent with the module: batch=2, in_planes=4,
    # planes=4 (expansion=4 -> 16 out channels), spatial 16x16, stride=1
    # (projection shortcut since in_planes != 4*planes).
    run_case("proj_stride1", 4, 4, 1, 0)
    # Identity-shortcut path (in_planes == expansion*planes, stride=1).
    run_case("identity_stride1", 16, 4, 1, 1)
    # Stride-2 stage-transition block (projection shortcut + subsampled conv2).
    run_case("proj_stride2", 8, 4, 2, 2)

    print("KERNEL_OK")
</pallas_src>

<mosaic_0001>
module attributes {stable_mosaic.version = 11 : i64} {
  func.func @_mm_bias_kernel(%arg0: i32, %arg1: memref<512x128xbf16, #tpu.memory_space<vmem>>, %arg2: memref<128x128xbf16, #tpu.memory_space<vmem>>, %arg3: memref<1x128xf32, #tpu.memory_space<vmem>>, %arg4: memref<512x128xbf16, #tpu.memory_space<vmem>>) attributes {dimension_semantics = [#tpu.dimension_semantics<parallel>], iteration_bounds = array<i64: 1>, scalar_prefetch = 0 : i64, scratch_operands = 0 : i64, tpu.core_type = #tpu.core_type<tc>, window_params = [{transform_indices = @transform_0, window_bounds = array<i64: 512, 128>}, {pipeline_mode = #tpu.pipeline_mode<synchronous>, transform_indices = @transform_1, window_bounds = array<i64: 128, 128>}, {pipeline_mode = #tpu.pipeline_mode<synchronous>, transform_indices = @transform_2, window_bounds = array<i64: 1, 128>}, {transform_indices = @transform_3, window_bounds = array<i64: 512, 128>}]} {
    %c0 = arith.constant 0 : index
    %c0_0 = arith.constant 0 : index
    %0 = vector.load %arg1[%c0, %c0_0] : memref<512x128xbf16, #tpu.memory_space<vmem>>, vector<512x128xbf16>
    %c0_1 = arith.constant 0 : index
    %c0_2 = arith.constant 0 : index
    %1 = vector.load %arg2[%c0_1, %c0_2] : memref<128x128xbf16, #tpu.memory_space<vmem>>, vector<128x128xbf16>
    %cst = arith.constant dense<0.000000e+00> : vector<512x128xf32>
    %2 = tpu.matmul %0, %1, %cst {dimension_numbers = #tpu.dot_dimension_numbers<[1], [0], [0], [1], [0, 0, 1, 1], [], []>} : vector<512x128xbf16>, vector<128x128xbf16>, vector<512x128xf32> -> vector<512x128xf32>
    %c0_3 = arith.constant 0 : index
    %c0_4 = arith.constant 0 : index
    %3 = vector.load %arg3[%c0_3, %c0_4] : memref<1x128xf32, #tpu.memory_space<vmem>>, vector<1x128xf32>
    %4 = vector.broadcast %3 : vector<1x128xf32> to vector<512x128xf32>
    %5 = arith.addf %2, %4 : vector<512x128xf32>
    %cst_5 = arith.constant 0.000000e+00 : f32
    %6 = vector.broadcast %cst_5 : f32 to vector<512x128xf32>
    %7 = arith.maximumf %5, %6 : vector<512x128xf32>
    %8 = arith.truncf %7 : vector<512x128xf32> to vector<512x128xbf16>
    %c0_6 = arith.constant 0 : index
    %c0_7 = arith.constant 0 : index
    %9 = vector.load %arg4[%c0_6, %c0_7] : memref<512x128xbf16, #tpu.memory_space<vmem>>, vector<512x128xbf16>
    tpu.vector_store %arg4[%c0_6, %c0_7], %8 {strides = array<i32>} : memref<512x128xbf16, #tpu.memory_space<vmem>>, vector<512x128xbf16>,
    return
  }
  func.func @transform_0(%arg0: i32) -> (i32, i32) {
    %c0_i32 = arith.constant 0 : i32
    %c0_i32_0 = arith.constant 0 : i32
    return %arg0, %c0_i32 : i32, i32
  }
  func.func @transform_1(%arg0: i32) -> (i32, i32) {
    %c0_i32 = arith.constant 0 : i32
    %c0_i32_0 = arith.constant 0 : i32
    %c0_i32_1 = arith.constant 0 : i32
    return %c0_i32, %c0_i32_0 : i32, i32
  }
  func.func @transform_2(%arg0: i32) -> (i32, i32) {
    %c0_i32 = arith.constant 0 : i32
    %c0_i32_0 = arith.constant 0 : i32
    %c0_i32_1 = arith.constant 0 : i32
    return %c0_i32, %c0_i32_0 : i32, i32
  }
  func.func @transform_3(%arg0: i32) -> (i32, i32) {
    %c0_i32 = arith.constant 0 : i32
    %c0_i32_0 = arith.constant 0 : i32
    return %arg0, %c0_i32 : i32, i32
  }
}

module attributes {stable_mosaic.version = 11 : i64} {
  func.func @_conv1x1_proj_add_kernel(%arg0: i32, %arg1: memref<512x128xbf16, #tpu.memory_space<vmem>>, %arg2: memref<512x128xbf16, #tpu.memory_space<vmem>>, %arg3: memref<128x128xbf16, #tpu.memory_space<vmem>>, %arg4: memref<1x128xf32, #tpu.memory_space<vmem>>, %arg5: memref<128x128xbf16, #tpu.memory_space<vmem>>, %arg6: memref<1x128xf32, #tpu.memory_space<vmem>>, %arg7: memref<512x128xbf16, #tpu.memory_space<vmem>>) attributes {dimension_semantics = [#tpu.dimension_semantics<parallel>], iteration_bounds = array<i64: 1>, scalar_prefetch = 0 : i64, scratch_operands = 0 : i64, tpu.core_type = #tpu.core_type<tc>, window_params = [{transform_indices = @transform_0, window_bounds = array<i64: 512, 128>}, {transform_indices = @transform_1, window_bounds = array<i64: 512, 128>}, {pipeline_mode = #tpu.pipeline_mode<synchronous>, transform_indices = @transform_2, window_bounds = array<i64: 128, 128>}, {pipeline_mode = #tpu.pipeline_mode<synchronous>, transform_indices = @transform_3, window_bounds = array<i64: 1, 128>}, {pipeline_mode = #tpu.pipeline_mode<synchronous>, transform_indices = @transform_4, window_bounds = array<i64: 128, 128>}, {pipeline_mode = #tpu.pipeline_mode<synchronous>, transform_indices = @transform_5, window_bounds = array<i64: 1, 128>}, {transform_indices = @transform_6, window_bounds = array<i64: 512, 128>}]} {
    %c0 = arith.constant 0 : index
    %c0_0 = arith.constant 0 : index
    %0 = vector.load %arg1[%c0, %c0_0] : memref<512x128xbf16, #tpu.memory_space<vmem>>, vector<512x128xbf16>
    %c0_1 = arith.constant 0 : index
    %c0_2 = arith.constant 0 : index
    %1 = vector.load %arg3[%c0_1, %c0_2] : memref<128x128xbf16, #tpu.memory_space<vmem>>, vector<128x128xbf16>
    %cst = arith.constant dense<0.000000e+00> : vector<512x128xf32>
    %2 = tpu.matmul %0, %1, %cst {dimension_numbers = #tpu.dot_dimension_numbers<[1], [0], [0], [1], [0, 0, 1, 1], [], []>} : vector<512x128xbf16>, vector<128x128xbf16>, vector<512x128xf32> -> vector<512x128xf32>
    %c0_3 = arith.constant 0 : index
    %c0_4 = arith.constant 0 : index
    %3 = vector.load %arg2[%c0_3, %c0_4] : memref<512x128xbf16, #tpu.memory_space<vmem>>, vector<512x128xbf16>
    %c0_5 = arith.constant 0 : index
    %c0_6 = arith.constant 0 : index
    %4 = vector.load %arg5[%c0_5, %c0_6] : memref<128x128xbf16, #tpu.memory_space<vmem>>, vector<128x128xbf16>
    %cst_7 = arith.constant dense<0.000000e+00> : vector<512x128xf32>
    %5 = tpu.matmul %3, %4, %cst_7 {dimension_numbers = #tpu.dot_dimension_numbers<[1], [0], [0], [1], [0, 0, 1, 1], [], []>} : vector<512x128xbf16>, vector<128x128xbf16>, vector<512x128xf32> -> vector<512x128xf32>
    %c0_8 = arith.constant 0 : index
    %c0_9 = arith.constant 0 : index
    %6 = vector.load %arg4[%c0_8, %c0_9] : memref<1x128xf32, #tpu.memory_space<vmem>>, vector<1x128xf32>
    %7 = vector.broadcast %6 : vector<1x128xf32> to vector<512x128xf32>
    %8 = arith.addf %2, %7 : vector<512x128xf32>
    %9 = arith.addf %8, %5 : vector<512x128xf32>
    %c0_10 = arith.constant 0 : index
    %c0_11 = arith.constant 0 : index
    %10 = vector.load %arg6[%c0_10, %c0_11] : memref<1x128xf32, #tpu.memory_space<vmem>>, vector<1x128xf32>
    %11 = vector.broadcast %10 : vector<1x128xf32> to vector<512x128xf32>
    %12 = arith.addf %9, %11 : vector<512x128xf32>
    %cst_12 = arith.constant 0.000000e+00 : f32
    %13 = vector.broadcast %cst_12 : f32 to vector<512x128xf32>
    %14 = arith.maximumf %12, %13 : vector<512x128xf32>
    %15 = arith.truncf %14 : vector<512x128xf32> to vector<512x128xbf16>
    %c0_13 = arith.constant 0 : index
    %c0_14 = arith.constant 0 : index
    %16 = vector.load %arg7[%c0_13, %c0_14] : memref<512x128xbf16, #tpu.memory_space<vmem>>, vector<512x128xbf16>
    tpu.vector_store %arg7[%c0_13, %c0_14], %15 {strides = array<i32>} : memref<512x128xbf16, #tpu.memory_space<vmem>>, vector<512x128xbf16>,
    return
  }
  func.func @transform_0(%arg0: i32) -> (i32, i32) {
    %c0_i32 = arith.constant 0 : i32
    %c0_i32_0 = arith.constant 0 : i32
    return %arg0, %c0_i32 : i32, i32
  }
  func.func @transform_1(%arg0: i32) -> (i32, i32) {
    %c0_i32 = arith.constant 0 : i32
    %c0_i32_0 = arith.constant 0 : i32
    return %arg0, %c0_i32 : i32, i32
  }
  func.func @transform_2(%arg0: i32) -> (i32, i32) {
    %c0_i32 = arith.constant 0 : i32
    %c0_i32_0 = arith.constant 0 : i32
    %c0_i32_1 = arith.constant 0 : i32
    return %c0_i32, %c0_i32_0 : i32, i32
  }
  func.func @transform_3(%arg0: i32) -> (i32, i32) {
    %c0_i32 = arith.constant 0 : i32
    %c0_i32_0 = arith.constant 0 : i32
    %c0_i32_1 = arith.constant 0 : i32
    return %c0_i32, %c0_i32_0 : i32, i32
  }
  func.func @transform_4(%arg0: i32) -> (i32, i32) {
    %c0_i32 = arith.constant 0 : i32
    %c0_i32_0 = arith.constant 0 : i32
    %c0_i32_1 = arith.constant 0 : i32
    return %c0_i32, %c0_i32_0 : i32, i32
  }
  func.func @transform_5(%arg0: i32) -> (i32, i32) {
    %c0_i32 = arith.constant 0 : i32
    %c0_i32_0 = arith.constant 0 : i32
    %c0_i32_1 = arith.constant 0 : i32
    return %c0_i32, %c0_i32_0 : i32, i32
  }
  func.func @transform_6(%arg0: i32) -> (i32, i32) {
    %c0_i32 = arith.constant 0 : i32
    %c0_i32_0 = arith.constant 0 : i32
    return %arg0, %c0_i32 : i32, i32
  }
}

module attributes {stable_mosaic.version = 11 : i64} {
  func.func @_conv3x3_kernel(%arg0: i32, %arg1: i32, %arg2: memref<1x342x128xbf16, #tpu.memory_space<vmem>>, %arg3: memref<1152x128xbf16, #tpu.memory_space<vmem>>, %arg4: memref<1x128xf32, #tpu.memory_space<vmem>>, %arg5: memref<1x16x16x128xbf16, #tpu.memory_space<vmem>>) attributes {dimension_semantics = [#tpu.dimension_semantics<parallel>, #tpu.dimension_semantics<parallel>], iteration_bounds = array<i64: 2, 1>, scalar_prefetch = 0 : i64, scratch_operands = 0 : i64, tpu.core_type = #tpu.core_type<tc>, window_params = [{transform_indices = @transform_0, window_bounds = array<i64: 1, 342, 128>}, {pipeline_mode = #tpu.pipeline_mode<synchronous>, transform_indices = @transform_1, window_bounds = array<i64: 1152, 128>}, {pipeline_mode = #tpu.pipeline_mode<synchronous>, transform_indices = @transform_2, window_bounds = array<i64: 1, 128>}, {transform_indices = @transform_3, window_bounds = array<i64: 1, 16, 16, 128>}]} {
    %c0 = arith.constant 0 : index
    %c0_0 = arith.constant 0 : index
    %c0_1 = arith.constant 0 : index
    %0 = vector.load %arg2[%c0, %c0_0, %c0_1] : memref<1x342x128xbf16, #tpu.memory_space<vmem>>, vector<1x288x128xbf16>
    %1 = vector.shape_cast %0 : vector<1x288x128xbf16> to vector<288x128xbf16>
    %c0_2 = arith.constant 0 : index
    %c1 = arith.constant 1 : index
    %c0_3 = arith.constant 0 : index
    %2 = vector.load %arg2[%c0_2, %c1, %c0_3] : memref<1x342x128xbf16, #tpu.memory_space<vmem>>, vector<1x288x128xbf16>
    %3 = vector.shape_cast %2 : vector<1x288x128xbf16> to vector<288x128xbf16>
    %c0_4 = arith.constant 0 : index
    %c2 = arith.constant 2 : index
    %c0_5 = arith.constant 0 : index
    %4 = vector.load %arg2[%c0_4, %c2, %c0_5] : memref<1x342x128xbf16, #tpu.memory_space<vmem>>, vector<1x288x128xbf16>
    %5 = vector.shape_cast %4 : vector<1x288x128xbf16> to vector<288x128xbf16>
    %c0_6 = arith.constant 0 : index
    %c18 = arith.constant 18 : index
    %c0_7 = arith.constant 0 : index
    %6 = vector.load %arg2[%c0_6, %c18, %c0_7] : memref<1x342x128xbf16, #tpu.memory_space<vmem>>, vector<1x288x128xbf16>
    %7 = vector.shape_cast %6 : vector<1x288x128xbf16> to vector<288x128xbf16>
    %c0_8 = arith.constant 0 : index
    %c19 = arith.constant 19 : index
    %c0_9 = arith.constant 0 : index
    %8 = vector.load %arg2[%c0_8, %c19, %c0_9] : memref<1x342x128xbf16, #tpu.memory_space<vmem>>, vector<1x288x128xbf16>
    %9 = vector.shape_cast %8 : vector<1x288x128xbf16> to vector<288x128xbf16>
    %c0_10 = arith.constant 0 : index
    %c20 = arith.constant 20 : index
    %c0_11 = arith.constant 0 : index
    %10 = vector.load %arg2[%c0_10, %c20, %c0_11] : memref<1x342x128xbf16, #tpu.memory_space<vmem>>, vector<1x288x128xbf16>
    %11 = vector.shape_cast %10 : vector<1x288x128xbf16> to vector<288x128xbf16>
    %c0_12 = arith.constant 0 : index
    %c36 = arith.constant 36 : index
    %c0_13 = arith.constant 0 : index
    %12 = vector.load %arg2[%c0_12, %c36, %c0_13] : memref<1x342x128xbf16, #tpu.memory_space<vmem>>, vector<1x288x128xbf16>
    %13 = vector.shape_cast %12 : vector<1x288x128xbf16> to vector<288x128xbf16>
    %c0_14 = arith.constant 0 : index
    %c37 = arith.constant 37 : index
    %c0_15 = arith.constant 0 : index
    %14 = vector.load %arg2[%c0_14, %c37, %c0_15] : memref<1x342x128xbf16, #tpu.memory_space<vmem>>, vector<1x288x128xbf16>
    %15 = vector.shape_cast %14 : vector<1x288x128xbf16> to vector<288x128xbf16>
    %c0_16 = arith.constant 0 : index
    %c38 = arith.constant 38 : index
    %c0_17 = arith.constant 0 : index
    %16 = vector.load %arg2[%c0_16, %c38, %c0_17] : memref<1x342x128xbf16, #tpu.memory_space<vmem>>, vector<1x288x128xbf16>
    %17 = vector.shape_cast %16 : vector<1x288x128xbf16> to vector<288x128xbf16>
    %18 = tpu.concatenate %1, %3, %5, %7, %9, %11, %13, %15, %17 in 1 : vector<288x128xbf16>, vector<288x128xbf16>, vector<288x128xbf16>, vector<288x128xbf16>, vector<288x128xbf16>, vector<288x128xbf16>, vector<288x128xbf16>, vector<288x128xbf16>, vector<288x128xbf16> -> vector<288x1152xbf16>
    %c0_18 = arith.constant 0 : index
    %c0_19 = arith.constant 0 : index
    %19 = vector.load %arg3[%c0_18, %c0_19] : memref<1152x128xbf16, #tpu.memory_space<vmem>>, vector<1152x128xbf16>
    %cst = arith.constant dense<0.000000e+00> : vector<288x128xf32>
    %20 = tpu.matmul %18, %19, %cst {dimension_numbers = #tpu.dot_dimension_numbers<[1], [0], [0], [1], [0, 0, 1, 1], [], []>} : vector<288x1152xbf16>, vector<1152x128xbf16>, vector<288x128xf32> -> vector<288x128xf32>
    %c0_20 = arith.constant 0 : index
    %c0_21 = arith.constant 0 : index
    %21 = vector.load %arg4[%c0_20, %c0_21] : memref<1x128xf32, #tpu.memory_space<vmem>>, vector<1x128xf32>
    %22 = vector.broadcast %21 : vector<1x128xf32> to vector<288x128xf32>
    %23 = arith.addf %20, %22 : vector<288x128xf32>
    %cst_22 = arith.constant 0.000000e+00 : f32
    %24 = vector.broadcast %cst_22 : f32 to vector<288x128xf32>
    %25 = arith.maximumf %23, %24 : vector<288x128xf32>
    %26 = vector.shape_cast %25 : vector<288x128xf32> to vector<16x18x128xf32>
    %27 = vector.extract_strided_slice %26 {offsets = [0, 0, 0], sizes = [16, 16, 128], strides = [1, 1, 1]} : vector<16x18x128xf32> to vector<16x16x128xf32>
    %28 = vector.shape_cast %27 : vector<16x16x128xf32> to vector<1x16x16x128xf32>
    %29 = arith.truncf %28 : vector<1x16x16x128xf32> to vector<1x16x16x128xbf16>
    %c0_23 = arith.constant 0 : index
    %c0_24 = arith.constant 0 : index
    %c0_25 = arith.constant 0 : index
    %c0_26 = arith.constant 0 : index
    %30 = vector.load %arg5[%c0_23, %c0_24, %c0_25, %c0_26] : memref<1x16x16x128xbf16, #tpu.memory_space<vmem>>, vector<1x16x16x128xbf16>
    tpu.vector_store %arg5[%c0_23, %c0_24, %c0_25, %c0_26], %29 {strides = array<i32>} : memref<1x16x16x128xbf16, #tpu.memory_space<vmem>>, vector<1x16x16x128xbf16>,
    return
  }
  func.func @transform_0(%arg0: i32, %arg1: i32) -> (i32, i32, i32) {
    %c0_i32 = arith.constant 0 : i32
    %c0_i32_0 = arith.constant 0 : i32
    %c0_i32_1 = arith.constant 0 : i32
    return %arg0, %c0_i32, %c0_i32_0 : i32, i32, i32
  }
  func.func @transform_1(%arg0: i32, %arg1: i32) -> (i32, i32) {
    %c0_i32 = arith.constant 0 : i32
    %c0_i32_0 = arith.constant 0 : i32
    %c0_i32_1 = arith.constant 0 : i32
    return %c0_i32, %c0_i32_0 : i32, i32
  }
  func.func @transform_2(%arg0: i32, %arg1: i32) -> (i32, i32) {
    %c0_i32 = arith.constant 0 : i32
    %c0_i32_0 = arith.constant 0 : i32
    %c0_i32_1 = arith.constant 0 : i32
    return %c0_i32, %c0_i32_0 : i32, i32
  }
  func.func @transform_3(%arg0: i32, %arg1: i32) -> (i32, i32, i32, i32) {
    %c0_i32 = arith.constant 0 : i32
    %c0_i32_0 = arith.constant 0 : i32
    %c0_i32_1 = arith.constant 0 : i32
    return %arg0, %arg1, %c0_i32, %c0_i32_0 : i32, i32, i32, i32
  }
}

</mosaic_0001>

<llo_original>
// kernel: bottleneck_forward.3
$region0: #{bottleneck_forward.3}
  #allocation0 [shape = 'u32[]', space=smem, size = 0x4, offset = 0x4, fixed_abs, tag = 'smem constant byte address 0x4 - core index']
  #allocation1 [shape = 'u32[144,128]{1,0:T(1,128)}', space=vmem, size = 0x12000, scoped, tag = 'internal scratch']
  %s0 = inlined_call_operand.vmem [shape: bf16[512,128], index: 0, kind: input, shape index: {}]
  %s1 = inlined_call_operand.vmem [shape: bf16[128,128], index: 1, kind: input, shape index: {}]
  %s2 = inlined_call_operand.vmem [shape: f32[1,128], index: 2, kind: input, shape index: {}]
  %s3 = inlined_call_operand.vmem [shape: bf16[512,128], index: 3, kind: output, shape index: {}]
  %s4 = sld [smem:[#allocation0]]
  $region22: #{bottleneck_forward.3} parent=0
    _
  %s6 = ssub.s32 1, %s4
  %s7 = scalar_select 0, %s6, %s4
  // Predicated region
  $region2: #{bottleneck_forward.3} parent=0 // pred_check
    _
  $region3: #{bottleneck_forward.3} parent=0 // pred_check_branch
    %9 = sbr.rel (0) target = $region5
  $region4: #{bottleneck_forward.3} parent=0 // pred_region
    _
  $region5: #{bottleneck_forward.3} parent=0 // pred_fallthru
    _
  // Predicated region
  $region6: #{bottleneck_forward.3} parent=0 // pred_check
    _
  $region7: #{bottleneck_forward.3} parent=0 // pred_check_branch
    %11 = sbr.rel (0) target = $region9
  $region8: #{bottleneck_forward.3} parent=0 // pred_region
    _
  $region9: #{bottleneck_forward.3} parent=0 // pred_fallthru
    _
  // Predicated region
  $region10: #{bottleneck_forward.3} parent=0 // pred_check
    _
  $region11: #{bottleneck_forward.3} parent=0 // pred_check_branch
    %13 = sbr.rel (0) target = $region13
  $region12: #{bottleneck_forward.3} parent=0 // pred_region
    _
  $region13: #{bottleneck_forward.3} parent=0 // pred_fallthru
    _
  %v15 = vld [vmem:[%s0] sm:$0xf]
  %v16 = vld [vmem:[%s0 + $0x4] sm:$0xf]
  %v17 = vld [vmem:[%s0 + $0x8] sm:$0xf]
  %v18 = vld [vmem:[%s0 + $0xc] sm:$0xf]
  %v19 = vld [vmem:[%s0 + $0x10] sm:$0xf]
  %v20 = vld [vmem:[%s0 + $0x14] sm:$0xf]
  %v21 = vld [vmem:[%s0 + $0x18] sm:$0xf]
  %v22 = vld [vmem:[%s0 + $0x1c] sm:$0xf]
  %v23 = vld [vmem:[%s0 + $0x20] sm:$0xf]
  %v24 = vld [vmem:[%s0 + $0x24] sm:$0xf]
  %v25 = vld [vmem:[%s0 + $0x28] sm:$0xf]
  %v26 = vld [vmem:[%s0 + $0x2c] sm:$0xf]
  %v27 = vld [vmem:[%s0 + $0x30] sm:$0xf]
  %v28 = vld [vmem:[%s0 + $0x34] sm:$0xf]
  %v29 = vld [vmem:[%s0 + $0x38] sm:$0xf]
  %v30 = vld [vmem:[%s0 + $0x3c] sm:$0xf]
  %v31 = vld [vmem:[%s0 + $0x40] sm:$0xf]
  %v32 = vld [vmem:[%s0 + $0x44] sm:$0xf]
  %v33 = vld [vmem:[%s0 + $0x48] sm:$0xf]
  %v34 = vld [vmem:[%s0 + $0x4c] sm:$0xf]
  %v35 = vld [vmem:[%s0 + $0x50] sm:$0xf]
  %v36 = vld [vmem:[%s0 + $0x54] sm:$0xf]
  %v37 = vld [vmem:[%s0 + $0x58] sm:$0xf]
  %v38 = vld [vmem:[%s0 + $0x5c] sm:$0xf]
  %v39 = vld [vmem:[%s0 + $0x60] sm:$0xf]
  %v40 = vld [vmem:[%s0 + $0x64] sm:$0xf]
  %v41 = vld [vmem:[%s0 + $0x68] sm:$0xf]
  %v42 = vld [vmem:[%s0 + $0x6c] sm:$0xf]
  %v43 = vld [vmem:[%s0 + $0x70] sm:$0xf]
  %v44 = vld [vmem:[%s0 + $0x74] sm:$0xf]
  %v45 = vld [vmem:[%s0 + $0x78] sm:$0xf]
  %v46 = vld [vmem:[%s0 + $0x7c] sm:$0xf]
  %v47 = vld [vmem:[%s0 + $0x80] sm:$0xf]
  %v48 = vld [vmem:[%s0 + $0x84] sm:$0xf]
  %v49 = vld [vmem:[%s0 + $0x88] sm:$0xf]
  %v50 = vld [vmem:[%s0 + $0x8c] sm:$0xf]
  %v51 = vld [vmem:[%s0 + $0x90] sm:$0xf]
  %v52 = vld [vmem:[%s0 + $0x94] sm:$0xf]
  %v53 = vld [vmem:[%s0 + $0x98] sm:$0xf]
  %v54 = vld [vmem:[%s0 + $0x9c] sm:$0xf]
  %v55 = vld [vmem:[%s0 + $0xa0] sm:$0xf]
  %v56 = vld [vmem:[%s0 + $0xa4] sm:$0xf]
  %v57 = vld [vmem:[%s0 + $0xa8] sm:$0xf]
  %v58 = vld [vmem:[%s0 + $0xac] sm:$0xf]
  %v59 = vld [vmem:[%s0 + $0xb0] sm:$0xf]
  %v60 = vld [vmem:[%s0 + $0xb4] sm:$0xf]
  %v61 = vld [vmem:[%s0 + $0xb8] sm:$0xf]
  %v62 = vld [vmem:[%s0 + $0xbc] sm:$0xf]
  %v63 = vld [vmem:[%s0 + $0xc0] sm:$0xf]
  %v64 = vld [vmem:[%s0 + $0xc4] sm:$0xf]
  %v65 = vld [vmem:[%s0 + $0xc8] sm:$0xf]
  %v66 = vld [vmem:[%s0 + $0xcc] sm:$0xf]
  %v67 = vld [vmem:[%s0 + $0xd0] sm:$0xf]
  %v68 = vld [vmem:[%s0 + $0xd4] sm:$0xf]
  %v69 = vld [vmem:[%s0 + $0xd8] sm:$0xf]
  %v70 = vld [vmem:[%s0 + $0xdc] sm:$0xf]
  %v71 = vld [vmem:[%s0 + $0xe0] sm:$0xf]
  %v72 = vld [vmem:[%s0 + $0xe4] sm:$0xf]
  %v73 = vld [vmem:[%s0 + $0xe8] sm:$0xf]
  %v74 = vld [vmem:[%s0 + $0xec] sm:$0xf]
  %v75 = vld [vmem:[%s0 + $0xf0] sm:$0xf]
  %v76 = vld [vmem:[%s0 + $0xf4] sm:$0xf]
  %v77 = vld [vmem:[%s0 + $0xf8] sm:$0xf]
  %v78 = vld [vmem:[%s0 + $0xfc] sm:$0xf]
  %v79 = vld [vmem:[%s1] sm:$0xf]
  %v80 = vld [vmem:[%s1 + $0x4] sm:$0xf]
  %v81 = vld [vmem:[%s1 + $0x8] sm:$0xf]
  %v82 = vld [vmem:[%s1 + $0xc] sm:$0xf]
  %v83 = vld [vmem:[%s1 + $0x10] sm:$0xf]
  %v84 = vld [vmem:[%s1 + $0x14] sm:$0xf]
  %v85 = vld [vmem:[%s1 + $0x18] sm:$0xf]
  %v86 = vld [vmem:[%s1 + $0x1c] sm:$0xf]
  %v87 = vld [vmem:[%s1 + $0x20] sm:$0xf]
  %v88 = vld [vmem:[%s1 + $0x24] sm:$0xf]
  %v89 = vld [vmem:[%s1 + $0x28] sm:$0xf]
  %v90 = vld [vmem:[%s1 + $0x2c] sm:$0xf]
  %v91 = vld [vmem:[%s1 + $0x30] sm:$0xf]
  %v92 = vld [vmem:[%s1 + $0x34] sm:$0xf]
  %v93 = vld [vmem:[%s1 + $0x38] sm:$0xf]
  %v94 = vld [vmem:[%s1 + $0x3c] sm:$0xf]
  %v95 = vld [vmem:[%s2] sm:$0x1]
  %v97 = vlaneseq
  %v98 = vshrl.u32 %v97, 7
  %v99 = vsub.s32 0, %v98
  %v100 = vrot.slane %v95, %v99
  %v166 = vunpack.c.l.b16 %v15
  %v167 = vunpack.c.l.b16 %v16
  %v168 = vunpack.c.l.b16 %v17
  %v169 = vunpack.c.l.b16 %v18
  %v170 = vunpack.c.l.b16 %v19
  %v171 = vunpack.c.l.b16 %v20
  %v172 = vunpack.c.l.b16 %v21
  %v173 = vunpack.c.l.b16 %v22
  %v174 = vunpack.c.l.b16 %v23
  %v175 = vunpack.c.l.b16 %v24
  %v176 = vunpack.c.l.b16 %v25
  %v177 = vunpack.c.l.b16 %v26
  %v178 = vunpack.c.l.b16 %v27
  %v179 = vunpack.c.l.b16 %v28
  %v180 = vunpack.c.l.b16 %v29
  %v181 = vunpack.c.l.b16 %v30
  %v182 = vunpack.c.l.b16 %v31
  %v183 = vunpack.c.l.b16 %v32
  %v184 = vunpack.c.l.b16 %v33
  %v185 = vunpack.c.l.b16 %v34
  %v186 = vunpack.c.l.b16 %v35
  %v187 = vunpack.c.l.b16 %v36
  %v188 = vunpack.c.l.b16 %v37
  %v189 = vunpack.c.l.b16 %v38
  %v190 = vunpack.c.l.b16 %v39
  %v191 = vunpack.c.l.b16 %v40
  %v192 = vunpack.c.l.b16 %v41
  %v193 = vunpack.c.l.b16 %v42
  %v194 = vunpack.c.l.b16 %v43
  %v195 = vunpack.c.l.b16 %v44
  %v196 = vunpack.c.l.b16 %v45
  %v197 = vunpack.c.l.b16 %v46
  %v198 = vunpack.c.l.b16 %v47
  %v199 = vunpack.c.l.b16 %v48
  %v200 = vunpack.c.l.b16 %v49
  %v201 = vunpack.c.l.b16 %v50
  %v202 = vunpack.c.l.b16 %v51
  %v203 = vunpack.c.l.b16 %v52
  %v204 = vunpack.c.l.b16 %v53
  %v205 = vunpack.c.l.b16 %v54
  %v206 = vunpack.c.l.b16 %v55
  %v207 = vunpack.c.l.b16 %v56
  %v208 = vunpack.c.l.b16 %v57
  %v209 = vunpack.c.l.b16 %v58
  %v210 = vunpack.c.l.b16 %v59
  %v211 = vunpack.c.l.b16 %v60
  %v212 = vunpack.c.l.b16 %v61
  %v213 = vunpack.c.l.b16 %v62
  %v214 = vunpack.c.l.b16 %v63
  %v215 = vunpack.c.l.b16 %v64
  %v216 = vunpack.c.l.b16 %v65
  %v217 = vunpack.c.l.b16 %v66
  %v218 = vunpack.c.l.b16 %v67
  %v219 = vunpack.c.l.b16 %v68
  %v220 = vunpack.c.l.b16 %v69
  %v221 = vunpack.c.l.b16 %v70
  %v222 = vunpack.c.l.b16 %v71
  %v223 = vunpack.c.l.b16 %v72
  %v224 = vunpack.c.l.b16 %v73
  %v225 = vunpack.c.l.b16 %v74
  %v226 = vunpack.c.l.b16 %v75
  %v227 = vunpack.c.l.b16 %v76
  %v228 = vunpack.c.l.b16 %v77
  %v229 = vunpack.c.l.b16 %v78
  %v230 = vpack.c.b16 %v167, %v166
  %v231 = vpack.c.b16 %v169, %v168
  %v232 = vpack.c.b16 %v171, %v170
  %v233 = vpack.c.b16 %v173, %v172
  %v234 = vpack.c.b16 %v175, %v174
  %v235 = vpack.c.b16 %v177, %v176
  %v236 = vpack.c.b16 %v179, %v178
  %v237 = vpack.c.b16 %v181, %v180
  %v238 = vpack.c.b16 %v183, %v182
  %v239 = vpack.c.b16 %v185, %v184
  %v240 = vpack.c.b16 %v187, %v186
  %v241 = vpack.c.b16 %v189, %v188
  %v242 = vpack.c.b16 %v191, %v190
  %v243 = vpack.c.b16 %v193, %v192
  %v244 = vpack.c.b16 %v195, %v194
  %v245 = vpack.c.b16 %v197, %v196
  %v246 = vpack.c.b16 %v199, %v198
  %v247 = vpack.c.b16 %v201, %v200
  %v248 = vpack.c.b16 %v203, %v202
  %v249 = vpack.c.b16 %v205, %v204
  %v250 = vpack.c.b16 %v207, %v206
  %v251 = vpack.c.b16 %v209, %v208
  %v252 = vpack.c.b16 %v211, %v210
  %v253 = vpack.c.b16 %v213, %v212
  %v254 = vpack.c.b16 %v215, %v214
  %v255 = vpack.c.b16 %v217, %v216
  %v256 = vpack.c.b16 %v219, %v218
  %v257 = vpack.c.b16 %v221, %v220
  %v258 = vpack.c.b16 %v223, %v222
  %v259 = vpack.c.b16 %v225, %v224
  %v260 = vpack.c.b16 %v227, %v226
  %v261 = vpack.c.b16 %v229, %v228
  %v310 = vunpack.c.l.b16 %v79
  %v311 = vunpack.c.l.b16 %v80
  %v312 = vunpack.c.l.b16 %v81
  %v313 = vunpack.c.l.b16 %v82
  %v314 = vunpack.c.l.b16 %v83
  %v315 = vunpack.c.l.b16 %v84
  %v316 = vunpack.c.l.b16 %v85
  %v317 = vunpack.c.l.b16 %v86
  %v318 = vunpack.c.l.b16 %v87
  %v319 = vunpack.c.l.b16 %v88
  %v320 = vunpack.c.l.b16 %v89
  %v321 = vunpack.c.l.b16 %v90
  %v322 = vunpack.c.l.b16 %v91
  %v323 = vunpack.c.l.b16 %v92
  %v324 = vunpack.c.l.b16 %v93
  %v325 = vunpack.c.l.b16 %v94
  %v326 = vpack.c.b16 %v311, %v310
  %v327 = vpack.c.b16 %v313, %v312
  %v328 = vpack.c.b16 %v315, %v314
  %v329 = vpack.c.b16 %v317, %v316
  %v330 = vpack.c.b16 %v319, %v318
  %v331 = vpack.c.b16 %v321, %v320
  %v332 = vpack.c.b16 %v323, %v322
  %v333 = vpack.c.b16 %v325, %v324
  %342 = vmatprep.subr.bf16.mxu0 0
  %343 = vmatpush1.bf16.msra.mxu0 %v333
  %344 = vmatprep.subr.bf16.mxu0 0
  %345 = vmatpush1.bf16.msra.mxu0 %v332
  %346 = vmatprep.subr.bf16.mxu0 0
  %347 = vmatpush1.bf16.msra.mxu0 %v331
  %348 = vmatprep.subr.bf16.mxu0 0
  %349 = vmatpush1.bf16.msra.mxu0 %v330
  %350 = vmatprep.subr.bf16.mxu0 0
  %351 = vmatpush1.bf16.msra.mxu0 %v329
  %352 = vmatprep.subr.bf16.mxu0 0
  %353 = vmatpush1.bf16.msra.mxu0 %v328
  %354 = vmatprep.subr.bf16.mxu0 0
  %355 = vmatpush1.bf16.msra.mxu0 %v327
  %356 = vmatprep.subr.bf16.mxu0 0
  %357 = vmatpush1.bf16.msra.mxu0 %v326
  %358 = vmatprep.subr.bf16.mxu0 0
  %359 = vmatpush2.bf16.msra.mxu0 0
  %360 = vmatprep.subr.bf16.mxu0 0
  %361 = vmatpush2.bf16.msra.mxu0 0
  %362 = vmatprep.subr.bf16.mxu0 0
  %363 = vmatpush2.bf16.msra.mxu0 0
  %364 = vmatprep.subr.bf16.mxu0 0
  %365 = vmatpush2.bf16.msra.mxu0 0
  %366 = vmatprep.subr.bf16.mxu0 0
  %367 = vmatpush2.bf16.msra.mxu0 0
  %368 = vmatprep.subr.bf16.mxu0 0
  %369 = vmatpush2.bf16.msra.mxu0 0
  %370 = vmatprep.subr.bf16.mxu0 0
  %371 = vmatpush2.bf16.msra.mxu0 0
  %372 = vmatprep.subr.bf16.mxu0 0
  %373 = vmatpush2.bf16.msra.mxu0 0
  %374 = vmatprep.mubr.bf16.mxu0 0
  %375 = vmatmul.mubr.bf16.gmra.mxu0 %v230
  %v376 = vpop.f32.mrf.mxu0
  %v377 = vadd.f32 %v100, %v376
  %v378 = vpop.f32.mrf.mxu0
  %v379 = vpop.f32.mrf.mxu0
  %v380 = vadd.f32 %v100, %v379
  %v381 = vpop.f32.mrf.mxu0
  %382 = vmatprep.mubr.bf16.mxu0 0
  %383 = vmatmul.mubr.bf16.gmra.mxu0 %v231
  %v384 = vpop.f32.mrf.mxu0
  %v385 = vadd.f32 %v100, %v384
  %v386 = vpop.f32.mrf.mxu0
  %v387 = vpop.f32.mrf.mxu0
  %v388 = vadd.f32 %v100, %v387
  %v389 = vpop.f32.mrf.mxu0
  %390 = vmatprep.mubr.bf16.mxu0 0
  %391 = vmatmul.mubr.bf16.gmra.mxu0 %v232
  %v392 = vpop.f32.mrf.mxu0
  %v393 = vadd.f32 %v100, %v392
  %v394 = vpop.f32.mrf.mxu0
  %v395 = vpop.f32.mrf.mxu0
  %v396 = vadd.f32 %v100, %v395
  %v397 = vpop.f32.mrf.mxu0
  %398 = vmatprep.mubr.bf16.mxu0 0
  %399 = vmatmul.mubr.bf16.gmra.mxu0 %v233
  %v400 = vpop.f32.mrf.mxu0
  %v401 = vadd.f32 %v100, %v400
  %v402 = vpop.f32.mrf.mxu0
  %v403 = vpop.f32.mrf.mxu0
  %v404 = vadd.f32 %v100, %v403
  %v405 = vpop.f32.mrf.mxu0
  %406 = vmatprep.mubr.bf16.mxu0 0
  %407 = vmatmul.mubr.bf16.gmra.mxu0 %v234
  %v408 = vpop.f32.mrf.mxu0
  %v409 = vadd.f32 %v100, %v408
  %v410 = vpop.f32.mrf.mxu0
  %v411 = vpop.f32.mrf.mxu0
  %v412 = vadd.f32 %v100, %v411
  %v413 = vpop.f32.mrf.mxu0
  %414 = vmatprep.mubr.bf16.mxu0 0
  %415 = vmatmul.mubr.bf16.gmra.mxu0 %v235
  %v416 = vpop.f32.mrf.mxu0
  %v417 = vadd.f32 %v100, %v416
  %v418 = vpop.f32.mrf.mxu0
  %v419 = vpop.f32.mrf.mxu0
  %v420 = vadd.f32 %v100, %v419
  %v421 = vpop.f32.mrf.mxu0
  %422 = vmatprep.mubr.bf16.mxu0 0
  %423 = vmatmul.mubr.bf16.gmra.mxu0 %v236
  %v424 = vpop.f32.mrf.mxu0
  %v425 = vadd.f32 %v100, %v424
  %v426 = vpop.f32.mrf.mxu0
  %v427 = vpop.f32.mrf.mxu0
  %v428 = vadd.f32 %v100, %v427
  %v429 = vpop.f32.mrf.mxu0
  %430 = vmatprep.mubr.bf16.mxu0 0
  %431 = vmatmul.mubr.bf16.gmra.mxu0 %v237
  %v432 = vpop.f32.mrf.mxu0
  %v433 = vadd.f32 %v100, %v432
  %v434 = vpop.f32.mrf.mxu0
  %v435 = vpop.f32.mrf.mxu0
  %v436 = vadd.f32 %v100, %v435
  %v437 = vpop.f32.mrf.mxu0
  %438 = vmatprep.mubr.bf16.mxu0 0
  %439 = vmatmul.mubr.bf16.gmra.mxu0 %v238
  %v440 = vpop.f32.mrf.mxu0
  %v441 = vadd.f32 %v100, %v440
  %v442 = vpop.f32.mrf.mxu0
  %v443 = vpop.f32.mrf.mxu0
  %v444 = vadd.f32 %v100, %v443
  %v445 = vpop.f32.mrf.mxu0
  %446 = vmatprep.mubr.bf16.mxu0 0
  %447 = vmatmul.mubr.bf16.gmra.mxu0 %v239
  %v448 = vpop.f32.mrf.mxu0
  %v449 = vadd.f32 %v100, %v448
  %v450 = vpop.f32.mrf.mxu0
  %v451 = vpop.f32.mrf.mxu0
  %v452 = vadd.f32 %v100, %v451
  %v453 = vpop.f32.mrf.mxu0
  %454 = vmatprep.mubr.bf16.mxu0 0
  %455 = vmatmul.mubr.bf16.gmra.mxu0 %v240
  %v456 = vpop.f32.mrf.mxu0
  %v457 = vadd.f32 %v100, %v456
  %v458 = vpop.f32.mrf.mxu0
  %v459 = vpop.f32.mrf.mxu0
  %v460 = vadd.f32 %v100, %v459
  %v461 = vpop.f32.mrf.mxu0
  %462 = vmatprep.mubr.bf16.mxu0 0
  %463 = vmatmul.mubr.bf16.gmra.mxu0 %v241
  %v464 = vpop.f32.mrf.mxu0
  %v465 = vadd.f32 %v100, %v464
  %v466 = vpop.f32.mrf.mxu0
  %v467 = vpop.f32.mrf.mxu0
  %v468 = vadd.f32 %v100, %v467
  %v469 = vpop.f32.mrf.mxu0
  %470 = vmatprep.mubr.bf16.mxu0 0
  %471 = vmatmul.mubr.bf16.gmra.mxu0 %v242
  %v472 = vpop.f32.mrf.mxu0
  %v473 = vadd.f32 %v100, %v472
  %v474 = vpop.f32.mrf.mxu0
  %v475 = vpop.f32.mrf.mxu0
  %v476 = vadd.f32 %v100, %v475
  %v477 = vpop.f32.mrf.mxu0
  %478 = vmatprep.mubr.bf16.mxu0 0
  %479 = vmatmul.mubr.bf16.gmra.mxu0 %v243
  %v480 = vpop.f32.mrf.mxu0
  %v481 = vadd.f32 %v100, %v480
  %v482 = vpop.f32.mrf.mxu0
  %v483 = vpop.f32.mrf.mxu0
  %v484 = vadd.f32 %v100, %v483
  %v485 = vpop.f32.mrf.mxu0
  %486 = vmatprep.mubr.bf16.mxu0 0
  %487 = vmatmul.mubr.bf16.gmra.mxu0 %v244
  %v488 = vpop.f32.mrf.mxu0
  %v489 = vadd.f32 %v100, %v488
  %v490 = vpop.f32.mrf.mxu0
  %v491 = vpop.f32.mrf.mxu0
  %v492 = vadd.f32 %v100, %v491
  %v493 = vpop.f32.mrf.mxu0
  %494 = vmatprep.mubr.bf16.mxu0 0
  %495 = vmatmul.mubr.bf16.gmra.mxu0 %v245
  %v496 = vpop.f32.mrf.mxu0
  %v497 = vadd.f32 %v100, %v496
  %v498 = vpop.f32.mrf.mxu0
  %v499 = vpop.f32.mrf.mxu0
  %v500 = vadd.f32 %v100, %v499
  %v501 = vpop.f32.mrf.mxu0
  %502 = vmatprep.mubr.bf16.mxu0 0
  %503 = vmatmul.mubr.bf16.gmra.mxu0 %v246
  %v504 = vpop.f32.mrf.mxu0
  %v505 = vadd.f32 %v100, %v504
  %v506 = vpop.f32.mrf.mxu0
  %v507 = vpop.f32.mrf.mxu0
  %v508 = vadd.f32 %v100, %v507
  %v509 = vpop.f32.mrf.mxu0
  %510 = vmatprep.mubr.bf16.mxu0 0
  %511 = vmatmul.mubr.bf16.gmra.mxu0 %v247
  %v512 = vpop.f32.mrf.mxu0
  %v513 = vadd.f32 %v100, %v512
  %v514 = vpop.f32.mrf.mxu0
  %v515 = vpop.f32.mrf.mxu0
  %v516 = vadd.f32 %v100, %v515
  %v517 = vpop.f32.mrf.mxu0
  %518 = vmatprep.mubr.bf16.mxu0 0
  %519 = vmatmul.mubr.bf16.gmra.mxu0 %v248
  %v520 = vpop.f32.mrf.mxu0
  %v521 = vadd.f32 %v100, %v520
  %v522 = vpop.f32.mrf.mxu0
  %v523 = vpop.f32.mrf.mxu0
  %v524 = vadd.f32 %v100, %v523
  %v525 = vpop.f32.mrf.mxu0
  %526 = vmatprep.mubr.bf16.mxu0 0
  %527 = vmatmul.mubr.bf16.gmra.mxu0 %v249
  %v528 = vpop.f32.mrf.mxu0
  %v529 = vadd.f32 %v100, %v528
  %v530 = vpop.f32.mrf.mxu0
  %v531 = vpop.f32.mrf.mxu0
  %v532 = vadd.f32 %v100, %v531
  %v533 = vpop.f32.mrf.mxu0
  %534 = vmatprep.mubr.bf16.mxu0 0
  %535 = vmatmul.mubr.bf16.gmra.mxu0 %v250
  %v536 = vpop.f32.mrf.mxu0
  %v537 = vadd.f32 %v100, %v536
  %v538 = vpop.f32.mrf.mxu0
  %v539 = vpop.f32.mrf.mxu0
  %v540 = vadd.f32 %v100, %v539
  %v541 = vpop.f32.mrf.mxu0
  %542 = vmatprep.mubr.bf16.mxu0 0
  %543 = vmatmul.mubr.bf16.gmra.mxu0 %v251
  %v544 = vpop.f32.mrf.mxu0
  %v545 = vadd.f32 %v100, %v544
  %v546 = vpop.f32.mrf.mxu0
  %v547 = vpop.f32.mrf.mxu0
  %v548 = vadd.f32 %v100, %v547
  %v549 = vpop.f32.mrf.mxu0
  %550 = vmatprep.mubr.bf16.mxu0 0
  %551 = vmatmul.mubr.bf16.gmra.mxu0 %v252
  %v552 = vpop.f32.mrf.mxu0
  %v553 = vadd.f32 %v100, %v552
  %v554 = vpop.f32.mrf.mxu0
  %v555 = vpop.f32.mrf.mxu0
  %v556 = vadd.f32 %v100, %v555
  %v557 = vpop.f32.mrf.mxu0
  %558 = vmatprep.mubr.bf16.mxu0 0
  %559 = vmatmul.mubr.bf16.gmra.mxu0 %v253
  %v560 = vpop.f32.mrf.mxu0
  %v561 = vadd.f32 %v100, %v560
  %v562 = vpop.f32.mrf.mxu0
  %v563 = vpop.f32.mrf.mxu0
  %v564 = vadd.f32 %v100, %v563
  %v565 = vpop.f32.mrf.mxu0
  %566 = vmatprep.mubr.bf16.mxu0 0
  %567 = vmatmul.mubr.bf16.gmra.mxu0 %v254
  %v568 = vpop.f32.mrf.mxu0
  %v569 = vadd.f32 %v100, %v568
  %v570 = vpop.f32.mrf.mxu0
  %v571 = vpop.f32.mrf.mxu0
  %v572 = vadd.f32 %v100, %v571
  %v573 = vpop.f32.mrf.mxu0
  %574 = vmatprep.mubr.bf16.mxu0 0
  %575 = vmatmul.mubr.bf16.gmra.mxu0 %v255
  %v576 = vpop.f32.mrf.mxu0
  %v577 = vadd.f32 %v100, %v576
  %v578 = vpop.f32.mrf.mxu0
  %v579 = vpop.f32.mrf.mxu0
  %v580 = vadd.f32 %v100, %v579
  %v581 = vpop.f32.mrf.mxu0
  %582 = vmatprep.mubr.bf16.mxu0 0
  %583 = vmatmul.mubr.bf16.gmra.mxu0 %v256
  %v584 = vpop.f32.mrf.mxu0
  %v585 = vadd.f32 %v100, %v584
  %v586 = vpop.f32.mrf.mxu0
  %v587 = vpop.f32.mrf.mxu0
  %v588 = vadd.f32 %v100, %v587
  %v589 = vpop.f32.mrf.mxu0
  %590 = vmatprep.mubr.bf16.mxu0 0
  %591 = vmatmul.mubr.bf16.gmra.mxu0 %v257
  %v592 = vpop.f32.mrf.mxu0
  %v593 = vadd.f32 %v100, %v592
  %v594 = vpop.f32.mrf.mxu0
  %v595 = vpop.f32.mrf.mxu0
  %v596 = vadd.f32 %v100, %v595
  %v597 = vpop.f32.mrf.mxu0
  %598 = vmatprep.mubr.bf16.mxu0 0
  %599 = vmatmul.mubr.bf16.gmra.mxu0 %v258
  %v600 = vpop.f32.mrf.mxu0
  %v601 = vadd.f32 %v100, %v600
  %v602 = vpop.f32.mrf.mxu0
  %v603 = vpop.f32.mrf.mxu0
  %v604 = vadd.f32 %v100, %v603
  %v605 = vpop.f32.mrf.mxu0
  %606 = vmatprep.mubr.bf16.mxu0 0
  %607 = vmatmul.mubr.bf16.gmra.mxu0 %v259
  %v608 = vpop.f32.mrf.mxu0
  %v609 = vadd.f32 %v100, %v608
  %v610 = vpop.f32.mrf.mxu0
  %v611 = vpop.f32.mrf.mxu0
  %v612 = vadd.f32 %v100, %v611
  %v613 = vpop.f32.mrf.mxu0
  %614 = vmatprep.mubr.bf16.mxu0 0
  %615 = vmatmul.mubr.bf16.gmra.mxu0 %v260
  %v616 = vpop.f32.mrf.mxu0
  %v617 = vadd.f32 %v100, %v616
  %v618 = vpop.f32.mrf.mxu0
  %v619 = vpop.f32.mrf.mxu0
  %v620 = vadd.f32 %v100, %v619
  %v621 = vpop.f32.mrf.mxu0
  %622 = vmatprep.mubr.bf16.mxu0 0
  %623 = vmatmul.mubr.bf16.gmra.mxu0 %v261
  %v624 = vpop.f32.mrf.mxu0
  %v625 = vadd.f32 %v100, %v624
  %v626 = vpop.f32.mrf.mxu0
  %v627 = vpop.f32.mrf.mxu0
  %v628 = vadd.f32 %v100, %v627
  %v629 = vpop.f32.mrf.mxu0
  %630 = vdwg.mxu0
  %v631 = vmax.f32 %v377, 0.0
  %v632 = vmax.f32 %v380, 0.0
  %v633 = vmax.f32 %v385, 0.0
  %v634 = vmax.f32 %v388, 0.0
  %v635 = vmax.f32 %v393, 0.0
  %v636 = vmax.f32 %v396, 0.0
  %v637 = vmax.f32 %v401, 0.0
  %v638 = vmax.f32 %v404, 0.0
  %v639 = vmax.f32 %v409, 0.0
  %v640 = vmax.f32 %v412, 0.0
  %v641 = vmax.f32 %v417, 0.0
  %v642 = vmax.f32 %v420, 0.0
  %v643 = vmax.f32 %v425, 0.0
  %v644 = vmax.f32 %v428, 0.0
  %v645 = vmax.f32 %v433, 0.0
  %v646 = vmax.f32 %v436, 0.0
  %v647 = vmax.f32 %v441, 0.0
  %v648 = vmax.f32 %v444, 0.0
  %v649 = vmax.f32 %v449, 0.0
  %v650 = vmax.f32 %v452, 0.0
  %v651 = vmax.f32 %v457, 0.0
  %v652 = vmax.f32 %v460, 0.0
  %v653 = vmax.f32 %v465, 0.0
  %v654 = vmax.f32 %v468, 0.0
  %v655 = vmax.f32 %v473, 0.0
  %v656 = vmax.f32 %v476, 0.0
  %v657 = vmax.f32 %v481, 0.0
  %v658 = vmax.f32 %v484, 0.0
  %v659 = vmax.f32 %v489, 0.0
  %v660 = vmax.f32 %v492, 0.0
  %v661 = vmax.f32 %v497, 0.0
  %v662 = vmax.f32 %v500, 0.0
  %v663 = vmax.f32 %v505, 0.0
  %v664 = vmax.f32 %v508, 0.0
  %v665 = vmax.f32 %v513, 0.0
  %v666 = vmax.f32 %v516, 0.0
  %v667 = vmax.f32 %v521, 0.0
  %v668 = vmax.f32 %v524, 0.0
  %v669 = vmax.f32 %v529, 0.0
  %v670 = vmax.f32 %v532, 0.0
  %v671 = vmax.f32 %v537, 0.0
  %v672 = vmax.f32 %v540, 0.0
  %v673 = vmax.f32 %v545, 0.0
  %v674 = vmax.f32 %v548, 0.0
  %v675 = vmax.f32 %v553, 0.0
  %v676 = vmax.f32 %v556, 0.0
  %v677 = vmax.f32 %v561, 0.0
  %v678 = vmax.f32 %v564, 0.0
  %v679 = vmax.f32 %v569, 0.0
  %v680 = vmax.f32 %v572, 0.0
  %v681 = vmax.f32 %v577, 0.0
  %v682 = vmax.f32 %v580, 0.0
  %v683 = vmax.f32 %v585, 0.0
  %v684 = vmax.f32 %v588, 0.0
  %v685 = vmax.f32 %v593, 0.0
  %v686 = vmax.f32 %v596, 0.0
  %v687 = vmax.f32 %v601, 0.0
  %v688 = vmax.f32 %v604, 0.0
  %v689 = vmax.f32 %v609, 0.0
  %v690 = vmax.f32 %v612, 0.0
  %v691 = vmax.f32 %v617, 0.0
  %v692 = vmax.f32 %v620, 0.0
  %v693 = vmax.f32 %v625, 0.0
  %v694 = vmax.f32 %v628, 0.0
  %v695 = vpack.c.bf16 %v632, %v631
  %v696 = vpack.c.bf16 %v634, %v633
  %v697 = vpack.c.bf16 %v636, %v635
  %v698 = vpack.c.bf16 %v638, %v637
  %v699 = vpack.c.bf16 %v640, %v639
  %v700 = vpack.c.bf16 %v642, %v641
  %v701 = vpack.c.bf16 %v644, %v643
  %v702 = vpack.c.bf16 %v646, %v645
  %v703 = vpack.c.bf16 %v648, %v647
  %v704 = vpack.c.bf16 %v650, %v649
  %v705 = vpack.c.bf16 %v652, %v651
  %v706 = vpack.c.bf16 %v654, %v653
  %v707 = vpack.c.bf16 %v656, %v655
  %v708 = vpack.c.bf16 %v658, %v657
  %v709 = vpack.c.bf16 %v660, %v659
  %v710 = vpack.c.bf16 %v662, %v661
  %v711 = vpack.c.bf16 %v664, %v663
  %v712 = vpack.c.bf16 %v666, %v665
  %v713 = vpack.c.bf16 %v668, %v667
  %v714 = vpack.c.bf16 %v670, %v669
  %v715 = vpack.c.bf16 %v672, %v671
  %v716 = vpack.c.bf16 %v674, %v673
  %v717 = vpack.c.bf16 %v676, %v675
  %v718 = vpack.c.bf16 %v678, %v677
  %v719 = vpack.c.bf16 %v680, %v679
  %v720 = vpack.c.bf16 %v682, %v681
  %v721 = vpack.c.bf16 %v684, %v683
  %v722 = vpack.c.bf16 %v686, %v685
  %v723 = vpack.c.bf16 %v688, %v687
  %v724 = vpack.c.bf16 %v690, %v689
  %v725 = vpack.c.bf16 %v692, %v691
  %v726 = vpack.c.bf16 %v694, %v693
  %v759 = vunpack.c.l.b16 %v695
  %v760 = vunpack.c.h.b16 %v695
  %v761 = vunpack.c.l.b16 %v696
  %v762 = vunpack.c.h.b16 %v696
  %v763 = vunpack.c.l.b16 %v697
  %v764 = vunpack.c.h.b16 %v697
  %v765 = vunpack.c.l.b16 %v698
  %v766 = vunpack.c.h.b16 %v698
  %v767 = vunpack.c.l.b16 %v699
  %v768 = vunpack.c.h.b16 %v699
  %v769 = vunpack.c.l.b16 %v700
  %v770 = vunpack.c.h.b16 %v700
  %v771 = vunpack.c.l.b16 %v701
  %v772 = vunpack.c.h.b16 %v701
  %v773 = vunpack.c.l.b16 %v702
  %v774 = vunpack.c.h.b16 %v702
  %v775 = vunpack.c.l.b16 %v703
  %v776 = vunpack.c.h.b16 %v703
  %v777 = vunpack.c.l.b16 %v704
  %v778 = vunpack.c.h.b16 %v704
  %v779 = vunpack.c.l.b16 %v705
  %v780 = vunpack.c.h.b16 %v705
  %v781 = vunpack.c.l.b16 %v706
  %v782 = vunpack.c.h.b16 %v706
  %v783 = vunpack.c.l.b16 %v707
  %v784 = vunpack.c.h.b16 %v707
  %v785 = vunpack.c.l.b16 %v708
  %v786 = vunpack.c.h.b16 %v708
  %v787 = vunpack.c.l.b16 %v709
  %v788 = vunpack.c.h.b16 %v709
  %v789 = vunpack.c.l.b16 %v710
  %v790 = vunpack.c.h.b16 %v710
  %v791 = vunpack.c.l.b16 %v711
  %v792 = vunpack.c.h.b16 %v711
  %v793 = vunpack.c.l.b16 %v712
  %v794 = vunpack.c.h.b16 %v712
  %v795 = vunpack.c.l.b16 %v713
  %v796 = vunpack.c.h.b16 %v713
  %v797 = vunpack.c.l.b16 %v714
  %v798 = vunpack.c.h.b16 %v714
  %v799 = vunpack.c.l.b16 %v715
  %v800 = vunpack.c.h.b16 %v715
  %v801 = vunpack.c.l.b16 %v716
  %v802 = vunpack.c.h.b16 %v716
  %v803 = vunpack.c.l.b16 %v717
  %v804 = vunpack.c.h.b16 %v717
  %v805 = vunpack.c.l.b16 %v718
  %v806 = vunpack.c.h.b16 %v718
  %v807 = vunpack.c.l.b16 %v719
  %v808 = vunpack.c.h.b16 %v719
  %v809 = vunpack.c.l.b16 %v720
  %v810 = vunpack.c.h.b16 %v720
  %v811 = vunpack.c.l.b16 %v721
  %v812 = vunpack.c.h.b16 %v721
  %v813 = vunpack.c.l.b16 %v722
  %v814 = vunpack.c.h.b16 %v722
  %v815 = vunpack.c.l.b16 %v723
  %v816 = vunpack.c.h.b16 %v723
  %v817 = vunpack.c.l.b16 %v724
  %v818 = vunpack.c.h.b16 %v724
  %v819 = vunpack.c.l.b16 %v725
  %v820 = vunpack.c.h.b16 %v725
  %v821 = vunpack.c.l.b16 %v726
  %v822 = vunpack.c.h.b16 %v726
  %v823 = vpack.c.b16 %v759, %v759
  %v824 = vpack.c.b16 %v760, %v760
  %v825 = vpack.c.b16 %v761, %v761
  %v826 = vpack.c.b16 %v762, %v762
  %v827 = vpack.c.b16 %v763, %v763
  %v828 = vpack.c.b16 %v764, %v764
  %v829 = vpack.c.b16 %v765, %v765
  %v830 = vpack.c.b16 %v766, %v766
  %v831 = vpack.c.b16 %v767, %v767
  %v832 = vpack.c.b16 %v768, %v768
  %v833 = vpack.c.b16 %v769, %v769
  %v834 = vpack.c.b16 %v770, %v770
  %v835 = vpack.c.b16 %v771, %v771
  %v836 = vpack.c.b16 %v772, %v772
  %v837 = vpack.c.b16 %v773, %v773
  %v838 = vpack.c.b16 %v774, %v774
  %v839 = vpack.c.b16 %v775, %v775
  %v840 = vpack.c.b16 %v776, %v776
  %v841 = vpack.c.b16 %v777, %v777
  %v842 = vpack.c.b16 %v778, %v778
  %v843 = vpack.c.b16 %v779, %v779
  %v844 = vpack.c.b16 %v780, %v780
  %v845 = vpack.c.b16 %v781, %v781
  %v846 = vpack.c.b16 %v782, %v782
  %v847 = vpack.c.b16 %v783, %v783
  %v848 = vpack.c.b16 %v784, %v784
  %v849 = vpack.c.b16 %v785, %v785
  %v850 = vpack.c.b16 %v786, %v786
  %v851 = vpack.c.b16 %v787, %v787
  %v852 = vpack.c.b16 %v788, %v788
  %v853 = vpack.c.b16 %v789, %v789
  %v854 = vpack.c.b16 %v790, %v790
  %v855 = vpack.c.b16 %v791, %v791
  %v856 = vpack.c.b16 %v792, %v792
  %v857 = vpack.c.b16 %v793, %v793
  %v858 = vpack.c.b16 %v794, %v794
  %v859 = vpack.c.b16 %v795, %v795
  %v860 = vpack.c.b16 %v796, %v796
  %v861 = vpack.c.b16 %v797, %v797
  %v862 = vpack.c.b16 %v798, %v798
  %v863 = vpack.c.b16 %v799, %v799
  %v864 = vpack.c.b16 %v800, %v800
  %v865 = vpack.c.b16 %v801, %v801
  %v866 = vpack.c.b16 %v802, %v802
  %v867 = vpack.c.b16 %v803, %v803
  %v868 = vpack.c.b16 %v804, %v804
  %v869 = vpack.c.b16 %v805, %v805
  %v870 = vpack.c.b16 %v806, %v806
  %v871 = vpack.c.b16 %v807, %v807
  %v872 = vpack.c.b16 %v808, %v808
  %v873 = vpack.c.b16 %v809, %v809
  %v874 = vpack.c.b16 %v810, %v810
  %v875 = vpack.c.b16 %v811, %v811
  %v876 = vpack.c.b16 %v812, %v812
  %v877 = vpack.c.b16 %v813, %v813
  %v878 = vpack.c.b16 %v814, %v814
  %v879 = vpack.c.b16 %v815, %v815
  %v880 = vpack.c.b16 %v816, %v816
  %v881 = vpack.c.b16 %v817, %v817
  %v882 = vpack.c.b16 %v818, %v818
  %v883 = vpack.c.b16 %v819, %v819
  %v884 = vpack.c.b16 %v820, %v820
  %v885 = vpack.c.b16 %v821, %v821
  %v886 = vpack.c.b16 %v822, %v822
  %951 = vst [vmem:[%s3] sm:$0xf] %v823
  %952 = vst [vmem:[%s3 + $0x4] sm:$0xf] %v824
  %953 = vst [vmem:[%s3 + $0x8] sm:$0xf] %v825
  %954 = vst [vmem:[%s3 + $0xc] sm:$0xf] %v826
  %955 = vst [vmem:[%s3 + $0x10] sm:$0xf] %v827
  %956 = vst [vmem:[%s3 + $0x14] sm:$0xf] %v828
  %957 = vst [vmem:[%s3 + $0x18] sm:$0xf] %v829
  %958 = vst [vmem:[%s3 + $0x1c] sm:$0xf] %v830
  %959 = vst [vmem:[%s3 + $0x20] sm:$0xf] %v831
  %960 = vst [vmem:[%s3 + $0x24] sm:$0xf] %v832
  %961 = vst [vmem:[%s3 + $0x28] sm:$0xf] %v833
  %962 = vst [vmem:[%s3 + $0x2c] sm:$0xf] %v834
  %963 = vst [vmem:[%s3 + $0x30] sm:$0xf] %v835
  %964 = vst [vmem:[%s3 + $0x34] sm:$0xf] %v836
  %965 = vst [vmem:[%s3 + $0x38] sm:$0xf] %v837
  %966 = vst [vmem:[%s3 + $0x3c] sm:$0xf] %v838
  %967 = vst [vmem:[%s3 + $0x40] sm:$0xf] %v839
  %968 = vst [vmem:[%s3 + $0x44] sm:$0xf] %v840
  %969 = vst [vmem:[%s3 + $0x48] sm:$0xf] %v841
  %970 = vst [vmem:[%s3 + $0x4c] sm:$0xf] %v842
  %971 = vst [vmem:[%s3 + $0x50] sm:$0xf] %v843
  %972 = vst [vmem:[%s3 + $0x54] sm:$0xf] %v844
  %973 = vst [vmem:[%s3 + $0x58] sm:$0xf] %v845
  %974 = vst [vmem:[%s3 + $0x5c] sm:$0xf] %v846
  %975 = vst [vmem:[%s3 + $0x60] sm:$0xf] %v847
  %976 = vst [vmem:[%s3 + $0x64] sm:$0xf] %v848
  %977 = vst [vmem:[%s3 + $0x68] sm:$0xf] %v849
  %978 = vst [vmem:[%s3 + $0x6c] sm:$0xf] %v850
  %979 = vst [vmem:[%s3 + $0x70] sm:$0xf] %v851
  %980 = vst [vmem:[%s3 + $0x74] sm:$0xf] %v852
  %981 = vst [vmem:[%s3 + $0x78] sm:$0xf] %v853
  %982 = vst [vmem:[%s3 + $0x7c] sm:$0xf] %v854
  %983 = vst [vmem:[%s3 + $0x80] sm:$0xf] %v855
  %984 = vst [vmem:[%s3 + $0x84] sm:$0xf] %v856
  %985 = vst [vmem:[%s3 + $0x88] sm:$0xf] %v857
  %986 = vst [vmem:[%s3 + $0x8c] sm:$0xf] %v858
  %987 = vst [vmem:[%s3 + $0x90] sm:$0xf] %v859
  %988 = vst [vmem:[%s3 + $0x94] sm:$0xf] %v860
  %989 = vst [vmem:[%s3 + $0x98] sm:$0xf] %v861
  %990 = vst [vmem:[%s3 + $0x9c] sm:$0xf] %v862
  %991 = vst [vmem:[%s3 + $0xa0] sm:$0xf] %v863
  %992 = vst [vmem:[%s3 + $0xa4] sm:$0xf] %v864
  %993 = vst [vmem:[%s3 + $0xa8] sm:$0xf] %v865
  %994 = vst [vmem:[%s3 + $0xac] sm:$0xf] %v866
  %995 = vst [vmem:[%s3 + $0xb0] sm:$0xf] %v867
  %996 = vst [vmem:[%s3 + $0xb4] sm:$0xf] %v868
  %997 = vst [vmem:[%s3 + $0xb8] sm:$0xf] %v869
  %998 = vst [vmem:[%s3 + $0xbc] sm:$0xf] %v870
  %999 = vst [vmem:[%s3 + $0xc0] sm:$0xf] %v871
  %1000 = vst [vmem:[%s3 + $0xc4] sm:$0xf] %v872
  %1001 = vst [vmem:[%s3 + $0xc8] sm:$0xf] %v873
  %1002 = vst [vmem:[%s3 + $0xcc] sm:$0xf] %v874
  %1003 = vst [vmem:[%s3 + $0xd0] sm:$0xf] %v875
  %1004 = vst [vmem:[%s3 + $0xd4] sm:$0xf] %v876
  %1005 = vst [vmem:[%s3 + $0xd8] sm:$0xf] %v877
  %1006 = vst [vmem:[%s3 + $0xdc] sm:$0xf] %v878
  %1007 = vst [vmem:[%s3 + $0xe0] sm:$0xf] %v879
  %1008 = vst [vmem:[%s3 + $0xe4] sm:$0xf] %v880
  %1009 = vst [vmem:[%s3 + $0xe8] sm:$0xf] %v881
  %1010 = vst [vmem:[%s3 + $0xec] sm:$0xf] %v882
  %1011 = vst [vmem:[%s3 + $0xf0] sm:$0xf] %v883
  %1012 = vst [vmem:[%s3 + $0xf4] sm:$0xf] %v884
  %1013 = vst [vmem:[%s3 + $0xf8] sm:$0xf] %v885
  %1014 = vst [vmem:[%s3 + $0xfc] sm:$0xf] %v886
  // Predicated region
  $region14: #{bottleneck_forward.3} parent=0 // pred_check
    _
  $region15: #{bottleneck_forward.3} parent=0 // pred_check_branch
    %1016 = sbr.rel (0) target = $region17
  $region16: #{bottleneck_forward.3} parent=0 // pred_region
    _
  $region17: #{bottleneck_forward.3} parent=0 // pred_fallthru
    _
  // Predicated region
  $region18: #{bottleneck_forward.3} parent=0 // pred_check
    _
  $region19: #{bottleneck_forward.3} parent=0 // pred_check_branch
    %1018 = sbr.rel (0) target = $region21
  $region20: #{bottleneck_forward.3} parent=0 // pred_region
    _
  $region21: #{bottleneck_forward.3} parent=0 // pred_fallthru
    _

// kernel: bottleneck_forward.5
$region0: #{bottleneck_forward.5}
  #allocation0 [shape = 'u32[]', space=smem, size = 0x4, offset = 0x4, fixed_abs, tag = 'smem constant byte address 0x4 - core index']
  #allocation1 [shape = 'u32[144,128]{1,0:T(1,128)}', space=vmem, size = 0x12000, scoped, tag = 'internal scratch']
  %s0 = inlined_call_operand.vmem [shape: bf16[512,128], index: 0, kind: input, shape index: {}]
  %s1 = inlined_call_operand.vmem [shape: bf16[512,128], index: 1, kind: input, shape index: {}]
  %s2 = inlined_call_operand.vmem [shape: bf16[128,128], index: 2, kind: input, shape index: {}]
  %s3 = inlined_call_operand.vmem [shape: f32[1,128], index: 3, kind: input, shape index: {}]
  %s4 = inlined_call_operand.vmem [shape: bf16[128,128], index: 4, kind: input, shape index: {}]
  %s5 = inlined_call_operand.vmem [shape: f32[1,128], index: 5, kind: input, shape index: {}]
  %s6 = inlined_call_operand.vmem [shape: bf16[512,128], index: 6, kind: output, shape index: {}]
  %s7 = sld [smem:[#allocation0]]
  $region34: #{bottleneck_forward.5} parent=0
    _
  %s9 = ssub.s32 1, %s7
  %s10 = scalar_select 0, %s9, %s7
  // Predicated region
  $region2: #{bottleneck_forward.5} parent=0 // pred_check
    _
  $region3: #{bottleneck_forward.5} parent=0 // pred_check_branch
    %12 = sbr.rel (0) target = $region5
  $region4: #{bottleneck_forward.5} parent=0 // pred_region
    _
  $region5: #{bottleneck_forward.5} parent=0 // pred_fallthru
    _
  // Predicated region
  $region6: #{bottleneck_forward.5} parent=0 // pred_check
    _
  $region7: #{bottleneck_forward.5} parent=0 // pred_check_branch
    %14 = sbr.rel (0) target = $region9
  $region8: #{bottleneck_forward.5} parent=0 // pred_region
    _
  $region9: #{bottleneck_forward.5} parent=0 // pred_fallthru
    _
  // Predicated region
  $region10: #{bottleneck_forward.5} parent=0 // pred_check
    _
  $region11: #{bottleneck_forward.5} parent=0 // pred_check_branch
    %16 = sbr.rel (0) target = $region13
  $region12: #{bottleneck_forward.5} parent=0 // pred_region
    _
  $region13: #{bottleneck_forward.5} parent=0 // pred_fallthru
    _
  // Predicated region
  $region14: #{bottleneck_forward.5} parent=0 // pred_check
    _
  $region15: #{bottleneck_forward.5} parent=0 // pred_check_branch
    %18 = sbr.rel (0) target = $region17
  $region16: #{bottleneck_forward.5} parent=0 // pred_region
    _
  $region17: #{bottleneck_forward.5} parent=0 // pred_fallthru
    _
  // Predicated region
  $region18: #{bottleneck_forward.5} parent=0 // pred_check
    _
  $region19: #{bottleneck_forward.5} parent=0 // pred_check_branch
    %20 = sbr.rel (0) target = $region21
  $region20: #{bottleneck_forward.5} parent=0 // pred_region
    _
  $region21: #{bottleneck_forward.5} parent=0 // pred_fallthru
    _
  // Predicated region
  $region22: #{bottleneck_forward.5} parent=0 // pred_check
    _
  $region23: #{bottleneck_forward.5} parent=0 // pred_check_branch
    %22 = sbr.rel (0) target = $region25
  $region24: #{bottleneck_forward.5} parent=0 // pred_region
    _
  $region25: #{bottleneck_forward.5} parent=0 // pred_fallthru
    _
  %v24 = vld [vmem:[%s0] sm:$0xf]
  %v25 = vld [vmem:[%s0 + $0x4] sm:$0xf]
  %v26 = vld [vmem:[%s0 + $0x8] sm:$0xf]
  %v27 = vld [vmem:[%s0 + $0xc] sm:$0xf]
  %v28 = vld [vmem:[%s0 + $0x10] sm:$0xf]
  %v29 = vld [vmem:[%s0 + $0x14] sm:$0xf]
  %v30 = vld [vmem:[%s0 + $0x18] sm:$0xf]
  %v31 = vld [vmem:[%s0 + $0x1c] sm:$0xf]
  %v32 = vld [vmem:[%s0 + $0x20] sm:$0xf]
  %v33 = vld [vmem:[%s0 + $0x24] sm:$0xf]
  %v34 = vld [vmem:[%s0 + $0x28] sm:$0xf]
  %v35 = vld [vmem:[%s0 + $0x2c] sm:$0xf]
  %v36 = vld [vmem:[%s0 + $0x30] sm:$0xf]
  %v37 = vld [vmem:[%s0 + $0x34] sm:$0xf]
  %v38 = vld [vmem:[%s0 + $0x38] sm:$0xf]
  %v39 = vld [vmem:[%s0 + $0x3c] sm:$0xf]
  %v40 = vld [vmem:[%s0 + $0x40] sm:$0xf]
  %v41 = vld [vmem:[%s0 + $0x44] sm:$0xf]
  %v42 = vld [vmem:[%s0 + $0x48] sm:$0xf]
  %v43 = vld [vmem:[%s0 + $0x4c] sm:$0xf]
  %v44 = vld [vmem:[%s0 + $0x50] sm:$0xf]
  %v45 = vld [vmem:[%s0 + $0x54] sm:$0xf]
  %v46 = vld [vmem:[%s0 + $0x58] sm:$0xf]
  %v47 = vld [vmem:[%s0 + $0x5c] sm:$0xf]
  %v48 = vld [vmem:[%s0 + $0x60] sm:$0xf]
  %v49 = vld [vmem:[%s0 + $0x64] sm:$0xf]
  %v50 = vld [vmem:[%s0 + $0x68] sm:$0xf]
  %v51 = vld [vmem:[%s0 + $0x6c] sm:$0xf]
  %v52 = vld [vmem:[%s0 + $0x70] sm:$0xf]
  %v53 = vld [vmem:[%s0 + $0x74] sm:$0xf]
  %v54 = vld [vmem:[%s0 + $0x78] sm:$0xf]
  %v55 = vld [vmem:[%s0 + $0x7c] sm:$0xf]
  %v56 = vld [vmem:[%s0 + $0x80] sm:$0xf]
  %v57 = vld [vmem:[%s0 + $0x84] sm:$0xf]
  %v58 = vld [vmem:[%s0 + $0x88] sm:$0xf]
  %v59 = vld [vmem:[%s0 + $0x8c] sm:$0xf]
  %v60 = vld [vmem:[%s0 + $0x90] sm:$0xf]
  %v61 = vld [vmem:[%s0 + $0x94] sm:$0xf]
  %v62 = vld [vmem:[%s0 + $0x98] sm:$0xf]
  %v63 = vld [vmem:[%s0 + $0x9c] sm:$0xf]
  %v64 = vld [vmem:[%s0 + $0xa0] sm:$0xf]
  %v65 = vld [vmem:[%s0 + $0xa4] sm:$0xf]
  %v66 = vld [vmem:[%s0 + $0xa8] sm:$0xf]
  %v67 = vld [vmem:[%s0 + $0xac] sm:$0xf]
  %v68 = vld [vmem:[%s0 + $0xb0] sm:$0xf]
  %v69 = vld [vmem:[%s0 + $0xb4] sm:$0xf]
  %v70 = vld [vmem:[%s0 + $0xb8] sm:$0xf]
  %v71 = vld [vmem:[%s0 + $0xbc] sm:$0xf]
  %v72 = vld [vmem:[%s0 + $0xc0] sm:$0xf]
  %v73 = vld [vmem:[%s0 + $0xc4] sm:$0xf]
  %v74 = vld [vmem:[%s0 + $0xc8] sm:$0xf]
  %v75 = vld [vmem:[%s0 + $0xcc] sm:$0xf]
  %v76 = vld [vmem:[%s0 + $0xd0] sm:$0xf]
  %v77 = vld [vmem:[%s0 + $0xd4] sm:$0xf]
  %v78 = vld [vmem:[%s0 + $0xd8] sm:$0xf]
  %v79 = vld [vmem:[%s0 + $0xdc] sm:$0xf]
  %v80 = vld [vmem:[%s0 + $0xe0] sm:$0xf]
  %v81 = vld [vmem:[%s0 + $0xe4] sm:$0xf]
  %v82 = vld [vmem:[%s0 + $0xe8] sm:$0xf]
  %v83 = vld [vmem:[%s0 + $0xec] sm:$0xf]
  %v84 = vld [vmem:[%s0 + $0xf0] sm:$0xf]
  %v85 = vld [vmem:[%s0 + $0xf4] sm:$0xf]
  %v86 = vld [vmem:[%s0 + $0xf8] sm:$0xf]
  %v87 = vld [vmem:[%s0 + $0xfc] sm:$0xf]
  %v88 = vld [vmem:[%s2] sm:$0xf]
  %v89 = vld [vmem:[%s2 + $0x4] sm:$0xf]
  %v90 = vld [vmem:[%s2 + $0x8] sm:$0xf]
  %v91 = vld [vmem:[%s2 + $0xc] sm:$0xf]
  %v92 = vld [vmem:[%s2 + $0x10] sm:$0xf]
  %v93 = vld [vmem:[%s2 + $0x14] sm:$0xf]
  %v94 = vld [vmem:[%s2 + $0x18] sm:$0xf]
  %v95 = vld [vmem:[%s2 + $0x1c] sm:$0xf]
  %v96 = vld [vmem:[%s2 + $0x20] sm:$0xf]
  %v97 = vld [vmem:[%s2 + $0x24] sm:$0xf]
  %v98 = vld [vmem:[%s2 + $0x28] sm:$0xf]
  %v99 = vld [vmem:[%s2 + $0x2c] sm:$0xf]
  %v100 = vld [vmem:[%s2 + $0x30] sm:$0xf]
  %v101 = vld [vmem:[%s2 + $0x34] sm:$0xf]
  %v102 = vld [vmem:[%s2 + $0x38] sm:$0xf]
  %v103 = vld [vmem:[%s2 + $0x3c] sm:$0xf]
  %v104 = vld [vmem:[%s1] sm:$0xf]
  %v105 = vld [vmem:[%s1 + $0x4] sm:$0xf]
  %v106 = vld [vmem:[%s1 + $0x8] sm:$0xf]
  %v107 = vld [vmem:[%s1 + $0xc] sm:$0xf]
  %v108 = vld [vmem:[%s1 + $0x10] sm:$0xf]
  %v109 = vld [vmem:[%s1 + $0x14] sm:$0xf]
  %v110 = vld [vmem:[%s1 + $0x18] sm:$0xf]
  %v111 = vld [vmem:[%s1 + $0x1c] sm:$0xf]
  %v112 = vld [vmem:[%s1 + $0x20] sm:$0xf]
  %v113 = vld [vmem:[%s1 + $0x24] sm:$0xf]
  %v114 = vld [vmem:[%s1 + $0x28] sm:$0xf]
  %v115 = vld [vmem:[%s1 + $0x2c] sm:$0xf]
  %v116 = vld [vmem:[%s1 + $0x30] sm:$0xf]
  %v117 = vld [vmem:[%s1 + $0x34] sm:$0xf]
  %v118 = vld [vmem:[%s1 + $0x38] sm:$0xf]
  %v119 = vld [vmem:[%s1 + $0x3c] sm:$0xf]
  %v120 = vld [vmem:[%s1 + $0x40] sm:$0xf]
  %v121 = vld [vmem:[%s1 + $0x44] sm:$0xf]
  %v122 = vld [vmem:[%s1 + $0x48] sm:$0xf]
  %v123 = vld [vmem:[%s1 + $0x4c] sm:$0xf]
  %v124 = vld [vmem:[%s1 + $0x50] sm:$0xf]
  %v125 = vld [vmem:[%s1 + $0x54] sm:$0xf]
  %v126 = vld [vmem:[%s1 + $0x58] sm:$0xf]
  %v127 = vld [vmem:[%s1 + $0x5c] sm:$0xf]
  %v128 = vld [vmem:[%s1 + $0x60] sm:$0xf]
  %v129 = vld [vmem:[%s1 + $0x64] sm:$0xf]
  %v130 = vld [vmem:[%s1 + $0x68] sm:$0xf]
  %v131 = vld [vmem:[%s1 + $0x6c] sm:$0xf]
  %v132 = vld [vmem:[%s1 + $0x70] sm:$0xf]
  %v133 = vld [vmem:[%s1 + $0x74] sm:$0xf]
  %v134 = vld [vmem:[%s1 + $0x78] sm:$0xf]
  %v135 = vld [vmem:[%s1 + $0x7c] sm:$0xf]
  %v136 = vld [vmem:[%s1 + $0x80] sm:$0xf]
  %v137 = vld [vmem:[%s1 + $0x84] sm:$0xf]
  %v138 = vld [vmem:[%s1 + $0x88] sm:$0xf]
  %v139 = vld [vmem:[%s1 + $0x8c] sm:$0xf]
  %v140 = vld [vmem:[%s1 + $0x90] sm:$0xf]
  %v141 = vld [vmem:[%s1 + $0x94] sm:$0xf]
  %v142 = vld [vmem:[%s1 + $0x98] sm:$0xf]
  %v143 = vld [vmem:[%s1 + $0x9c] sm:$0xf]
  %v144 = vld [vmem:[%s1 + $0xa0] sm:$0xf]
  %v145 = vld [vmem:[%s1 + $0xa4] sm:$0xf]
  %v146 = vld [vmem:[%s1 + $0xa8] sm:$0xf]
  %v147 = vld [vmem:[%s1 + $0xac] sm:$0xf]
  %v148 = vld [vmem:[%s1 + $0xb0] sm:$0xf]
  %v149 = vld [vmem:[%s1 + $0xb4] sm:$0xf]
  %v150 = vld [vmem:[%s1 + $0xb8] sm:$0xf]
  %v151 = vld [vmem:[%s1 + $0xbc] sm:$0xf]
  %v152 = vld [vmem:[%s1 + $0xc0] sm:$0xf]
  %v153 = vld [vmem:[%s1 + $0xc4] sm:$0xf]
  %v154 = vld [vmem:[%s1 + $0xc8] sm:$0xf]
  %v155 = vld [vmem:[%s1 + $0xcc] sm:$0xf]
  %v156 = vld [vmem:[%s1 + $0xd0] sm:$0xf]
  %v157 = vld [vmem:[%s1 + $0xd4] sm:$0xf]
  %v158 = vld [vmem:[%s1 + $0xd8] sm:$0xf]
  %v159 = vld [vmem:[%s1 + $0xdc] sm:$0xf]
  %v160 = vld [vmem:[%s1 + $0xe0] sm:$0xf]
  %v161 = vld [vmem:[%s1 + $0xe4] sm:$0xf]
  %v162 = vld [vmem:[%s1 + $0xe8] sm:$0xf]
  %v163 = vld [vmem:[%s1 + $0xec] sm:$0xf]
  %v164 = vld [vmem:[%s1 + $0xf0] sm:$0xf]
  %v165 = vld [vmem:[%s1 + $0xf4] sm:$0xf]
  %v166 = vld [vmem:[%s1 + $0xf8] sm:$0xf]
  %v167 = vld [vmem:[%s1 + $0xfc] sm:$0xf]
  %v168 = vld [vmem:[%s4] sm:$0xf]
  %v169 = vld [vmem:[%s4 + $0x4] sm:$0xf]
  %v170 = vld [vmem:[%s4 + $0x8] sm:$0xf]
  %v171 = vld [vmem:[%s4 + $0xc] sm:$0xf]
  %v172 = vld [vmem:[%s4 + $0x10] sm:$0xf]
  %v173 = vld [vmem:[%s4 + $0x14] sm:$0xf]
  %v174 = vld [vmem:[%s4 + $0x18] sm:$0xf]
  %v175 = vld [vmem:[%s4 + $0x1c] sm:$0xf]
  %v176 = vld [vmem:[%s4 + $0x20] sm:$0xf]
  %v177 = vld [vmem:[%s4 + $0x24] sm:$0xf]
  %v178 = vld [vmem:[%s4 + $0x28] sm:$0xf]
  %v179 = vld [vmem:[%s4 + $0x2c] sm:$0xf]
  %v180 = vld [vmem:[%s4 + $0x30] sm:$0xf]
  %v181 = vld [vmem:[%s4 + $0x34] sm:$0xf]
  %v182 = vld [vmem:[%s4 + $0x38] sm:$0xf]
  %v183 = vld [vmem:[%s4 + $0x3c] sm:$0xf]
  %v248 = vunpack.c.l.b16 %v104
  %v249 = vunpack.c.l.b16 %v105
  %v250 = vunpack.c.l.b16 %v106
  %v251 = vunpack.c.l.b16 %v107
  %v252 = vunpack.c.l.b16 %v108
  %v253 = vunpack.c.l.b16 %v109
  %v254 = vunpack.c.l.b16 %v110
  %v255 = vunpack.c.l.b16 %v111
  %v256 = vunpack.c.l.b16 %v112
  %v257 = vunpack.c.l.b16 %v113
  %v258 = vunpack.c.l.b16 %v114
  %v259 = vunpack.c.l.b16 %v115
  %v260 = vunpack.c.l.b16 %v116
  %v261 = vunpack.c.l.b16 %v117
  %v262 = vunpack.c.l.b16 %v118
  %v263 = vunpack.c.l.b16 %v119
  %v264 = vunpack.c.l.b16 %v120
  %v265 = vunpack.c.l.b16 %v121
  %v266 = vunpack.c.l.b16 %v122
  %v267 = vunpack.c.l.b16 %v123
  %v268 = vunpack.c.l.b16 %v124
  %v269 = vunpack.c.l.b16 %v125
  %v270 = vunpack.c.l.b16 %v126
  %v271 = vunpack.c.l.b16 %v127
  %v272 = vunpack.c.l.b16 %v128
  %v273 = vunpack.c.l.b16 %v129
  %v274 = vunpack.c.l.b16 %v130
  %v275 = vunpack.c.l.b16 %v131
  %v276 = vunpack.c.l.b16 %v132
  %v277 = vunpack.c.l.b16 %v133
  %v278 = vunpack.c.l.b16 %v134
  %v279 = vunpack.c.l.b16 %v135
  %v280 = vunpack.c.l.b16 %v136
  %v281 = vunpack.c.l.b16 %v137
  %v282 = vunpack.c.l.b16 %v138
  %v283 = vunpack.c.l.b16 %v139
  %v284 = vunpack.c.l.b16 %v140
  %v285 = vunpack.c.l.b16 %v141
  %v286 = vunpack.c.l.b16 %v142
  %v287 = vunpack.c.l.b16 %v143
  %v288 = vunpack.c.l.b16 %v144
  %v289 = vunpack.c.l.b16 %v145
  %v290 = vunpack.c.l.b16 %v146
  %v291 = vunpack.c.l.b16 %v147
  %v292 = vunpack.c.l.b16 %v148
  %v293 = vunpack.c.l.b16 %v149
  %v294 = vunpack.c.l.b16 %v150
  %v295 = vunpack.c.l.b16 %v151
  %v296 = vunpack.c.l.b16 %v152
  %v297 = vunpack.c.l.b16 %v153
  %v298 = vunpack.c.l.b16 %v154
  %v299 = vunpack.c.l.b16 %v155
  %v300 = vunpack.c.l.b16 %v156
  %v301 = vunpack.c.l.b16 %v157
  %v302 = vunpack.c.l.b16 %v158
  %v303 = vunpack.c.l.b16 %v159
  %v304 = vunpack.c.l.b16 %v160
  %v305 = vunpack.c.l.b16 %v161
  %v306 = vunpack.c.l.b16 %v162
  %v307 = vunpack.c.l.b16 %v163
  %v308 = vunpack.c.l.b16 %v164
  %v309 = vunpack.c.l.b16 %v165
  %v310 = vunpack.c.l.b16 %v166
  %v311 = vunpack.c.l.b16 %v167
  %v312 = vpack.c.b16 %v249, %v248
  %v313 = vpack.c.b16 %v251, %v250
  %v314 = vpack.c.b16 %v253, %v252
  %v315 = vpack.c.b16 %v255, %v254
  %v316 = vpack.c.b16 %v257, %v256
  %v317 = vpack.c.b16 %v259, %v258
  %v318 = vpack.c.b16 %v261, %v260
  %v319 = vpack.c.b16 %v263, %v262
  %v320 = vpack.c.b16 %v265, %v264
  %v321 = vpack.c.b16 %v267, %v266
  %v322 = vpack.c.b16 %v269, %v268
  %v323 = vpack.c.b16 %v271, %v270
  %v324 = vpack.c.b16 %v273, %v272
  %v325 = vpack.c.b16 %v275, %v274
  %v326 = vpack.c.b16 %v277, %v276
  %v327 = vpack.c.b16 %v279, %v278
  %v328 = vpack.c.b16 %v281, %v280
  %v329 = vpack.c.b16 %v283, %v282
  %v330 = vpack.c.b16 %v285, %v284
  %v331 = vpack.c.b16 %v287, %v286
  %v332 = vpack.c.b16 %v289, %v288
  %v333 = vpack.c.b16 %v291, %v290
  %v334 = vpack.c.b16 %v293, %v292
  %v335 = vpack.c.b16 %v295, %v294
  %v336 = vpack.c.b16 %v297, %v296
  %v337 = vpack.c.b16 %v299, %v298
  %v338 = vpack.c.b16 %v301, %v300
  %v339 = vpack.c.b16 %v303, %v302
  %v340 = vpack.c.b16 %v305, %v304
  %v341 = vpack.c.b16 %v307, %v306
  %v342 = vpack.c.b16 %v309, %v308
  %v343 = vpack.c.b16 %v311, %v310
  %v392 = vunpack.c.l.b16 %v168
  %v393 = vunpack.c.l.b16 %v169
  %v394 = vunpack.c.l.b16 %v170
  %v395 = vunpack.c.l.b16 %v171
  %v396 = vunpack.c.l.b16 %v172
  %v397 = vunpack.c.l.b16 %v173
  %v398 = vunpack.c.l.b16 %v174
  %v399 = vunpack.c.l.b16 %v175
  %v400 = vunpack.c.l.b16 %v176
  %v401 = vunpack.c.l.b16 %v177
  %v402 = vunpack.c.l.b16 %v178
  %v403 = vunpack.c.l.b16 %v179
  %v404 = vunpack.c.l.b16 %v180
  %v405 = vunpack.c.l.b16 %v181
  %v406 = vunpack.c.l.b16 %v182
  %v407 = vunpack.c.l.b16 %v183
  %v408 = vpack.c.b16 %v393, %v392
  %v409 = vpack.c.b16 %v395, %v394
  %v410 = vpack.c.b16 %v397, %v396
  %v411 = vpack.c.b16 %v399, %v398
  %v412 = vpack.c.b16 %v401, %v400
  %v413 = vpack.c.b16 %v403, %v402
  %v414 = vpack.c.b16 %v405, %v404
  %v415 = vpack.c.b16 %v407, %v406
  %424 = vmatprep.subr.bf16.mxu0 0
  %425 = vmatpush1.bf16.msra.mxu0 %v415
  %426 = vmatprep.subr.bf16.mxu0 0
  %427 = vmatpush1.bf16.msra.mxu0 %v414
  %428 = vmatprep.subr.bf16.mxu0 0
  %429 = vmatpush1.bf16.msra.mxu0 %v413
  %430 = vmatprep.subr.bf16.mxu0 0
  %431 = vmatpush1.bf16.msra.mxu0 %v412
  %432 = vmatprep.subr.bf16.mxu0 0
  %433 = vmatpush1.bf16.msra.mxu0 %v411
  %434 = vmatprep.subr.bf16.mxu0 0
  %435 = vmatpush1.bf16.msra.mxu0 %v410
  %436 = vmatprep.subr.bf16.mxu0 0
  %437 = vmatpush1.bf16.msra.mxu0 %v409
  %438 = vmatprep.subr.bf16.mxu0 0
  %439 = vmatpush1.bf16.msra.mxu0 %v408
  %440 = vmatprep.subr.bf16.mxu0 0
  %441 = vmatpush2.bf16.msra.mxu0 0
  %442 = vmatprep.subr.bf16.mxu0 0
  %443 = vmatpush2.bf16.msra.mxu0 0
  %444 = vmatprep.subr.bf16.mxu0 0
  %445 = vmatpush2.bf16.msra.mxu0 0
  %446 = vmatprep.subr.bf16.mxu0 0
  %447 = vmatpush2.bf16.msra.mxu0 0
  %448 = vmatprep.subr.bf16.mxu0 0
  %449 = vmatpush2.bf16.msra.mxu0 0
  %450 = vmatprep.subr.bf16.mxu0 0
  %451 = vmatpush2.bf16.msra.mxu0 0
  %452 = vmatprep.subr.bf16.mxu0 0
  %453 = vmatpush2.bf16.msra.mxu0 0
  %454 = vmatprep.subr.bf16.mxu0 0
  %455 = vmatpush2.bf16.msra.mxu0 0
  %456 = vmatprep.mubr.bf16.mxu0 0
  %457 = vmatmul.mubr.bf16.gmra.mxu0 %v312
  %v458 = vpop.f32.mrf.mxu0
  %v459 = vadd.f32 0.0, %v458
  %v460 = vpop.f32.mrf.mxu0
  %v461 = vpop.f32.mrf.mxu0
  %v462 = vadd.f32 0.0, %v461
  %v463 = vpop.f32.mrf.mxu0
  %464 = vmatprep.mubr.bf16.mxu0 0
  %465 = vmatmul.mubr.bf16.gmra.mxu0 %v313
  %v466 = vpop.f32.mrf.mxu0
  %v467 = vadd.f32 0.0, %v466
  %v468 = vpop.f32.mrf.mxu0
  %v469 = vpop.f32.mrf.mxu0
  %v470 = vadd.f32 0.0, %v469
  %v471 = vpop.f32.mrf.mxu0
  %472 = vmatprep.mubr.bf16.mxu0 0
  %473 = vmatmul.mubr.bf16.gmra.mxu0 %v314
  %v474 = vpop.f32.mrf.mxu0
  %v475 = vadd.f32 0.0, %v474
  %v476 = vpop.f32.mrf.mxu0
  %v477 = vpop.f32.mrf.mxu0
  %v478 = vadd.f32 0.0, %v477
  %v479 = vpop.f32.mrf.mxu0
  %480 = vmatprep.mubr.bf16.mxu0 0
  %481 = vmatmul.mubr.bf16.gmra.mxu0 %v315
  %v482 = vpop.f32.mrf.mxu0
  %v483 = vadd.f32 0.0, %v482
  %v484 = vpop.f32.mrf.mxu0
  %v485 = vpop.f32.mrf.mxu0
  %v486 = vadd.f32 0.0, %v485
  %v487 = vpop.f32.mrf.mxu0
  %488 = vmatprep.mubr.bf16.mxu0 0
  %489 = vmatmul.mubr.bf16.gmra.mxu0 %v316
  %v490 = vpop.f32.mrf.mxu0
  %v491 = vadd.f32 0.0, %v490
  %v492 = vpop.f32.mrf.mxu0
  %v493 = vpop.f32.mrf.mxu0
  %v494 = vadd.f32 0.0, %v493
  %v495 = vpop.f32.mrf.mxu0
  %496 = vmatprep.mubr.bf16.mxu0 0
  %497 = vmatmul.mubr.bf16.gmra.mxu0 %v317
  %v498 = vpop.f32.mrf.mxu0
  %v499 = vadd.f32 0.0, %v498
  %v500 = vpop.f32.mrf.mxu0
  %v501 = vpop.f32.mrf.mxu0
  %v502 = vadd.f32 0.0, %v501
  %v503 = vpop.f32.mrf.mxu0
  %504 = vmatprep.mubr.bf16.mxu0 0
  %505 = vmatmul.mubr.bf16.gmra.mxu0 %v318
  %v506 = vpop.f32.mrf.mxu0
  %v507 = vadd.f32 0.0, %v506
  %v508 = vpop.f32.mrf.mxu0
  %v509 = vpop.f32.mrf.mxu0
  %v510 = vadd.f32 0.0, %v509
  %v511 = vpop.f32.mrf.mxu0
  %512 = vmatprep.mubr.bf16.mxu0 0
  %513 = vmatmul.mubr.bf16.gmra.mxu0 %v319
  %v514 = vpop.f32.mrf.mxu0
  %v515 = vadd.f32 0.0, %v514
  %v516 = vpop.f32.mrf.mxu0
  %v517 = vpop.f32.mrf.mxu0
  %v518 = vadd.f32 0.0, %v517
  %v519 = vpop.f32.mrf.mxu0
  %520 = vmatprep.mubr.bf16.mxu0 0
  %521 = vmatmul.mubr.bf16.gmra.mxu0 %v320
  %v522 = vpop.f32.mrf.mxu0
  %v523 = vadd.f32 0.0, %v522
  %v524 = vpop.f32.mrf.mxu0
  %v525 = vpop.f32.mrf.mxu0
  %v526 = vadd.f32 0.0, %v525
  %v527 = vpop.f32.mrf.mxu0
  %528 = vmatprep.mubr.bf16.mxu0 0
  %529 = vmatmul.mubr.bf16.gmra.mxu0 %v321
  %v530 = vpop.f32.mrf.mxu0
  %v531 = vadd.f32 0.0, %v530
  %v532 = vpop.f32.mrf.mxu0
  %v533 = vpop.f32.mrf.mxu0
  %v534 = vadd.f32 0.0, %v533
  %v535 = vpop.f32.mrf.mxu0
  %536 = vmatprep.mubr.bf16.mxu0 0
  %537 = vmatmul.mubr.bf16.gmra.mxu0 %v322
  %v538 = vpop.f32.mrf.mxu0
  %v539 = vadd.f32 0.0, %v538
  %v540 = vpop.f32.mrf.mxu0
  %v541 = vpop.f32.mrf.mxu0
  %v542 = vadd.f32 0.0, %v541
  %v543 = vpop.f32.mrf.mxu0
  %544 = vmatprep.mubr.bf16.mxu0 0
  %545 = vmatmul.mubr.bf16.gmra.mxu0 %v323
  %v546 = vpop.f32.mrf.mxu0
  %v547 = vadd.f32 0.0, %v546
  %v548 = vpop.f32.mrf.mxu0
  %v549 = vpop.f32.mrf.mxu0
  %v550 = vadd.f32 0.0, %v549
  %v551 = vpop.f32.mrf.mxu0
  %552 = vmatprep.mubr.bf16.mxu0 0
  %553 = vmatmul.mubr.bf16.gmra.mxu0 %v324
  %v554 = vpop.f32.mrf.mxu0
  %v555 = vadd.f32 0.0, %v554
  %v556 = vpop.f32.mrf.mxu0
  %v557 = vpop.f32.mrf.mxu0
  %v558 = vadd.f32 0.0, %v557
  %v559 = vpop.f32.mrf.mxu0
  %560 = vmatprep.mubr.bf16.mxu0 0
  %561 = vmatmul.mubr.bf16.gmra.mxu0 %v325
  %v562 = vpop.f32.mrf.mxu0
  %v563 = vadd.f32 0.0, %v562
  %v564 = vpop.f32.mrf.mxu0
  %v565 = vpop.f32.mrf.mxu0
  %v566 = vadd.f32 0.0, %v565
  %v567 = vpop.f32.mrf.mxu0
  %568 = vmatprep.mubr.bf16.mxu0 0
  %569 = vmatmul.mubr.bf16.gmra.mxu0 %v326
  %v570 = vpop.f32.mrf.mxu0
  %v571 = vadd.f32 0.0, %v570
  %v572 = vpop.f32.mrf.mxu0
  %v573 = vpop.f32.mrf.mxu0
  %v574 = vadd.f32 0.0, %v573
  %v575 = vpop.f32.mrf.mxu0
  %576 = vmatprep.mubr.bf16.mxu0 0
  %577 = vmatmul.mubr.bf16.gmra.mxu0 %v327
  %v578 = vpop.f32.mrf.mxu0
  %v579 = vadd.f32 0.0, %v578
  %v580 = vpop.f32.mrf.mxu0
  %v581 = vpop.f32.mrf.mxu0
  %v582 = vadd.f32 0.0, %v581
  %v583 = vpop.f32.mrf.mxu0
  %584 = vmatprep.mubr.bf16.mxu0 0
  %585 = vmatmul.mubr.bf16.gmra.mxu0 %v328
  %v586 = vpop.f32.mrf.mxu0
  %v587 = vadd.f32 0.0, %v586
  %v588 = vpop.f32.mrf.mxu0
  %v589 = vpop.f32.mrf.mxu0
  %v590 = vadd.f32 0.0, %v589
  %v591 = vpop.f32.mrf.mxu0
  %592 = vmatprep.mubr.bf16.mxu0 0
  %593 = vmatmul.mubr.bf16.gmra.mxu0 %v329
  %v594 = vpop.f32.mrf.mxu0
  %v595 = vadd.f32 0.0, %v594
  %v596 = vpop.f32.mrf.mxu0
  %v597 = vpop.f32.mrf.mxu0
  %v598 = vadd.f32 0.0, %v597
  %v599 = vpop.f32.mrf.mxu0
  %600 = vmatprep.mubr.bf16.mxu0 0
  %601 = vmatmul.mubr.bf16.gmra.mxu0 %v330
  %v602 = vpop.f32.mrf.mxu0
  %v603 = vadd.f32 0.0, %v602
  %v604 = vpop.f32.mrf.mxu0
  %v605 = vpop.f32.mrf.mxu0
  %v606 = vadd.f32 0.0, %v605
  %v607 = vpop.f32.mrf.mxu0
  %608 = vmatprep.mubr.bf16.mxu0 0
  %609 = vmatmul.mubr.bf16.gmra.mxu0 %v331
  %v610 = vpop.f32.mrf.mxu0
  %v611 = vadd.f32 0.0, %v610
  %v612 = vpop.f32.mrf.mxu0
  %v613 = vpop.f32.mrf.mxu0
  %v614 = vadd.f32 0.0, %v613
  %v615 = vpop.f32.mrf.mxu0
  %616 = vmatprep.mubr.bf16.mxu0 0
  %617 = vmatmul.mubr.bf16.gmra.mxu0 %v332
  %v618 = vpop.f32.mrf.mxu0
  %v619 = vadd.f32 0.0, %v618
  %v620 = vpop.f32.mrf.mxu0
  %v621 = vpop.f32.mrf.mxu0
  %v622 = vadd.f32 0.0, %v621
  %v623 = vpop.f32.mrf.mxu0
  %624 = vmatprep.mubr.bf16.mxu0 0
  %625 = vmatmul.mubr.bf16.gmra.mxu0 %v333
  %v626 = vpop.f32.mrf.mxu0
  %v627 = vadd.f32 0.0, %v626
  %v628 = vpop.f32.mrf.mxu0
  %v629 = vpop.f32.mrf.mxu0
  %v630 = vadd.f32 0.0, %v629
  %v631 = vpop.f32.mrf.mxu0
  %632 = vmatprep.mubr.bf16.mxu0 0
  %633 = vmatmul.mubr.bf16.gmra.mxu0 %v334
  %v634 = vpop.f32.mrf.mxu0
  %v635 = vadd.f32 0.0, %v634
  %v636 = vpop.f32.mrf.mxu0
  %v637 = vpop.f32.mrf.mxu0
  %v638 = vadd.f32 0.0, %v637
  %v639 = vpop.f32.mrf.mxu0
  %640 = vmatprep.mubr.bf16.mxu0 0
  %641 = vmatmul.mubr.bf16.gmra.mxu0 %v335
  %v642 = vpop.f32.mrf.mxu0
  %v643 = vadd.f32 0.0, %v642
  %v644 = vpop.f32.mrf.mxu0
  %v645 = vpop.f32.mrf.mxu0
  %v646 = vadd.f32 0.0, %v645
  %v647 = vpop.f32.mrf.mxu0
  %648 = vmatprep.mubr.bf16.mxu0 0
  %649 = vmatmul.mubr.bf16.gmra.mxu0 %v336
  %v650 = vpop.f32.mrf.mxu0
  %v651 = vadd.f32 0.0, %v650
  %v652 = vpop.f32.mrf.mxu0
  %v653 = vpop.f32.mrf.mxu0
  %v654 = vadd.f32 0.0, %v653
  %v655 = vpop.f32.mrf.mxu0
  %656 = vmatprep.mubr.bf16.mxu0 0
  %657 = vmatmul.mubr.bf16.gmra.mxu0 %v337
  %v658 = vpop.f32.mrf.mxu0
  %v659 = vadd.f32 0.0, %v658
  %v660 = vpop.f32.mrf.mxu0
  %v661 = vpop.f32.mrf.mxu0
  %v662 = vadd.f32 0.0, %v661
  %v663 = vpop.f32.mrf.mxu0
  %664 = vmatprep.mubr.bf16.mxu0 0
  %665 = vmatmul.mubr.bf16.gmra.mxu0 %v338
  %v666 = vpop.f32.mrf.mxu0
  %v667 = vadd.f32 0.0, %v666
  %v668 = vpop.f32.mrf.mxu0
  %v669 = vpop.f32.mrf.mxu0
  %v670 = vadd.f32 0.0, %v669
  %v671 = vpop.f32.mrf.mxu0
  %672 = vmatprep.mubr.bf16.mxu0 0
  %673 = vmatmul.mubr.bf16.gmra.mxu0 %v339
  %v674 = vpop.f32.mrf.mxu0
  %v675 = vadd.f32 0.0, %v674
  %v676 = vpop.f32.mrf.mxu0
  %v677 = vpop.f32.mrf.mxu0
  %v678 = vadd.f32 0.0, %v677
  %v679 = vpop.f32.mrf.mxu0
  %680 = vmatprep.mubr.bf16.mxu0 0
  %681 = vmatmul.mubr.bf16.gmra.mxu0 %v340
  %v682 = vpop.f32.mrf.mxu0
  %v683 = vadd.f32 0.0, %v682
  %v684 = vpop.f32.mrf.mxu0
  %v685 = vpop.f32.mrf.mxu0
  %v686 = vadd.f32 0.0, %v685
  %v687 = vpop.f32.mrf.mxu0
  %688 = vmatprep.mubr.bf16.mxu0 0
  %689 = vmatmul.mubr.bf16.gmra.mxu0 %v341
  %v690 = vpop.f32.mrf.mxu0
  %v691 = vadd.f32 0.0, %v690
  %v692 = vpop.f32.mrf.mxu0
  %v693 = vpop.f32.mrf.mxu0
  %v694 = vadd.f32 0.0, %v693
  %v695 = vpop.f32.mrf.mxu0
  %696 = vmatprep.mubr.bf16.mxu0 0
  %697 = vmatmul.mubr.bf16.gmra.mxu0 %v342
  %v698 = vpop.f32.mrf.mxu0
  %v699 = vadd.f32 0.0, %v698
  %v700 = vpop.f32.mrf.mxu0
  %v701 = vpop.f32.mrf.mxu0
  %v702 = vadd.f32 0.0, %v701
  %v703 = vpop.f32.mrf.mxu0
  %704 = vmatprep.mubr.bf16.mxu0 0
  %705 = vmatmul.mubr.bf16.gmra.mxu0 %v343
  %v706 = vpop.f32.mrf.mxu0
  %v707 = vadd.f32 0.0, %v706
  %v708 = vpop.f32.mrf.mxu0
  %v709 = vpop.f32.mrf.mxu0
  %v710 = vadd.f32 0.0, %v709
  %v711 = vpop.f32.mrf.mxu0
  %712 = vdwg.mxu0
  %v713 = vld [vmem:[%s3] sm:$0x1]
  %v715 = vlaneseq
  %v716 = vshrl.u32 %v715, 7
  %v717 = vsub.s32 0, %v716
  %v718 = vrot.slane %v713, %v717
  %v784 = vunpack.c.l.b16 %v24
  %v785 = vunpack.c.l.b16 %v25
  %v786 = vunpack.c.l.b16 %v26
  %v787 = vunpack.c.l.b16 %v27
  %v788 = vunpack.c.l.b16 %v28
  %v789 = vunpack.c.l.b16 %v29
  %v790 = vunpack.c.l.b16 %v30
  %v791 = vunpack.c.l.b16 %v31
  %v792 = vunpack.c.l.b16 %v32
  %v793 = vunpack.c.l.b16 %v33
  %v794 = vunpack.c.l.b16 %v34
  %v795 = vunpack.c.l.b16 %v35
  %v796 = vunpack.c.l.b16 %v36
  %v797 = vunpack.c.l.b16 %v37
  %v798 = vunpack.c.l.b16 %v38
  %v799 = vunpack.c.l.b16 %v39
  %v800 = vunpack.c.l.b16 %v40
  %v801 = vunpack.c.l.b16 %v41
  %v802 = vunpack.c.l.b16 %v42
  %v803 = vunpack.c.l.b16 %v43
  %v804 = vunpack.c.l.b16 %v44
  %v805 = vunpack.c.l.b16 %v45
  %v806 = vunpack.c.l.b16 %v46
  %v807 = vunpack.c.l.b16 %v47
  %v808 = vunpack.c.l.b16 %v48
  %v809 = vunpack.c.l.b16 %v49
  %v810 = vunpack.c.l.b16 %v50
  %v811 = vunpack.c.l.b16 %v51
  %v812 = vunpack.c.l.b16 %v52
  %v813 = vunpack.c.l.b16 %v53
  %v814 = vunpack.c.l.b16 %v54
  %v815 = vunpack.c.l.b16 %v55
  %v816 = vunpack.c.l.b16 %v56
  %v817 = vunpack.c.l.b16 %v57
  %v818 = vunpack.c.l.b16 %v58
  %v819 = vunpack.c.l.b16 %v59
  %v820 = vunpack.c.l.b16 %v60
  %v821 = vunpack.c.l.b16 %v61
  %v822 = vunpack.c.l.b16 %v62
  %v823 = vunpack.c.l.b16 %v63
  %v824 = vunpack.c.l.b16 %v64
  %v825 = vunpack.c.l.b16 %v65
  %v826 = vunpack.c.l.b16 %v66
  %v827 = vunpack.c.l.b16 %v67
  %v828 = vunpack.c.l.b16 %v68
  %v829 = vunpack.c.l.b16 %v69
  %v830 = vunpack.c.l.b16 %v70
  %v831 = vunpack.c.l.b16 %v71
  %v832 = vunpack.c.l.b16 %v72
  %v833 = vunpack.c.l.b16 %v73
  %v834 = vunpack.c.l.b16 %v74
  %v835 = vunpack.c.l.b16 %v75
  %v836 = vunpack.c.l.b16 %v76
  %v837 = vunpack.c.l.b16 %v77
  %v838 = vunpack.c.l.b16 %v78
  %v839 = vunpack.c.l.b16 %v79
  %v840 = vunpack.c.l.b16 %v80
  %v841 = vunpack.c.l.b16 %v81
  %v842 = vunpack.c.l.b16 %v82
  %v843 = vunpack.c.l.b16 %v83
  %v844 = vunpack.c.l.b16 %v84
  %v845 = vunpack.c.l.b16 %v85
  %v846 = vunpack.c.l.b16 %v86
  %v847 = vunpack.c.l.b16 %v87
  %v848 = vpack.c.b16 %v785, %v784
  %v849 = vpack.c.b16 %v787, %v786
  %v850 = vpack.c.b16 %v789, %v788
  %v851 = vpack.c.b16 %v791, %v790
  %v852 = vpack.c.b16 %v793, %v792
  %v853 = vpack.c.b16 %v795, %v794
  %v854 = vpack.c.b16 %v797, %v796
  %v855 = vpack.c.b16 %v799, %v798
  %v856 = vpack.c.b16 %v801, %v800
  %v857 = vpack.c.b16 %v803, %v802
  %v858 = vpack.c.b16 %v805, %v804
  %v859 = vpack.c.b16 %v807, %v806
  %v860 = vpack.c.b16 %v809, %v808
  %v861 = vpack.c.b16 %v811, %v810
  %v862 = vpack.c.b16 %v813, %v812
  %v863 = vpack.c.b16 %v815, %v814
  %v864 = vpack.c.b16 %v817, %v816
  %v865 = vpack.c.b16 %v819, %v818
  %v866 = vpack.c.b16 %v821, %v820
  %v867 = vpack.c.b16 %v823, %v822
  %v868 = vpack.c.b16 %v825, %v824
  %v869 = vpack.c.b16 %v827, %v826
  %v870 = vpack.c.b16 %v829, %v828
  %v871 = vpack.c.b16 %v831, %v830
  %v872 = vpack.c.b16 %v833, %v832
  %v873 = vpack.c.b16 %v835, %v834
  %v874 = vpack.c.b16 %v837, %v836
  %v875 = vpack.c.b16 %v839, %v838
  %v876 = vpack.c.b16 %v841, %v840
  %v877 = vpack.c.b16 %v843, %v842
  %v878 = vpack.c.b16 %v845, %v844
  %v879 = vpack.c.b16 %v847, %v846
  %v928 = vunpack.c.l.b16 %v88
  %v929 = vunpack.c.l.b16 %v89
  %v930 = vunpack.c.l.b16 %v90
  %v931 = vunpack.c.l.b16 %v91
  %v932 = vunpack.c.l.b16 %v92
  %v933 = vunpack.c.l.b16 %v93
  %v934 = vunpack.c.l.b16 %v94
  %v935 = vunpack.c.l.b16 %v95
  %v936 = vunpack.c.l.b16 %v96
  %v937 = vunpack.c.l.b16 %v97
  %v938 = vunpack.c.l.b16 %v98
  %v939 = vunpack.c.l.b16 %v99
  %v940 = vunpack.c.l.b16 %v100
  %v941 = vunpack.c.l.b16 %v101
  %v942 = vunpack.c.l.b16 %v102
  %v943 = vunpack.c.l.b16 %v103
  %v944 = vpack.c.b16 %v929, %v928
  %v945 = vpack.c.b16 %v931, %v930
  %v946 = vpack.c.b16 %v933, %v932
  %v947 = vpack.c.b16 %v935, %v934
  %v948 = vpack.c.b16 %v937, %v936
  %v949 = vpack.c.b16 %v939, %v938
  %v950 = vpack.c.b16 %v941, %v940
  %v951 = vpack.c.b16 %v943, %v942
  %960 = vmatprep.subr.bf16.mxu0 0
  %961 = vmatpush1.bf16.msra.mxu0 %v951
  %962 = vmatprep.subr.bf16.mxu0 0
  %963 = vmatpush1.bf16.msra.mxu0 %v950
  %964 = vmatprep.subr.bf16.mxu0 0
  %965 = vmatpush1.bf16.msra.mxu0 %v949
  %966 = vmatprep.subr.bf16.mxu0 0
  %967 = vmatpush1.bf16.msra.mxu0 %v948
  %968 = vmatprep.subr.bf16.mxu0 0
  %969 = vmatpush1.bf16.msra.mxu0 %v947
  %970 = vmatprep.subr.bf16.mxu0 0
  %971 = vmatpush1.bf16.msra.mxu0 %v946
  %972 = vmatprep.subr.bf16.mxu0 0
  %973 = vmatpush1.bf16.msra.mxu0 %v945
  %974 = vmatprep.subr.bf16.mxu0 0
  %975 = vmatpush1.bf16.msra.mxu0 %v944
  %976 = vmatprep.subr.bf16.mxu0 0
  %977 = vmatpush2.bf16.msra.mxu0 0
  %978 = vmatprep.subr.bf16.mxu0 0
  %979 = vmatpush2.bf16.msra.mxu0 0
  %980 = vmatprep.subr.bf16.mxu0 0
  %981 = vmatpush2.bf16.msra.mxu0 0
  %982 = vmatprep.subr.bf16.mxu0 0
  %983 = vmatpush2.bf16.msra.mxu0 0
  %984 = vmatprep.subr.bf16.mxu0 0
  %985 = vmatpush2.bf16.msra.mxu0 0
  %986 = vmatprep.subr.bf16.mxu0 0
  %987 = vmatpush2.bf16.msra.mxu0 0
  %988 = vmatprep.subr.bf16.mxu0 0
  %989 = vmatpush2.bf16.msra.mxu0 0
  %990 = vmatprep.subr.bf16.mxu0 0
  %991 = vmatpush2.bf16.msra.mxu0 0
  %992 = vmatprep.mubr.bf16.mxu0 0
  %993 = vmatmul.mubr.bf16.gmra.mxu0 %v848
  %v994 = vpop.f32.mrf.mxu0
  %v995 = vadd.f32 %v718, %v994
  %v996 = vpop.f32.mrf.mxu0
  %v997 = vpop.f32.mrf.mxu0
  %v998 = vadd.f32 %v718, %v997
  %v999 = vpop.f32.mrf.mxu0
  %1000 = vmatprep.mubr.bf16.mxu0 0
  %1001 = vmatmul.mubr.bf16.gmra.mxu0 %v849
  %v1002 = vpop.f32.mrf.mxu0
  %v1003 = vadd.f32 %v718, %v1002
  %v1004 = vpop.f32.mrf.mxu0
  %v1005 = vpop.f32.mrf.mxu0
  %v1006 = vadd.f32 %v718, %v1005
  %v1007 = vpop.f32.mrf.mxu0
  %1008 = vmatprep.mubr.bf16.mxu0 0
  %1009 = vmatmul.mubr.bf16.gmra.mxu0 %v850
  %v1010 = vpop.f32.mrf.mxu0
  %v1011 = vadd.f32 %v718, %v1010
  %v1012 = vpop.f32.mrf.mxu0
  %v1013 = vpop.f32.mrf.mxu0
  %v1014 = vadd.f32 %v718, %v1013
  %v1015 = vpop.f32.mrf.mxu0
  %1016 = vmatprep.mubr.bf16.mxu0 0
  %1017 = vmatmul.mubr.bf16.gmra.mxu0 %v851
  %v1018 = vpop.f32.mrf.mxu0
  %v1019 = vadd.f32 %v718, %v1018
  %v1020 = vpop.f32.mrf.mxu0
  %v1021 = vpop.f32.mrf.mxu0
  %v1022 = vadd.f32 %v718, %v1021
  %v1023 = vpop.f32.mrf.mxu0
  %1024 = vmatprep.mubr.bf16.mxu0 0
  %1025 = vmatmul.mubr.bf16.gmra.mxu0 %v852
  %v1026 = vpop.f32.mrf.mxu0
  %v1027 = vadd.f32 %v718, %v1026
  %v1028 = vpop.f32.mrf.mxu0
  %v1029 = vpop.f32.mrf.mxu0
  %v1030 = vadd.f32 %v718, %v1029
  %v1031 = vpop.f32.mrf.mxu0
  %1032 = vmatprep.mubr.bf16.mxu0 0
  %1033 = vmatmul.mubr.bf16.gmra.mxu0 %v853
  %v1034 = vpop.f32.mrf.mxu0
  %v1035 = vadd.f32 %v718, %v1034
  %v1036 = vpop.f32.mrf.mxu0
  %v1037 = vpop.f32.mrf.mxu0
  %v1038 = vadd.f32 %v718, %v1037
  %v1039 = vpop.f32.mrf.mxu0
  %1040 = vmatprep.mubr.bf16.mxu0 0
  %1041 = vmatmul.mubr.bf16.gmra.mxu0 %v854
  %v1042 = vpop.f32.mrf.mxu0
  %v1043 = vadd.f32 %v718, %v1042
  %v1044 = vpop.f32.mrf.mxu0
  %v1045 = vpop.f32.mrf.mxu0
  %v1046 = vadd.f32 %v718, %v1045
  %v1047 = vpop.f32.mrf.mxu0
  %1048 = vmatprep.mubr.bf16.mxu0 0
  %1049 = vmatmul.mubr.bf16.gmra.mxu0 %v855
  %v1050 = vpop.f32.mrf.mxu0
  %v1051 = vadd.f32 %v718, %v1050
  %v1052 = vpop.f32.mrf.mxu0
  %v1053 = vpop.f32.mrf.mxu0
  %v1054 = vadd.f32 %v718, %v1053
  %v1055 = vpop.f32.mrf.mxu0
  %1056 = vmatprep.mubr.bf16.mxu0 0
  %1057 = vmatmul.mubr.bf16.gmra.mxu0 %v856
  %v1058 = vpop.f32.mrf.mxu0
  %v1059 = vadd.f32 %v718, %v1058
  %v1060 = vpop.f32.mrf.mxu0
  %v1061 = vpop.f32.mrf.mxu0
  %v1062 = vadd.f32 %v718, %v1061
  %v1063 = vpop.f32.mrf.mxu0
  %1064 = vmatprep.mubr.bf16.mxu0 0
  %1065 = vmatmul.mubr.bf16.gmra.mxu0 %v857
  %v1066 = vpop.f32.mrf.mxu0
  %v1067 = vadd.f32 %v718, %v1066
  %v1068 = vpop.f32.mrf.mxu0
  %v1069 = vpop.f32.mrf.mxu0
  %v1070 = vadd.f32 %v718, %v1069
  %v1071 = vpop.f32.mrf.mxu0
  %1072 = vmatprep.mubr.bf16.mxu0 0
  %1073 = vmatmul.mubr.bf16.gmra.mxu0 %v858
  %v1074 = vpop.f32.mrf.mxu0
  %v1075 = vadd.f32 %v718, %v1074
  %v1076 = vpop.f32.mrf.mxu0
  %v1077 = vpop.f32.mrf.mxu0
  %v1078 = vadd.f32 %v718, %v1077
  %v1079 = vpop.f32.mrf.mxu0
  %1080 = vmatprep.mubr.bf16.mxu0 0
  %1081 = vmatmul.mubr.bf16.gmra.mxu0 %v859
  %v1082 = vpop.f32.mrf.mxu0
  %v1083 = vadd.f32 %v718, %v1082
  %v1084 = vpop.f32.mrf.mxu0
  %v1085 = vpop.f32.mrf.mxu0
  %v1086 = vadd.f32 %v718, %v1085
  %v1087 = vpop.f32.mrf.mxu0
  %1088 = vmatprep.mubr.bf16.mxu0 0
  %1089 = vmatmul.mubr.bf16.gmra.mxu0 %v860
  %v1090 = vpop.f32.mrf.mxu0
  %v1091 = vadd.f32 %v718, %v1090
  %v1092 = vpop.f32.mrf.mxu0
  %v1093 = vpop.f32.mrf.mxu0
  %v1094 = vadd.f32 %v718, %v1093
  %v1095 = vpop.f32.mrf.mxu0
  %1096 = vmatprep.mubr.bf16.mxu0 0
  %1097 = vmatmul.mubr.bf16.gmra.mxu0 %v861
  %v1098 = vpop.f32.mrf.mxu0
  %v1099 = vadd.f32 %v718, %v1098
  %v1100 = vpop.f32.mrf.mxu0
  %v1101 = vpop.f32.mrf.mxu0
  %v1102 = vadd.f32 %v718, %v1101
  %v1103 = vpop.f32.mrf.mxu0
  %1104 = vmatprep.mubr.bf16.mxu0 0
  %1105 = vmatmul.mubr.bf16.gmra.mxu0 %v862
  %v1106 = vpop.f32.mrf.mxu0
  %v1107 = vadd.f32 %v718, %v1106
  %v1108 = vpop.f32.mrf.mxu0
  %v1109 = vpop.f32.mrf.mxu0
  %v1110 = vadd.f32 %v718, %v1109
  %v1111 = vpop.f32.mrf.mxu0
  %1112 = vmatprep.mubr.bf16.mxu0 0
  %1113 = vmatmul.mubr.bf16.gmra.mxu0 %v863
  %v1114 = vpop.f32.mrf.mxu0
  %v1115 = vadd.f32 %v718, %v1114
  %v1116 = vpop.f32.mrf.mxu0
  %v1117 = vpop.f32.mrf.mxu0
  %v1118 = vadd.f32 %v718, %v1117
  %v1119 = vpop.f32.mrf.mxu0
  %1120 = vmatprep.mubr.bf16.mxu0 0
  %1121 = vmatmul.mubr.bf16.gmra.mxu0 %v864
  %v1122 = vpop.f32.mrf.mxu0
  %v1123 = vadd.f32 %v718, %v1122
  %v1124 = vpop.f32.mrf.mxu0
  %v1125 = vpop.f32.mrf.mxu0
  %v1126 = vadd.f32 %v718, %v1125
  %v1127 = vpop.f32.mrf.mxu0
  %1128 = vmatprep.mubr.bf16.mxu0 0
  %1129 = vmatmul.mubr.bf16.gmra.mxu0 %v865
  %v1130 = vpop.f32.mrf.mxu0
  %v1131 = vadd.f32 %v718, %v1130
  %v1132 = vpop.f32.mrf.mxu0
  %v1133 = vpop.f32.mrf.mxu0
  %v1134 = vadd.f32 %v718, %v1133
  %v1135 = vpop.f32.mrf.mxu0
  %1136 = vmatprep.mubr.bf16.mxu0 0
  %1137 = vmatmul.mubr.bf16.gmra.mxu0 %v866
  %v1138 = vpop.f32.mrf.mxu0
  %v1139 = vadd.f32 %v718, %v1138
  %v1140 = vpop.f32.mrf.mxu0
  %v1141 = vpop.f32.mrf.mxu0
  %v1142 = vadd.f32 %v718, %v1141
  %v1143 = vpop.f32.mrf.mxu0
  %1144 = vmatprep.mubr.bf16.mxu0 0
  %1145 = vmatmul.mubr.bf16.gmra.mxu0 %v867
  %v1146 = vpop.f32.mrf.mxu0
  %v1147 = vadd.f32 %v718, %v1146
  %v1148 = vpop.f32.mrf.mxu0
  %v1149 = vpop.f32.mrf.mxu0
  %v1150 = vadd.f32 %v718, %v1149
  %v1151 = vpop.f32.mrf.mxu0
  %1152 = vmatprep.mubr.bf16.mxu0 0
  %1153 = vmatmul.mubr.bf16.gmra.mxu0 %v868
  %v1154 = vpop.f32.mrf.mxu0
  %v1155 = vadd.f32 %v718, %v1154
  %v1156 = vpop.f32.mrf.mxu0
  %v1157 = vpop.f32.mrf.mxu0
  %v1158 = vadd.f32 %v718, %v1157
  %v1159 = vpop.f32.mrf.mxu0
  %1160 = vmatprep.mubr.bf16.mxu0 0
  %1161 = vmatmul.mubr.bf16.gmra.mxu0 %v869
  %v1162 = vpop.f32.mrf.mxu0
  %v1163 = vadd.f32 %v718, %v1162
  %v1164 = vpop.f32.mrf.mxu0
  %v1165 = vpop.f32.mrf.mxu0
  %v1166 = vadd.f32 %v718, %v1165
  %v1167 = vpop.f32.mrf.mxu0
  %1168 = vmatprep.mubr.bf16.mxu0 0
  %1169 = vmatmul.mubr.bf16.gmra.mxu0 %v870
  %v1170 = vpop.f32.mrf.mxu0
  %v1171 = vadd.f32 %v718, %v1170
  %v1172 = vpop.f32.mrf.mxu0
  %v1173 = vpop.f32.mrf.mxu0
  %v1174 = vadd.f32 %v718, %v1173
  %v1175 = vpop.f32.mrf.mxu0
  %1176 = vmatprep.mubr.bf16.mxu0 0
  %1177 = vmatmul.mubr.bf16.gmra.mxu0 %v871
  %v1178 = vpop.f32.mrf.mxu0
  %v1179 = vadd.f32 %v718, %v1178
  %v1180 = vpop.f32.mrf.mxu0
  %v1181 = vpop.f32.mrf.mxu0
  %v1182 = vadd.f32 %v718, %v1181
  %v1183 = vpop.f32.mrf.mxu0
  %1184 = vmatprep.mubr.bf16.mxu0 0
  %1185 = vmatmul.mubr.bf16.gmra.mxu0 %v872
  %v1186 = vpop.f32.mrf.mxu0
  %v1187 = vadd.f32 %v718, %v1186
  %v1188 = vpop.f32.mrf.mxu0
  %v1189 = vpop.f32.mrf.mxu0
  %v1190 = vadd.f32 %v718, %v1189
  %v1191 = vpop.f32.mrf.mxu0
  %1192 = vmatprep.mubr.bf16.mxu0 0
  %1193 = vmatmul.mubr.bf16.gmra.mxu0 %v873
  %v1194 = vpop.f32.mrf.mxu0
  %v1195 = vadd.f32 %v718, %v1194
  %v1196 = vpop.f32.mrf.mxu0
  %v1197 = vpop.f32.mrf.mxu0
  %v1198 = vadd.f32 %v718, %v1197
  %v1199 = vpop.f32.mrf.mxu0
  %1200 = vmatprep.mubr.bf16.mxu0 0
  %1201 = vmatmul.mubr.bf16.gmra.mxu0 %v874
  %v1202 = vpop.f32.mrf.mxu0
  %v1203 = vadd.f32 %v718, %v1202
  %v1204 = vpop.f32.mrf.mxu0
  %v1205 = vpop.f32.mrf.mxu0
  %v1206 = vadd.f32 %v718, %v1205
  %v1207 = vpop.f32.mrf.mxu0
  %1208 = vmatprep.mubr.bf16.mxu0 0
  %1209 = vmatmul.mubr.bf16.gmra.mxu0 %v875
  %v1210 = vpop.f32.mrf.mxu0
  %v1211 = vadd.f32 %v718, %v1210
  %v1212 = vpop.f32.mrf.mxu0
  %v1213 = vpop.f32.mrf.mxu0
  %v1214 = vadd.f32 %v718, %v1213
  %v1215 = vpop.f32.mrf.mxu0
  %1216 = vmatprep.mubr.bf16.mxu0 0
  %1217 = vmatmul.mubr.bf16.gmra.mxu0 %v876
  %v1218 = vpop.f32.mrf.mxu0
  %v1219 = vadd.f32 %v718, %v1218
  %v1220 = vpop.f32.mrf.mxu0
  %v1221 = vpop.f32.mrf.mxu0
  %v1222 = vadd.f32 %v718, %v1221
  %v1223 = vpop.f32.mrf.mxu0
  %1224 = vmatprep.mubr.bf16.mxu0 0
  %1225 = vmatmul.mubr.bf16.gmra.mxu0 %v877
  %v1226 = vpop.f32.mrf.mxu0
  %v1227 = vadd.f32 %v718, %v1226
  %v1228 = vpop.f32.mrf.mxu0
  %v1229 = vpop.f32.mrf.mxu0
  %v1230 = vadd.f32 %v718, %v1229
  %v1231 = vpop.f32.mrf.mxu0
  %1232 = vmatprep.mubr.bf16.mxu0 0
  %1233 = vmatmul.mubr.bf16.gmra.mxu0 %v878
  %v1234 = vpop.f32.mrf.mxu0
  %v1235 = vadd.f32 %v718, %v1234
  %v1236 = vpop.f32.mrf.mxu0
  %v1237 = vpop.f32.mrf.mxu0
  %v1238 = vadd.f32 %v718, %v1237
  %v1239 = vpop.f32.mrf.mxu0
  %1240 = vmatprep.mubr.bf16.mxu0 0
  %1241 = vmatmul.mubr.bf16.gmra.mxu0 %v879
  %v1242 = vpop.f32.mrf.mxu0
  %v1243 = vadd.f32 %v718, %v1242
  %v1244 = vpop.f32.mrf.mxu0
  %v1245 = vpop.f32.mrf.mxu0
  %v1246 = vadd.f32 %v718, %v1245
  %v1247 = vpop.f32.mrf.mxu0
  %1248 = vdwg.mxu0
  %v1249 = vadd.f32 %v995, %v459
  %v1250 = vadd.f32 %v998, %v462
  %v1251 = vadd.f32 %v1003, %v467
  %v1252 = vadd.f32 %v1006, %v470
  %v1253 = vadd.f32 %v1011, %v475
  %v1254 = vadd.f32 %v1014, %v478
  %v1255 = vadd.f32 %v1019, %v483
  %v1256 = vadd.f32 %v1022, %v486
  %v1257 = vadd.f32 %v1027, %v491
  %v1258 = vadd.f32 %v1030, %v494
  %v1259 = vadd.f32 %v1035, %v499
  %v1260 = vadd.f32 %v1038, %v502
  %v1261 = vadd.f32 %v1043, %v507
  %v1262 = vadd.f32 %v1046, %v510
  %v1263 = vadd.f32 %v1051, %v515
  %v1264 = vadd.f32 %v1054, %v518
  %v1265 = vadd.f32 %v1059, %v523
  %v1266 = vadd.f32 %v1062, %v526
  %v1267 = vadd.f32 %v1067, %v531
  %v1268 = vadd.f32 %v1070, %v534
  %v1269 = vadd.f32 %v1075, %v539
  %v1270 = vadd.f32 %v1078, %v542
  %v1271 = vadd.f32 %v1083, %v547
  %v1272 = vadd.f32 %v1086, %v550
  %v1273 = vadd.f32 %v1091, %v555
  %v1274 = vadd.f32 %v1094, %v558
  %v1275 = vadd.f32 %v1099, %v563
  %v1276 = vadd.f32 %v1102, %v566
  %v1277 = vadd.f32 %v1107, %v571
  %v1278 = vadd.f32 %v1110, %v574
  %v1279 = vadd.f32 %v1115, %v579
  %v1280 = vadd.f32 %v1118, %v582
  %v1281 = vadd.f32 %v1123, %v587
  %v1282 = vadd.f32 %v1126, %v590
  %v1283 = vadd.f32 %v1131, %v595
  %v1284 = vadd.f32 %v1134, %v598
  %v1285 = vadd.f32 %v1139, %v603
  %v1286 = vadd.f32 %v1142, %v606
  %v1287 = vadd.f32 %v1147, %v611
  %v1288 = vadd.f32 %v1150, %v614
  %v1289 = vadd.f32 %v1155, %v619
  %v1290 = vadd.f32 %v1158, %v622
  %v1291 = vadd.f32 %v1163, %v627
  %v1292 = vadd.f32 %v1166, %v630
  %v1293 = vadd.f32 %v1171, %v635
  %v1294 = vadd.f32 %v1174, %v638
  %v1295 = vadd.f32 %v1179, %v643
  %v1296 = vadd.f32 %v1182, %v646
  %v1297 = vadd.f32 %v1187, %v651
  %v1298 = vadd.f32 %v1190, %v654
  %v1299 = vadd.f32 %v1195, %v659
  %v1300 = vadd.f32 %v1198, %v662
  %v1301 = vadd.f32 %v1203, %v667
  %v1302 = vadd.f32 %v1206, %v670
  %v1303 = vadd.f32 %v1211, %v675
  %v1304 = vadd.f32 %v1214, %v678
  %v1305 = vadd.f32 %v1219, %v683
  %v1306 = vadd.f32 %v1222, %v686
  %v1307 = vadd.f32 %v1227, %v691
  %v1308 = vadd.f32 %v1230, %v694
  %v1309 = vadd.f32 %v1235, %v699
  %v1310 = vadd.f32 %v1238, %v702
  %v1311 = vadd.f32 %v1243, %v707
  %v1312 = vadd.f32 %v1246, %v710
  %v1313 = vld [vmem:[%s5] sm:$0x1]
  %v1315 = vlaneseq
  %v1316 = vshrl.u32 %v1315, 7
  %v1317 = vsub.s32 0, %v1316
  %v1318 = vrot.slane %v1313, %v1317
  %v1320 = vadd.f32 %v1249, %v1318
  %v1321 = vadd.f32 %v1250, %v1318
  %v1322 = vadd.f32 %v1251, %v1318
  %v1323 = vadd.f32 %v1252, %v1318
  %v1324 = vadd.f32 %v1253, %v1318
  %v1325 = vadd.f32 %v1254, %v1318
  %v1326 = vadd.f32 %v1255, %v1318
  %v1327 = vadd.f32 %v1256, %v1318
  %v1328 = vadd.f32 %v1257, %v1318
  %v1329 = vadd.f32 %v1258, %v1318
  %v1330 = vadd.f32 %v1259, %v1318
  %v1331 = vadd.f32 %v1260, %v1318
  %v1332 = vadd.f32 %v1261, %v1318
  %v1333 = vadd.f32 %v1262, %v1318
  %v1334 = vadd.f32 %v1263, %v1318
  %v1335 = vadd.f32 %v1264, %v1318
  %v1336 = vadd.f32 %v1265, %v1318
  %v1337 = vadd.f32 %v1266, %v1318
  %v1338 = vadd.f32 %v1267, %v1318
  %v1339 = vadd.f32 %v1268, %v1318
  %v1340 = vadd.f32 %v1269, %v1318
  %v1341 = vadd.f32 %v1270, %v1318
  %v1342 = vadd.f32 %v1271, %v1318
  %v1343 = vadd.f32 %v1272, %v1318
  %v1344 = vadd.f32 %v1273, %v1318
  %v1345 = vadd.f32 %v1274, %v1318
  %v1346 = vadd.f32 %v1275, %v1318
  %v1347 = vadd.f32 %v1276, %v1318
  %v1348 = vadd.f32 %v1277, %v1318
  %v1349 = vadd.f32 %v1278, %v1318
  %v1350 = vadd.f32 %v1279, %v1318
  %v1351 = vadd.f32 %v1280, %v1318
  %v1352 = vadd.f32 %v1281, %v1318
  %v1353 = vadd.f32 %v1282, %v1318
  %v1354 = vadd.f32 %v1283, %v1318
  %v1355 = vadd.f32 %v1284, %v1318
  %v1356 = vadd.f32 %v1285, %v1318
  %v1357 = vadd.f32 %v1286, %v1318
  %v1358 = vadd.f32 %v1287, %v1318
  %v1359 = vadd.f32 %v1288, %v1318
  %v1360 = vadd.f32 %v1289, %v1318
  %v1361 = vadd.f32 %v1290, %v1318
  %v1362 = vadd.f32 %v1291, %v1318
  %v1363 = vadd.f32 %v1292, %v1318
  %v1364 = vadd.f32 %v1293, %v1318
  %v1365 = vadd.f32 %v1294, %v1318
  %v1366 = vadd.f32 %v1295, %v1318
  %v1367 = vadd.f32 %v1296, %v1318
  %v1368 = vadd.f32 %v1297, %v1318
  %v1369 = vadd.f32 %v1298, %v1318
  %v1370 = vadd.f32 %v1299, %v1318
  %v1371 = vadd.f32 %v1300, %v1318
  %v1372 = vadd.f32 %v1301, %v1318
  %v1373 = vadd.f32 %v1302, %v1318
  %v1374 = vadd.f32 %v1303, %v1318
  %v1375 = vadd.f32 %v1304, %v1318
  %v1376 = vadd.f32 %v1305, %v1318
  %v1377 = vadd.f32 %v1306, %v1318
  %v1378 = vadd.f32 %v1307, %v1318
  %v1379 = vadd.f32 %v1308, %v1318
  %v1380 = vadd.f32 %v1309, %v1318
  %v1381 = vadd.f32 %v1310, %v1318
  %v1382 = vadd.f32 %v1311, %v1318
  %v1383 = vadd.f32 %v1312, %v1318
  %v1384 = vmax.f32 %v1320, 0.0
  %v1385 = vmax.f32 %v1321, 0.0
  %v1386 = vmax.f32 %v1322, 0.0
  %v1387 = vmax.f32 %v1323, 0.0
  %v1388 = vmax.f32 %v1324, 0.0
  %v1389 = vmax.f32 %v1325, 0.0
  %v1390 = vmax.f32 %v1326, 0.0
  %v1391 = vmax.f32 %v1327, 0.0
  %v1392 = vmax.f32 %v1328, 0.0
  %v1393 = vmax.f32 %v1329, 0.0
  %v1394 = vmax.f32 %v1330, 0.0
  %v1395 = vmax.f32 %v1331, 0.0
  %v1396 = vmax.f32 %v1332, 0.0
  %v1397 = vmax.f32 %v1333, 0.0
  %v1398 = vmax.f32 %v1334, 0.0
  %v1399 = vmax.f32 %v1335, 0.0
  %v1400 = vmax.f32 %v1336, 0.0
  %v1401 = vmax.f32 %v1337, 0.0
  %v1402 = vmax.f32 %v1338, 0.0
  %v1403 = vmax.f32 %v1339, 0.0
  %v1404 = vmax.f32 %v1340, 0.0
  %v1405 = vmax.f32 %v1341, 0.0
  %v1406 = vmax.f32 %v1342, 0.0
  %v1407 = vmax.f32 %v1343, 0.0
  %v1408 = vmax.f32 %v1344, 0.0
  %v1409 = vmax.f32 %v1345, 0.0
  %v1410 = vmax.f32 %v1346, 0.0
  %v1411 = vmax.f32 %v1347, 0.0
  %v1412 = vmax.f32 %v1348, 0.0
  %v1413 = vmax.f32 %v1349, 0.0
  %v1414 = vmax.f32 %v1350, 0.0
  %v1415 = vmax.f32 %v1351, 0.0
  %v1416 = vmax.f32 %v1352, 0.0
  %v1417 = vmax.f32 %v1353, 0.0
  %v1418 = vmax.f32 %v1354, 0.0
  %v1419 = vmax.f32 %v1355, 0.0
  %v1420 = vmax.f32 %v1356, 0.0
  %v1421 = vmax.f32 %v1357, 0.0
  %v1422 = vmax.f32 %v1358, 0.0
  %v1423 = vmax.f32 %v1359, 0.0
  %v1424 = vmax.f32 %v1360, 0.0
  %v1425 = vmax.f32 %v1361, 0.0
  %v1426 = vmax.f32 %v1362, 0.0
  %v1427 = vmax.f32 %v1363, 0.0
  %v1428 = vmax.f32 %v1364, 0.0
  %v1429 = vmax.f32 %v1365, 0.0
  %v1430 = vmax.f32 %v1366, 0.0
  %v1431 = vmax.f32 %v1367, 0.0
  %v1432 = vmax.f32 %v1368, 0.0
  %v1433 = vmax.f32 %v1369, 0.0
  %v1434 = vmax.f32 %v1370, 0.0
  %v1435 = vmax.f32 %v1371, 0.0
  %v1436 = vmax.f32 %v1372, 0.0
  %v1437 = vmax.f32 %v1373, 0.0
  %v1438 = vmax.f32 %v1374, 0.0
  %v1439 = vmax.f32 %v1375, 0.0
  %v1440 = vmax.f32 %v1376, 0.0
  %v1441 = vmax.f32 %v1377, 0.0
  %v1442 = vmax.f32 %v1378, 0.0
  %v1443 = vmax.f32 %v1379, 0.0
  %v1444 = vmax.f32 %v1380, 0.0
  %v1445 = vmax.f32 %v1381, 0.0
  %v1446 = vmax.f32 %v1382, 0.0
  %v1447 = vmax.f32 %v1383, 0.0
  %v1448 = vpack.c.bf16 %v1385, %v1384
  %v1449 = vpack.c.bf16 %v1387, %v1386
  %v1450 = vpack.c.bf16 %v1389, %v1388
  %v1451 = vpack.c.bf16 %v1391, %v1390
  %v1452 = vpack.c.bf16 %v1393, %v1392
  %v1453 = vpack.c.bf16 %v1395, %v1394
  %v1454 = vpack.c.bf16 %v1397, %v1396
  %v1455 = vpack.c.bf16 %v1399, %v1398
  %v1456 = vpack.c.bf16 %v1401, %v1400
  %v1457 = vpack.c.bf16 %v1403, %v1402
  %v1458 = vpack.c.bf16 %v1405, %v1404
  %v1459 = vpack.c.bf16 %v1407, %v1406
  %v1460 = vpack.c.bf16 %v1409, %v1408
  %v1461 = vpack.c.bf16 %v1411, %v1410
  %v1462 = vpack.c.bf16 %v1413, %v1412
  %v1463 = vpack.c.bf16 %v1415, %v1414
  %v1464 = vpack.c.bf16 %v1417, %v1416
  %v1465 = vpack.c.bf16 %v1419, %v1418
  %v1466 = vpack.c.bf16 %v1421, %v1420
  %v1467 = vpack.c.bf16 %v1423, %v1422
  %v1468 = vpack.c.bf16 %v1425, %v1424
  %v1469 = vpack.c.bf16 %v1427, %v1426
  %v1470 = vpack.c.bf16 %v1429, %v1428
  %v1471 = vpack.c.bf16 %v1431, %v1430
  %v1472 = vpack.c.bf16 %v1433, %v1432
  %v1473 = vpack.c.bf16 %v1435, %v1434
  %v1474 = vpack.c.bf16 %v1437, %v1436
  %v1475 = vpack.c.bf16 %v1439, %v1438
  %v1476 = vpack.c.bf16 %v1441, %v1440
  %v1477 = vpack.c.bf16 %v1443, %v1442
  %v1478 = vpack.c.bf16 %v1445, %v1444
  %v1479 = vpack.c.bf16 %v1447, %v1446
  %v1512 = vunpack.c.l.b16 %v1448
  %v1513 = vunpack.c.h.b16 %v1448
  %v1514 = vunpack.c.l.b16 %v1449
  %v1515 = vunpack.c.h.b16 %v1449
  %v1516 = vunpack.c.l.b16 %v1450
  %v1517 = vunpack.c.h.b16 %v1450
  %v1518 = vunpack.c.l.b16 %v1451
  %v1519 = vunpack.c.h.b16 %v1451
  %v1520 = vunpack.c.l.b16 %v1452
  %v1521 = vunpack.c.h.b16 %v1452
  %v1522 = vunpack.c.l.b16 %v1453
  %v1523 = vunpack.c.h.b16 %v1453
  %v1524 = vunpack.c.l.b16 %v1454
  %v1525 = vunpack.c.h.b16 %v1454
  %v1526 = vunpack.c.l.b16 %v1455
  %v1527 = vunpack.c.h.b16 %v1455
  %v1528 = vunpack.c.l.b16 %v1456
  %v1529 = vunpack.c.h.b16 %v1456
  %v1530 = vunpack.c.l.b16 %v1457
  %v1531 = vunpack.c.h.b16 %v1457
  %v1532 = vunpack.c.l.b16 %v1458
  %v1533 = vunpack.c.h.b16 %v1458
  %v1534 = vunpack.c.l.b16 %v1459
  %v1535 = vunpack.c.h.b16 %v1459
  %v1536 = vunpack.c.l.b16 %v1460
  %v1537 = vunpack.c.h.b16 %v1460
  %v1538 = vunpack.c.l.b16 %v1461
  %v1539 = vunpack.c.h.b16 %v1461
  %v1540 = vunpack.c.l.b16 %v1462
  %v1541 = vunpack.c.h.b16 %v1462
  %v1542 = vunpack.c.l.b16 %v1463
  %v1543 = vunpack.c.h.b16 %v1463
  %v1544 = vunpack.c.l.b16 %v1464
  %v1545 = vunpack.c.h.b16 %v1464
  %v1546 = vunpack.c.l.b16 %v1465
  %v1547 = vunpack.c.h.b16 %v1465
  %v1548 = vunpack.c.l.b16 %v1466
  %v1549 = vunpack.c.h.b16 %v1466
  %v1550 = vunpack.c.l.b16 %v1467
  %v1551 = vunpack.c.h.b16 %v1467
  %v1552 = vunpack.c.l.b16 %v1468
  %v1553 = vunpack.c.h.b16 %v1468
  %v1554 = vunpack.c.l.b16 %v1469
  %v1555 = vunpack.c.h.b16 %v1469
  %v1556 = vunpack.c.l.b16 %v1470
  %v1557 = vunpack.c.h.b16 %v1470
  %v1558 = vunpack.c.l.b16 %v1471
  %v1559 = vunpack.c.h.b16 %v1471
  %v1560 = vunpack.c.l.b16 %v1472
  %v1561 = vunpack.c.h.b16 %v1472
  %v1562 = vunpack.c.l.b16 %v1473
  %v1563 = vunpack.c.h.b16 %v1473
  %v1564 = vunpack.c.l.b16 %v1474
  %v1565 = vunpack.c.h.b16 %v1474
  %v1566 = vunpack.c.l.b16 %v1475
  %v1567 = vunpack.c.h.b16 %v1475
  %v1568 = vunpack.c.l.b16 %v1476
  %v1569 = vunpack.c.h.b16 %v1476
  %v1570 = vunpack.c.l.b16 %v1477
  %v1571 = vunpack.c.h.b16 %v1477
  %v1572 = vunpack.c.l.b16 %v1478
  %v1573 = vunpack.c.h.b16 %v1478
  %v1574 = vunpack.c.l.b16 %v1479
  %v1575 = vunpack.c.h.b16 %v1479
  %v1576 = vpack.c.b16 %v1512, %v1512
  %v1577 = vpack.c.b16 %v1513, %v1513
  %v1578 = vpack.c.b16 %v1514, %v1514
  %v1579 = vpack.c.b16 %v1515, %v1515
  %v1580 = vpack.c.b16 %v1516, %v1516
  %v1581 = vpack.c.b16 %v1517, %v1517
  %v1582 = vpack.c.b16 %v1518, %v1518
  %v1583 = vpack.c.b16 %v1519, %v1519
  %v1584 = vpack.c.b16 %v1520, %v1520
  %v1585 = vpack.c.b16 %v1521, %v1521
  %v1586 = vpack.c.b16 %v1522, %v1522
  %v1587 = vpack.c.b16 %v1523, %v1523
  %v1588 = vpack.c.b16 %v1524, %v1524
  %v1589 = vpack.c.b16 %v1525, %v1525
  %v1590 = vpack.c.b16 %v1526, %v1526
  %v1591 = vpack.c.b16 %v1527, %v1527
  %v1592 = vpack.c.b16 %v1528, %v1528
  %v1593 = vpack.c.b16 %v1529, %v1529
  %v1594 = vpack.c.b16 %v1530, %v1530
  %v1595 = vpack.c.b16 %v1531, %v1531
  %v1596 = vpack.c.b16 %v1532, %v1532
  %v1597 = vpack.c.b16 %v1533, %v1533
  %v1598 = vpack.c.b16 %v1534, %v1534
  %v1599 = vpack.c.b16 %v1535, %v1535
  %v1600 = vpack.c.b16 %v1536, %v1536
  %v1601 = vpack.c.b16 %v1537, %v1537
  %v1602 = vpack.c.b16 %v1538, %v1538
  %v1603 = vpack.c.b16 %v1539, %v1539
  %v1604 = vpack.c.b16 %v1540, %v1540
  %v1605 = vpack.c.b16 %v1541, %v1541
  %v1606 = vpack.c.b16 %v1542, %v1542
  %v1607 = vpack.c.b16 %v1543, %v1543
  %v1608 = vpack.c.b16 %v1544, %v1544
  %v1609 = vpack.c.b16 %v1545, %v1545
  %v1610 = vpack.c.b16 %v1546, %v1546
  %v1611 = vpack.c.b16 %v1547, %v1547
  %v1612 = vpack.c.b16 %v1548, %v1548
  %v1613 = vpack.c.b16 %v1549, %v1549
  %v1614 = vpack.c.b16 %v1550, %v1550
  %v1615 = vpack.c.b16 %v1551, %v1551
  %v1616 = vpack.c.b16 %v1552, %v1552
  %v1617 = vpack.c.b16 %v1553, %v1553
  %v1618 = vpack.c.b16 %v1554, %v1554
  %v1619 = vpack.c.b16 %v1555, %v1555
  %v1620 = vpack.c.b16 %v1556, %v1556
  %v1621 = vpack.c.b16 %v1557, %v1557
  %v1622 = vpack.c.b16 %v1558, %v1558
  %v1623 = vpack.c.b16 %v1559, %v1559
  %v1624 = vpack.c.b16 %v1560, %v1560
  %v1625 = vpack.c.b16 %v1561, %v1561
  %v1626 = vpack.c.b16 %v1562, %v1562
  %v1627 = vpack.c.b16 %v1563, %v1563
  %v1628 = vpack.c.b16 %v1564, %v1564
  %v1629 = vpack.c.b16 %v1565, %v1565
  %v1630 = vpack.c.b16 %v1566, %v1566
  %v1631 = vpack.c.b16 %v1567, %v1567
  %v1632 = vpack.c.b16 %v1568, %v1568
  %v1633 = vpack.c.b16 %v1569, %v1569
  %v1634 = vpack.c.b16 %v1570, %v1570
  %v1635 = vpack.c.b16 %v1571, %v1571
  %v1636 = vpack.c.b16 %v1572, %v1572
  %v1637 = vpack.c.b16 %v1573, %v1573
  %v1638 = vpack.c.b16 %v1574, %v1574
  %v1639 = vpack.c.b16 %v1575, %v1575
  %1704 = vst [vmem:[%s6] sm:$0xf] %v1576
  %1705 = vst [vmem:[%s6 + $0x4] sm:$0xf] %v1577
  %1706 = vst [vmem:[%s6 + $0x8] sm:$0xf] %v1578
  %1707 = vst [vmem:[%s6 + $0xc] sm:$0xf] %v1579
  %1708 = vst [vmem:[%s6 + $0x10] sm:$0xf] %v1580
  %1709 = vst [vmem:[%s6 + $0x14] sm:$0xf] %v1581
  %1710 = vst [vmem:[%s6 + $0x18] sm:$0xf] %v1582
  %1711 = vst [vmem:[%s6 + $0x1c] sm:$0xf] %v1583
  %1712 = vst [vmem:[%s6 + $0x20] sm:$0xf] %v1584
  %1713 = vst [vmem:[%s6 + $0x24] sm:$0xf] %v1585
  %1714 = vst [vmem:[%s6 + $0x28] sm:$0xf] %v1586
  %1715 = vst [vmem:[%s6 + $0x2c] sm:$0xf] %v1587
  %1716 = vst [vmem:[%s6 + $0x30] sm:$0xf] %v1588
  %1717 = vst [vmem:[%s6 + $0x34] sm:$0xf] %v1589
  %1718 = vst [vmem:[%s6 + $0x38] sm:$0xf] %v1590
  %1719 = vst [vmem:[%s6 + $0x3c] sm:$0xf] %v1591
  %1720 = vst [vmem:[%s6 + $0x40] sm:$0xf] %v1592
  %1721 = vst [vmem:[%s6 + $0x44] sm:$0xf] %v1593
  %1722 = vst [vmem:[%s6 + $0x48] sm:$0xf] %v1594
  %1723 = vst [vmem:[%s6 + $0x4c] sm:$0xf] %v1595
  %1724 = vst [vmem:[%s6 + $0x50] sm:$0xf] %v1596
  %1725 = vst [vmem:[%s6 + $0x54] sm:$0xf] %v1597
  %1726 = vst [vmem:[%s6 + $0x58] sm:$0xf] %v1598
  %1727 = vst [vmem:[%s6 + $0x5c] sm:$0xf] %v1599
  %1728 = vst [vmem:[%s6 + $0x60] sm:$0xf] %v1600
  %1729 = vst [vmem:[%s6 + $0x64] sm:$0xf] %v1601
  %1730 = vst [vmem:[%s6 + $0x68] sm:$0xf] %v1602
  %1731 = vst [vmem:[%s6 + $0x6c] sm:$0xf] %v1603
  %1732 = vst [vmem:[%s6 + $0x70] sm:$0xf] %v1604
  %1733 = vst [vmem:[%s6 + $0x74] sm:$0xf] %v1605
  %1734 = vst [vmem:[%s6 + $0x78] sm:$0xf] %v1606
  %1735 = vst [vmem:[%s6 + $0x7c] sm:$0xf] %v1607
  %1736 = vst [vmem:[%s6 + $0x80] sm:$0xf] %v1608
  %1737 = vst [vmem:[%s6 + $0x84] sm:$0xf] %v1609
  %1738 = vst [vmem:[%s6 + $0x88] sm:$0xf] %v1610
  %1739 = vst [vmem:[%s6 + $0x8c] sm:$0xf] %v1611
  %1740 = vst [vmem:[%s6 + $0x90] sm:$0xf] %v1612
  %1741 = vst [vmem:[%s6 + $0x94] sm:$0xf] %v1613
  %1742 = vst [vmem:[%s6 + $0x98] sm:$0xf] %v1614
  %1743 = vst [vmem:[%s6 + $0x9c] sm:$0xf] %v1615
  %1744 = vst [vmem:[%s6 + $0xa0] sm:$0xf] %v1616
  %1745 = vst [vmem:[%s6 + $0xa4] sm:$0xf] %v1617
  %1746 = vst [vmem:[%s6 + $0xa8] sm:$0xf] %v1618
  %1747 = vst [vmem:[%s6 + $0xac] sm:$0xf] %v1619
  %1748 = vst [vmem:[%s6 + $0xb0] sm:$0xf] %v1620
  %1749 = vst [vmem:[%s6 + $0xb4] sm:$0xf] %v1621
  %1750 = vst [vmem:[%s6 + $0xb8] sm:$0xf] %v1622
  %1751 = vst [vmem:[%s6 + $0xbc] sm:$0xf] %v1623
  %1752 = vst [vmem:[%s6 + $0xc0] sm:$0xf] %v1624
  %1753 = vst [vmem:[%s6 + $0xc4] sm:$0xf] %v1625
  %1754 = vst [vmem:[%s6 + $0xc8] sm:$0xf] %v1626
  %1755 = vst [vmem:[%s6 + $0xcc] sm:$0xf] %v1627
  %1756 = vst [vmem:[%s6 + $0xd0] sm:$0xf] %v1628
  %1757 = vst [vmem:[%s6 + $0xd4] sm:$0xf] %v1629
  %1758 = vst [vmem:[%s6 + $0xd8] sm:$0xf] %v1630
  %1759 = vst [vmem:[%s6 + $0xdc] sm:$0xf] %v1631
  %1760 = vst [vmem:[%s6 + $0xe0] sm:$0xf] %v1632
  %1761 = vst [vmem:[%s6 + $0xe4] sm:$0xf] %v1633
  %1762 = vst [vmem:[%s6 + $0xe8] sm:$0xf] %v1634
  %1763 = vst [vmem:[%s6 + $0xec] sm:$0xf] %v1635
  %1764 = vst [vmem:[%s6 + $0xf0] sm:$0xf] %v1636
  %1765 = vst [vmem:[%s6 + $0xf4] sm:$0xf] %v1637
  %1766 = vst [vmem:[%s6 + $0xf8] sm:$0xf] %v1638
  %1767 = vst [vmem:[%s6 + $0xfc] sm:$0xf] %v1639
  // Predicated region
  $region26: #{bottleneck_forward.5} parent=0 // pred_check
    _
  $region27: #{bottleneck_forward.5} parent=0 // pred_check_branch
    %1769 = sbr.rel (0) target = $region29
  $region28: #{bottleneck_forward.5} parent=0 // pred_region
    _
  $region29: #{bottleneck_forward.5} parent=0 // pred_fallthru
    _
  // Predicated region
  $region30: #{bottleneck_forward.5} parent=0 // pred_check
    _
  $region31: #{bottleneck_forward.5} parent=0 // pred_check_branch
    %1771 = sbr.rel (0) target = $region33
  $region32: #{bottleneck_forward.5} parent=0 // pred_region
    _
  $region33: #{bottleneck_forward.5} parent=0 // pred_fallthru
    _

// kernel: bottleneck_forward.4
$region0: #{bottleneck_forward.4}
  #allocation0 [shape = 'u32[]', space=smem, size = 0x4, offset = 0x4, fixed_abs, tag = 'smem constant byte address 0x4 - core index']
  #allocation1 [shape = 'u32[144,128]{1,0:T(1,128)}', space=vmem, size = 0x12000, scoped, tag = 'internal scratch']
  %s0 = inlined_call_operand.vmem [shape: bf16[2,342,128], index: 0, kind: input, shape index: {}]
  %s1 = inlined_call_operand.vmem [shape: bf16[1152,128], index: 1, kind: input, shape index: {}]
  %s2 = inlined_call_operand.vmem [shape: f32[1,128], index: 2, kind: input, shape index: {}]
  %s3 = inlined_call_operand.vmem [shape: bf16[2,16,16,128], index: 3, kind: output, shape index: {}]
  %s4 = sld [smem:[#allocation0]]
  $region45: #{bottleneck_forward.4} parent=0
    _
  %s6 = ssub.s32 1, %s4
  %s7 = scalar_select 0, %s6, %s4
  loop: start=0, step=1, limit=4
  $region2: #{bottleneck_forward.4} parent=0 // loop_pre_header
    _
  $region3: #{bottleneck_forward.4} parent=0 // loop_header
    %s9 = sphi 0, %s13
    %p10 = scmp.ge.s32.totalorder %s9, 4
    %s16 = sphi 0, %s28
    %s17 = sphi 0, %s24
    %s18 = sphi 0, %s16
    %s19 = sphi 0, %s17
    %s20 = sphi 0, %s18
    %s21 = sphi 0, %s19
    %s31 = sphi 0, %s33
    %s34 = sphi 0, %s31
    %s35 = sphi 0, %s34
    %s51 = sphi 0, %s35
    %s55 = sphi 0, %s55
    %s57 = sphi 0, %s55
    %s58 = sphi 0, %s57
    %s72 = sphi 0, %s58
    %s76 = sphi 0, %s76
    %s78 = sphi 0, %s76
    %s79 = sphi 0, %s78
    %s93 = sphi 0, %s79
    %s101 = sphi 0, %s103
    %s104 = sphi 0, %s101
    %s105 = sphi 0, %s104
    %s121 = sphi 0, %s105
  $region4: #{bottleneck_forward.4} parent=0 // loop_header_branch
    %12 = sbr.rel (%p10) target = $region8
  $region5: #{bottleneck_forward.4} parent=0 // loop_body
    %s14 = ssub.s32 %s9, 1
    %s15 = ssub.s32 %s9, 2
    %s22 = sadd.s32 1, %s17
    %p23 = scmp.ge.s32.totalorder %s22, 1
    %s24 = scalar_select %p23, 0, %s22
    %s25 = sadd.s32 1, %s16
    %s26 = scalar_select %p23, %s25, %s16
    %p27 = scmp.ge.s32.totalorder %s26, 2
    %s28 = scalar_select %p27, 0, %s26
    %s29 = ssub.s32 %s16, %s28
    %p30 = scmp.eq.s32.totalorder %s29, 0
    %s32 = sadd.s32 %s31, 1
    %s33 = scalar_select %p30, %s31, %s32
    %p36 = pneg %p30
    %p37 = scmp.eq.s32.totalorder %s9, 1
    %p38 = por %p36, %p37
    %p39 = scmp.ne.s32.totalorder %s31, %s34
    %p40 = scmp.eq.s32.totalorder %s9, 0
    %p41 = por %p39, %p40
    %p42 = scmp.ne.s32.totalorder %s31, %s34
    %p43 = scmp.eq.s32.totalorder %s14, 1
    %p44 = por %p42, %p43
    %p45 = scmp.ne.s32.totalorder %s34, %s35
    %p46 = scmp.eq.s32.totalorder %s14, 0
    %p47 = por %p45, %p46
    %p48 = scmp.ne.s32.totalorder %s34, %s35
    %p49 = scmp.eq.s32.totalorder %s15, 1
    %p50 = por %p48, %p49
    %p52 = scmp.ne.s32.totalorder %s35, %s51
    %p53 = scmp.eq.s32.totalorder %s15, 0
    %p54 = por %p52, %p53
    %s56 = sadd.s32 %s55, 1
    %p59 = scmp.eq.s32.totalorder %s9, 1
    %p60 = scmp.ne.s32.totalorder %s55, %s57
    %p61 = scmp.eq.s32.totalorder %s9, 0
    %p62 = por %p60, %p61
    %p63 = scmp.ne.s32.totalorder %s55, %s57
    %p64 = scmp.eq.s32.totalorder %s14, 1
    %p65 = por %p63, %p64
    %p66 = scmp.ne.s32.totalorder %s57, %s58
    %p67 = scmp.eq.s32.totalorder %s14, 0
    %p68 = por %p66, %p67
    %p69 = scmp.ne.s32.totalorder %s57, %s58
    %p70 = scmp.eq.s32.totalorder %s15, 1
    %p71 = por %p69, %p70
    %p73 = scmp.ne.s32.totalorder %s58, %s72
    %p74 = scmp.eq.s32.totalorder %s15, 0
    %p75 = por %p73, %p74
    %s77 = sadd.s32 %s76, 1
    %p80 = scmp.eq.s32.totalorder %s9, 1
    %p81 = scmp.ne.s32.totalorder %s76, %s78
    %p82 = scmp.eq.s32.totalorder %s9, 0
    %p83 = por %p81, %p82
    %p84 = scmp.ne.s32.totalorder %s76, %s78
    %p85 = scmp.eq.s32.totalorder %s14, 1
    %p86 = por %p84, %p85
    %p87 = scmp.ne.s32.totalorder %s78, %s79
    %p88 = scmp.eq.s32.totalorder %s14, 0
    %p89 = por %p87, %p88
    %p90 = scmp.ne.s32.totalorder %s78, %s79
    %p91 = scmp.eq.s32.totalorder %s15, 1
    %p92 = por %p90, %p91
    %p94 = scmp.ne.s32.totalorder %s79, %s93
    %p95 = scmp.eq.s32.totalorder %s15, 0
    %p96 = por %p94, %p95
    %s97 = ssub.s32 %s16, %s28
    %s98 = ssub.s32 %s17, %s24
    %s99 = sor.u32 %s97, %s98
    %p100 = scmp.eq.s32.totalorder %s99, 0
    %s102 = sadd.s32 %s101, 1
    %s103 = scalar_select %p100, %s101, %s102
    %p106 = pneg %p100
    %p107 = scmp.eq.s32.totalorder %s9, 1
    %p108 = por %p106, %p107
    %p109 = scmp.ne.s32.totalorder %s101, %s104
    %p110 = scmp.eq.s32.totalorder %s9, 0
    %p111 = por %p109, %p110
    %p112 = scmp.ne.s32.totalorder %s101, %s104
    %p113 = scmp.eq.s32.totalorder %s14, 1
    %p114 = por %p112, %p113
    %p115 = scmp.ne.s32.totalorder %s104, %s105
    %p116 = scmp.eq.s32.totalorder %s14, 0
    %p117 = por %p115, %p116
    %p118 = scmp.ne.s32.totalorder %s104, %s105
    %p119 = scmp.eq.s32.totalorder %s15, 1
    %p120 = por %p118, %p119
    %p122 = scmp.ne.s32.totalorder %s105, %s121
    %p123 = scmp.eq.s32.totalorder %s15, 0
    %p124 = por %p122, %p123
    %p125 = scmp.le.s32.totalorder 1, %s9
    %p126 = scmp.lt.s32.totalorder %s9, 3
    %p127 = pnand %p125, %p126
    %p128 = pneg %p127
    // Predicated region
    $region9: #{bottleneck_forward.4} parent=5 // pred_check
      _
    $region10: #{bottleneck_forward.4} parent=5 // pred_check_branch
      %130 = sbr.rel (%p127) target = $region12
    $region11: #{bottleneck_forward.4} parent=5 // pred_region
      %s131 = ssub.s32 %s9, 1
      // Predicated region
      $region13: #{bottleneck_forward.4} parent=11 // pred_check
        %p132 = pneg %p68
      $region14: #{bottleneck_forward.4} parent=11 // pred_check_branch
        %134 = sbr.rel (%p132) target = $region16
      $region15: #{bottleneck_forward.4} parent=11 // pred_region
        _
      $region16: #{bottleneck_forward.4} parent=11 // pred_fallthru
        _
      // Predicated region
      $region17: #{bottleneck_forward.4} parent=11 // pred_check
        %p135 = pneg %p89
      $region18: #{bottleneck_forward.4} parent=11 // pred_check_branch
        %137 = sbr.rel (%p135) target = $region20
      $region19: #{bottleneck_forward.4} parent=11 // pred_region
        _
      $region20: #{bottleneck_forward.4} parent=11 // pred_fallthru
        _
    $region12: #{bottleneck_forward.4} parent=5 // pred_fallthru
      _
    %p138 = scmp.lt.s32.totalorder %s9, 2
    // Predicated region
    $region21: #{bottleneck_forward.4} parent=5 // pred_check
      %p139 = pneg %p138
    $region22: #{bottleneck_forward.4} parent=5 // pred_check_branch
      %141 = sbr.rel (%p139) target = $region24
    $region23: #{bottleneck_forward.4} parent=5 // pred_region
      // Predicated region
      $region25: #{bottleneck_forward.4} parent=23 // pred_check
        %p142 = pneg %p41
      $region26: #{bottleneck_forward.4} parent=23 // pred_check_branch
        %144 = sbr.rel (%p142) target = $region28
      $region27: #{bottleneck_forward.4} parent=23 // pred_region
        %p145 = scmp.lt.s32.totalorder %s16, 1
        %s146 = scalar_select %p145, %s16, 1
        %s147 = smul.addr %s146, 43
        %s148 = smul.addr %s147, 4
        %s149 = scalar_lea.vmem %s0, %s148
      $region28: #{bottleneck_forward.4} parent=23 // pred_fallthru
        _
    $region24: #{bottleneck_forward.4} parent=5 // pred_fallthru
      _
    %p150 = scmp.le.s32.totalorder 1, %s9
    %p151 = scmp.lt.s32.totalorder %s9, 3
    %p152 = pnand %p150, %p151
    %p153 = pneg %p152
    // Predicated region
    $region29: #{bottleneck_forward.4} parent=5 // pred_check
      _
    $region30: #{bottleneck_forward.4} parent=5 // pred_check_branch
      %155 = sbr.rel (%p152) target = $region32
    $region31: #{bottleneck_forward.4} parent=5 // pred_region
      %s156 = ssub.s32 %s9, 1
      %p157 = scmp.lt.s32.totalorder %s18, 1
      %s158 = scalar_select %p157, %s18, 1
      %s159 = smul.addr %s158, 43
      %s160 = smul.addr %s159, 4
      %s161 = scalar_lea.vmem %s0, %s160
      %p162 = pneg %p47
      %p163 = pneg %p44
      %p164 = pneg %p68
      %p165 = pneg %p65
      %p166 = pneg %p89
      %p167 = pneg %p86
      %p168 = pneg %p117
      %p169 = pneg %p114
      %s170 = smul.u32 16, %s19
      %p171 = scmp.lt.s32.totalorder %s18, 1
      %s172 = scalar_select %p171, %s18, 1
      %p173 = scmp.lt.s32.totalorder %s170, 15
      %s174 = scalar_select %p173, %s170, 15
      %s175 = smul.addr %s174, 2
      %s176 = smul.addr %s172, 32
      %s177 = sadd.s32 %s175, %s176
      %s178 = smul.addr %s177, 4
      %s179 = scalar_lea.vmem %s3, %s178
      %p180 = scmp.lt.s32.totalorder %s18, 1
      %s181 = scalar_select %p180, %s18, 1
      %s182 = smul.addr %s181, 43
      %s183 = smul.addr %s182, 4
      %s184 = scalar_lea.vmem %s0, %s183
      %s185 = smul.u32 16, %s19
      %p186 = scmp.lt.s32.totalorder %s18, 1
      %s187 = scalar_select %p186, %s18, 1
      %p188 = scmp.lt.s32.totalorder %s185, 15
      %s189 = scalar_select %p188, %s185, 15
      %s190 = smul.addr %s189, 2
      %s191 = smul.addr %s187, 32
      %s192 = sadd.s32 %s190, %s191
      %s193 = smul.addr %s192, 4
      %s194 = scalar_lea.vmem %s3, %s193
      %s195 = smul.u32 16, %s19
      %v197 = vld [vmem:[%s184] sm:$0xf]
      %v198 = vld [vmem:[%s184 + $0x4] sm:$0xf]
      %v199 = vld [vmem:[%s184 + $0x8] sm:$0xf]
      %v200 = vld [vmem:[%s184 + $0xc] sm:$0xf]
      %v201 = vld [vmem:[%s184 + $0x10] sm:$0xf]
      %v202 = vld [vmem:[%s184 + $0x14] sm:$0xf]
      %v203 = vld [vmem:[%s184 + $0x18] sm:$0xf]
      %v204 = vld [vmem:[%s184 + $0x1c] sm:$0xf]
      %v205 = vld [vmem:[%s184 + $0x20] sm:$0xf]
      %v206 = vld [vmem:[%s184 + $0x24] sm:$0xf]
      %v207 = vld [vmem:[%s184 + $0x28] sm:$0xf]
      %v208 = vld [vmem:[%s184 + $0x2c] sm:$0xf]
      %v209 = vld [vmem:[%s184 + $0x30] sm:$0xf]
      %v210 = vld [vmem:[%s184 + $0x34] sm:$0xf]
      %v211 = vld [vmem:[%s184 + $0x38] sm:$0xf]
      %v212 = vld [vmem:[%s184 + $0x3c] sm:$0xf]
      %v213 = vld [vmem:[%s184 + $0x40] sm:$0xf]
      %v214 = vld [vmem:[%s184 + $0x44] sm:$0xf]
      %v215 = vld [vmem:[%s184 + $0x48] sm:$0xf]
      %v216 = vld [vmem:[%s184 + $0x4c] sm:$0xf]
      %v217 = vld [vmem:[%s184 + $0x50] sm:$0xf]
      %v218 = vld [vmem:[%s184 + $0x54] sm:$0xf]
      %v219 = vld [vmem:[%s184 + $0x58] sm:$0xf]
      %v220 = vld [vmem:[%s184 + $0x5c] sm:$0xf]
      %v221 = vld [vmem:[%s184 + $0x60] sm:$0xf]
      %v222 = vld [vmem:[%s184 + $0x64] sm:$0xf]
      %v223 = vld [vmem:[%s184 + $0x68] sm:$0xf]
      %v224 = vld [vmem:[%s184 + $0x6c] sm:$0xf]
      %v225 = vld [vmem:[%s184 + $0x70] sm:$0xf]
      %v226 = vld [vmem:[%s184 + $0x74] sm:$0xf]
      %v227 = vld [vmem:[%s184 + $0x78] sm:$0xf]
      %v228 = vld [vmem:[%s184 + $0x7c] sm:$0xf]
      %v229 = vld [vmem:[%s184 + $0x80] sm:$0xf]
      %v230 = vld [vmem:[%s184 + $0x84] sm:$0xf]
      %v231 = vld [vmem:[%s184 + $0x88] sm:$0xf]
      %v232 = vld [vmem:[%s184 + $0x8c] sm:$0xf]
      %v233 = vld [vmem:[%s184 + $0x90] sm:$0x1]
      %v234 = vld [vmem:[%s184] sm:$0xe]
      %v235 = vld [vmem:[%s184 + $0x8] sm:$0xe]
      %v236 = vld [vmem:[%s184 + $0x90] sm:$0xf]
      %v237 = vld [vmem:[%s184 + $0x94] sm:$0xf]
      %v238 = vld [vmem:[%s184 + $0x98] sm:$0x1]
      %v239 = vld [vmem:[%s184 + $0x98] sm:$0x3]
      %v240 = vld [vmem:[%s184 + $0x8] sm:$0xc]
      %v241 = vld [vmem:[%s184 + $0x10] sm:$0xc]
      %v242 = vld [vmem:[%s184 + $0x98] sm:$0xf]
      %v243 = vld [vmem:[%s184 + $0x9c] sm:$0xf]
      %v244 = vld [vmem:[%s184 + $0xa0] sm:$0x3]
      %v245 = vld [vmem:[%s184 + $0xa0] sm:$0x7]
      %v246 = vld [vmem:[%s184 + $0x10] sm:$0x8]
      %v283 = vunpack.c.l.b16 %v197
      %v284 = vunpack.c.l.b16 %v198
      %v285 = vunpack.c.l.b16 %v199
      %v286 = vunpack.c.l.b16 %v200
      %v287 = vunpack.c.l.b16 %v201
      %v288 = vunpack.c.l.b16 %v202
      %v289 = vunpack.c.l.b16 %v203
      %v290 = vunpack.c.l.b16 %v204
      %v291 = vunpack.c.l.b16 %v205
      %v292 = vunpack.c.l.b16 %v206
      %v293 = vunpack.c.l.b16 %v207
      %v294 = vunpack.c.l.b16 %v208
      %v295 = vunpack.c.l.b16 %v209
      %v296 = vunpack.c.l.b16 %v210
      %v297 = vunpack.c.l.b16 %v211
      %v298 = vunpack.c.l.b16 %v212
      %v299 = vunpack.c.l.b16 %v213
      %v300 = vunpack.c.l.b16 %v214
      %v301 = vunpack.c.l.b16 %v215
      %v302 = vunpack.c.l.b16 %v216
      %v303 = vunpack.c.l.b16 %v217
      %v304 = vunpack.c.l.b16 %v218
      %v305 = vunpack.c.l.b16 %v219
      %v306 = vunpack.c.l.b16 %v220
      %v307 = vunpack.c.l.b16 %v221
      %v308 = vunpack.c.l.b16 %v222
      %v309 = vunpack.c.l.b16 %v223
      %v310 = vunpack.c.l.b16 %v224
      %v311 = vunpack.c.l.b16 %v225
      %v312 = vunpack.c.l.b16 %v226
      %v313 = vunpack.c.l.b16 %v227
      %v314 = vunpack.c.l.b16 %v228
      %v315 = vunpack.c.l.b16 %v229
      %v316 = vunpack.c.l.b16 %v230
      %v317 = vunpack.c.l.b16 %v231
      %v318 = vunpack.c.l.b16 %v232
      %v319 = vpack.c.b16 %v284, %v283
      %v320 = vpack.c.b16 %v286, %v285
      %v321 = vpack.c.b16 %v288, %v287
      %v322 = vpack.c.b16 %v290, %v289
      %v323 = vpack.c.b16 %v292, %v291
      %v324 = vpack.c.b16 %v294, %v293
      %v325 = vpack.c.b16 %v296, %v295
      %v326 = vpack.c.b16 %v298, %v297
      %v327 = vpack.c.b16 %v300, %v299
      %v328 = vpack.c.b16 %v302, %v301
      %v329 = vpack.c.b16 %v304, %v303
      %v330 = vpack.c.b16 %v306, %v305
      %v331 = vpack.c.b16 %v308, %v307
      %v332 = vpack.c.b16 %v310, %v309
      %v333 = vpack.c.b16 %v312, %v311
      %v334 = vpack.c.b16 %v314, %v313
      %v335 = vpack.c.b16 %v316, %v315
      %v336 = vpack.c.b16 %v318, %v317
      %v356 = vunpack.c.l.b16 %v233
      %v357 = vpack.c.b16 %v356, %v356
      %vm358 = vsmask.f32 7424
      %v360 = vshrl.u32 %v319, 16
      %v362 = vshll.u32 %v319, 16
      %v364 = vrot.slane %v362, 1
      %v365 = vor.u32 %v360, %v364
      %v367 = vshll.u32 %v320, 16
      %v369 = vrot.slane %v367, 1
      %v370 = vsel %vm358, %v365, %v369
      %v371 = vshrl.u32 %v320, 16
      %v373 = vor.u32 %v371, %v369
      %v375 = vshll.u32 %v321, 16
      %v377 = vrot.slane %v375, 1
      %v378 = vsel %vm358, %v373, %v377
      %v379 = vshrl.u32 %v321, 16
      %v381 = vor.u32 %v379, %v377
      %v383 = vshll.u32 %v322, 16
      %v385 = vrot.slane %v383, 1
      %v386 = vsel %vm358, %v381, %v385
      %v387 = vshrl.u32 %v322, 16
      %v389 = vor.u32 %v387, %v385
      %v391 = vshll.u32 %v323, 16
      %v393 = vrot.slane %v391, 1
      %v394 = vsel %vm358, %v389, %v393
      %v395 = vshrl.u32 %v323, 16
      %v397 = vor.u32 %v395, %v393
      %v399 = vshll.u32 %v324, 16
      %v401 = vrot.slane %v399, 1
      %v402 = vsel %vm358, %v397, %v401
      %v403 = vshrl.u32 %v324, 16
      %v405 = vor.u32 %v403, %v401
      %v407 = vshll.u32 %v325, 16
      %v409 = vrot.slane %v407, 1
      %v410 = vsel %vm358, %v405, %v409
      %v411 = vshrl.u32 %v325, 16
      %v413 = vor.u32 %v411, %v409
      %v415 = vshll.u32 %v326, 16
      %v417 = vrot.slane %v415, 1
      %v418 = vsel %vm358, %v413, %v417
      %v419 = vshrl.u32 %v326, 16
      %v421 = vor.u32 %v419, %v417
      %v423 = vshll.u32 %v327, 16
      %v425 = vrot.slane %v423, 1
      %v426 = vsel %vm358, %v421, %v425
      %v427 = vshrl.u32 %v327, 16
      %v429 = vor.u32 %v427, %v425
      %v431 = vshll.u32 %v328, 16
      %v433 = vrot.slane %v431, 1
      %v434 = vsel %vm358, %v429, %v433
      %v435 = vshrl.u32 %v328, 16
      %v437 = vor.u32 %v435, %v433
      %v439 = vshll.u32 %v329, 16
      %v441 = vrot.slane %v439, 1
      %v442 = vsel %vm358, %v437, %v441
      %v443 = vshrl.u32 %v329, 16
      %v445 = vor.u32 %v443, %v441
      %v447 = vshll.u32 %v330, 16
      %v449 = vrot.slane %v447, 1
      %v450 = vsel %vm358, %v445, %v449
      %v451 = vshrl.u32 %v330, 16
      %v453 = vor.u32 %v451, %v449
      %v455 = vshll.u32 %v331, 16
      %v457 = vrot.slane %v455, 1
      %v458 = vsel %vm358, %v453, %v457
      %v459 = vshrl.u32 %v331, 16
      %v461 = vor.u32 %v459, %v457
      %v463 = vshll.u32 %v332, 16
      %v465 = vrot.slane %v463, 1
      %v466 = vsel %vm358, %v461, %v465
      %v467 = vshrl.u32 %v332, 16
      %v469 = vor.u32 %v467, %v465
      %v471 = vshll.u32 %v333, 16
      %v473 = vrot.slane %v471, 1
      %v474 = vsel %vm358, %v469, %v473
      %v475 = vshrl.u32 %v333, 16
      %v477 = vor.u32 %v475, %v473
      %v479 = vshll.u32 %v334, 16
      %v481 = vrot.slane %v479, 1
      %v482 = vsel %vm358, %v477, %v481
      %v483 = vshrl.u32 %v334, 16
      %v485 = vor.u32 %v483, %v481
      %v487 = vshll.u32 %v335, 16
      %v489 = vrot.slane %v487, 1
      %v490 = vsel %vm358, %v485, %v489
      %v491 = vshrl.u32 %v335, 16
      %v493 = vor.u32 %v491, %v489
      %v495 = vshll.u32 %v336, 16
      %v497 = vrot.slane %v495, 1
      %v498 = vsel %vm358, %v493, %v497
      %v499 = vshrl.u32 %v336, 16
      %v501 = vor.u32 %v499, %v497
      %v503 = vshll.u32 %v357, 16
      %v505 = vrot.slane %v503, 1
      %v506 = vsel %vm358, %v501, %v505
      %v526 = vunpack.c.l.b16 %v234
      %v527 = vpack.c.b16 %v284, %v526
      %vm528 = vcmask 1046528
      %v529 = vrot.slane %v527, 1
      %v530 = vrot.slane %v320, 1
      %v531 = vsel %vm528, %v529, %v530
      %v532 = vrot.slane %v321, 1
      %v533 = vsel %vm528, %v530, %v532
      %v534 = vrot.slane %v322, 1
      %v535 = vsel %vm528, %v532, %v534
      %v536 = vrot.slane %v323, 1
      %v537 = vsel %vm528, %v534, %v536
      %v538 = vrot.slane %v324, 1
      %v539 = vsel %vm528, %v536, %v538
      %v540 = vrot.slane %v325, 1
      %v541 = vsel %vm528, %v538, %v540
      %v542 = vrot.slane %v326, 1
      %v543 = vsel %vm528, %v540, %v542
      %v544 = vrot.slane %v327, 1
      %v545 = vsel %vm528, %v542, %v544
      %v546 = vrot.slane %v328, 1
      %v547 = vsel %vm528, %v544, %v546
      %v548 = vrot.slane %v329, 1
      %v549 = vsel %vm528, %v546, %v548
      %v550 = vrot.slane %v330, 1
      %v551 = vsel %vm528, %v548, %v550
      %v552 = vrot.slane %v331, 1
      %v553 = vsel %vm528, %v550, %v552
      %v554 = vrot.slane %v332, 1
      %v555 = vsel %vm528, %v552, %v554
      %v556 = vrot.slane %v333, 1
      %v557 = vsel %vm528, %v554, %v556
      %v558 = vrot.slane %v334, 1
      %v559 = vsel %vm528, %v556, %v558
      %v560 = vrot.slane %v335, 1
      %v561 = vsel %vm528, %v558, %v560
      %v562 = vrot.slane %v336, 1
      %v563 = vsel %vm528, %v560, %v562
      %v564 = vrot.slane %v357, 1
      %v565 = vsel %vm528, %v562, %v564
      %v588 = vunpack.c.l.b16 %v235
      %v589 = vunpack.c.l.b16 %v236
      %v590 = vunpack.c.l.b16 %v237
      %v591 = vunpack.c.l.b16 %v238
      %v592 = vpack.c.b16 %v286, %v588
      %v593 = vpack.c.b16 %v590, %v589
      %v594 = vpack.c.b16 %v591, %v591
      %v595 = vrot.slane %v592, 1
      %v596 = vsel %vm528, %v595, %v532
      %v597 = vrot.slane %v593, 1
      %v598 = vsel %vm528, %v562, %v597
      %v599 = vrot.slane %v594, 1
      %v600 = vsel %vm528, %v597, %v599
      %v605 = vunpack.c.l.b16 %v239
      %v606 = vpack.c.b16 %v605, %v605
      %vm607 = vsmask.f32 6400
      %v609 = vshrl.u32 %v592, 16
      %v611 = vrot.slane %v609, 1
      %v612 = vshll.u32 %v592, 16
      %v614 = vrot.slane %v612, 2
      %v615 = vor.u32 %v611, %v614
      %v616 = vrot.slane %v379, 1
      %v617 = vrot.slane %v375, 2
      %v618 = vor.u32 %v616, %v617
      %v619 = vsel %vm607, %v615, %v618
      %v620 = vrot.slane %v387, 1
      %v621 = vrot.slane %v383, 2
      %v622 = vor.u32 %v620, %v621
      %v623 = vsel %vm607, %v618, %v622
      %v624 = vrot.slane %v395, 1
      %v625 = vrot.slane %v391, 2
      %v626 = vor.u32 %v624, %v625
      %v627 = vsel %vm607, %v622, %v626
      %v628 = vrot.slane %v403, 1
      %v629 = vrot.slane %v399, 2
      %v630 = vor.u32 %v628, %v629
      %v631 = vsel %vm607, %v626, %v630
      %v632 = vrot.slane %v411, 1
      %v633 = vrot.slane %v407, 2
      %v634 = vor.u32 %v632, %v633
      %v635 = vsel %vm607, %v630, %v634
      %v636 = vrot.slane %v419, 1
      %v637 = vrot.slane %v415, 2
      %v638 = vor.u32 %v636, %v637
      %v639 = vsel %vm607, %v634, %v638
      %v640 = vrot.slane %v427, 1
      %v641 = vrot.slane %v423, 2
      %v642 = vor.u32 %v640, %v641
      %v643 = vsel %vm607, %v638, %v642
      %v644 = vrot.slane %v435, 1
      %v645 = vrot.slane %v431, 2
      %v646 = vor.u32 %v644, %v645
      %v647 = vsel %vm607, %v642, %v646
      %v648 = vrot.slane %v443, 1
      %v649 = vrot.slane %v439, 2
      %v650 = vor.u32 %v648, %v649
      %v651 = vsel %vm607, %v646, %v650
      %v652 = vrot.slane %v451, 1
      %v653 = vrot.slane %v447, 2
      %v654 = vor.u32 %v652, %v653
      %v655 = vsel %vm607, %v650, %v654
      %v656 = vrot.slane %v459, 1
      %v657 = vrot.slane %v455, 2
      %v658 = vor.u32 %v656, %v657
      %v659 = vsel %vm607, %v654, %v658
      %v660 = vrot.slane %v467, 1
      %v661 = vrot.slane %v463, 2
      %v662 = vor.u32 %v660, %v661
      %v663 = vsel %vm607, %v658, %v662
      %v664 = vrot.slane %v475, 1
      %v665 = vrot.slane %v471, 2
      %v666 = vor.u32 %v664, %v665
      %v667 = vsel %vm607, %v662, %v666
      %v668 = vrot.slane %v483, 1
      %v669 = vrot.slane %v479, 2
      %v670 = vor.u32 %v668, %v669
      %v671 = vsel %vm607, %v666, %v670
      %v672 = vrot.slane %v491, 1
      %v673 = vrot.slane %v487, 2
      %v674 = vor.u32 %v672, %v673
      %v675 = vsel %vm607, %v670, %v674
      %v676 = vrot.slane %v499, 1
      %v677 = vrot.slane %v495, 2
      %v678 = vor.u32 %v676, %v677
      %v679 = vsel %vm607, %v674, %v678
      %v681 = vshrl.u32 %v593, 16
      %v683 = vrot.slane %v681, 1
      %v684 = vshll.u32 %v593, 16
      %v686 = vrot.slane %v684, 2
      %v687 = vor.u32 %v683, %v686
      %v688 = vsel %vm607, %v678, %v687
      %v690 = vshrl.u32 %v606, 16
      %v692 = vrot.slane %v690, 1
      %v693 = vshll.u32 %v606, 16
      %v695 = vrot.slane %v693, 2
      %v696 = vor.u32 %v692, %v695
      %v697 = vsel %vm607, %v687, %v696
      %v717 = vunpack.c.l.b16 %v240
      %v718 = vpack.c.b16 %v286, %v717
      %vm719 = vcmask 1045504
      %v720 = vrot.slane %v718, 2
      %v721 = vrot.slane %v321, 2
      %v722 = vsel %vm719, %v720, %v721
      %v723 = vrot.slane %v322, 2
      %v724 = vsel %vm719, %v721, %v723
      %v725 = vrot.slane %v323, 2
      %v726 = vsel %vm719, %v723, %v725
      %v727 = vrot.slane %v324, 2
      %v728 = vsel %vm719, %v725, %v727
      %v729 = vrot.slane %v325, 2
      %v730 = vsel %vm719, %v727, %v729
      %v731 = vrot.slane %v326, 2
      %v732 = vsel %vm719, %v729, %v731
      %v733 = vrot.slane %v327, 2
      %v734 = vsel %vm719, %v731, %v733
      %v735 = vrot.slane %v328, 2
      %v736 = vsel %vm719, %v733, %v735
      %v737 = vrot.slane %v329, 2
      %v738 = vsel %vm719, %v735, %v737
      %v739 = vrot.slane %v330, 2
      %v740 = vsel %vm719, %v737, %v739
      %v741 = vrot.slane %v331, 2
      %v742 = vsel %vm719, %v739, %v741
      %v743 = vrot.slane %v332, 2
      %v744 = vsel %vm719, %v741, %v743
      %v745 = vrot.slane %v333, 2
      %v746 = vsel %vm719, %v743, %v745
      %v747 = vrot.slane %v334, 2
      %v748 = vsel %vm719, %v745, %v747
      %v749 = vrot.slane %v335, 2
      %v750 = vsel %vm719, %v747, %v749
      %v751 = vrot.slane %v336, 2
      %v752 = vsel %vm719, %v749, %v751
      %v753 = vrot.slane %v593, 2
      %v754 = vsel %vm719, %v751, %v753
      %v755 = vrot.slane %v606, 2
      %v756 = vsel %vm719, %v753, %v755
      %v779 = vunpack.c.l.b16 %v241
      %v780 = vunpack.c.l.b16 %v242
      %v781 = vunpack.c.l.b16 %v243
      %v782 = vunpack.c.l.b16 %v244
      %v783 = vpack.c.b16 %v288, %v779
      %v784 = vpack.c.b16 %v781, %v780
      %v785 = vpack.c.b16 %v782, %v782
      %v786 = vrot.slane %v783, 2
      %v787 = vsel %vm719, %v786, %v723
      %v788 = vrot.slane %v784, 2
      %v789 = vsel %vm719, %v753, %v788
      %v790 = vrot.slane %v785, 2
      %v791 = vsel %vm719, %v788, %v790
      %v796 = vunpack.c.l.b16 %v245
      %v797 = vpack.c.b16 %v796, %v796
      %vm798 = vsmask.f32 5376
      %v800 = vshrl.u32 %v783, 16
      %v802 = vrot.slane %v800, 2
      %v803 = vshll.u32 %v783, 16
      %v805 = vrot.slane %v803, 3
      %v806 = vor.u32 %v802, %v805
      %v807 = vrot.slane %v387, 2
      %v808 = vrot.slane %v383, 3
      %v809 = vor.u32 %v807, %v808
      %v810 = vsel %vm798, %v806, %v809
      %v811 = vrot.slane %v395, 2
      %v812 = vrot.slane %v391, 3
      %v813 = vor.u32 %v811, %v812
      %v814 = vsel %vm798, %v809, %v813
      %v815 = vrot.slane %v403, 2
      %v816 = vrot.slane %v399, 3
      %v817 = vor.u32 %v815, %v816
      %v818 = vsel %vm798, %v813, %v817
      %v819 = vrot.slane %v411, 2
      %v820 = vrot.slane %v407, 3
      %v821 = vor.u32 %v819, %v820
      %v822 = vsel %vm798, %v817, %v821
      %v823 = vrot.slane %v419, 2
      %v824 = vrot.slane %v415, 3
      %v825 = vor.u32 %v823, %v824
      %v826 = vsel %vm798, %v821, %v825
      %v827 = vrot.slane %v427, 2
      %v828 = vrot.slane %v423, 3
      %v829 = vor.u32 %v827, %v828
      %v830 = vsel %vm798, %v825, %v829
      %v831 = vrot.slane %v435, 2
      %v832 = vrot.slane %v431, 3
      %v833 = vor.u32 %v831, %v832
      %v834 = vsel %vm798, %v829, %v833
      %v835 = vrot.slane %v443, 2
      %v836 = vrot.slane %v439, 3
      %v837 = vor.u32 %v835, %v836
      %v838 = vsel %vm798, %v833, %v837
      %v839 = vrot.slane %v451, 2
      %v840 = vrot.slane %v447, 3
      %v841 = vor.u32 %v839, %v840
      %v842 = vsel %vm798, %v837, %v841
      %v843 = vrot.slane %v459, 2
      %v844 = vrot.slane %v455, 3
      %v845 = vor.u32 %v843, %v844
      %v846 = vsel %vm798, %v841, %v845
      %v847 = vrot.slane %v467, 2
      %v848 = vrot.slane %v463, 3
      %v849 = vor.u32 %v847, %v848
      %v850 = vsel %vm798, %v845, %v849
      %v851 = vrot.slane %v475, 2
      %v852 = vrot.slane %v471, 3
      %v853 = vor.u32 %v851, %v852
      %v854 = vsel %vm798, %v849, %v853
      %v855 = vrot.slane %v483, 2
      %v856 = vrot.slane %v479, 3
      %v857 = vor.u32 %v855, %v856
      %v858 = vsel %vm798, %v853, %v857
      %v859 = vrot.slane %v491, 2
      %v860 = vrot.slane %v487, 3
      %v861 = vor.u32 %v859, %v860
      %v862 = vsel %vm798, %v857, %v861
      %v863 = vrot.slane %v499, 2
      %v864 = vrot.slane %v495, 3
      %v865 = vor.u32 %v863, %v864
      %v866 = vsel %vm798, %v861, %v865
      %v867 = vrot.slane %v681, 2
      %v868 = vrot.slane %v684, 3
      %v869 = vor.u32 %v867, %v868
      %v870 = vsel %vm798, %v865, %v869
      %v872 = vshrl.u32 %v784, 16
      %v874 = vrot.slane %v872, 2
      %v875 = vshll.u32 %v784, 16
      %v877 = vrot.slane %v875, 3
      %v878 = vor.u32 %v874, %v877
      %v879 = vsel %vm798, %v869, %v878
      %v881 = vshrl.u32 %v797, 16
      %v883 = vrot.slane %v881, 2
      %v884 = vshll.u32 %v797, 16
      %v886 = vrot.slane %v884, 3
      %v887 = vor.u32 %v883, %v886
      %v888 = vsel %vm798, %v878, %v887
      %v908 = vunpack.c.l.b16 %v246
      %v909 = vpack.c.b16 %v288, %v908
      %vm910 = vcmask 1044480
      %v911 = vrot.slane %v909, 3
      %v912 = vrot.slane %v322, 3
      %v913 = vsel %vm910, %v911, %v912
      %v914 = vrot.slane %v323, 3
      %v915 = vsel %vm910, %v912, %v914
      %v916 = vrot.slane %v324, 3
      %v917 = vsel %vm910, %v914, %v916
      %v918 = vrot.slane %v325, 3
      %v919 = vsel %vm910, %v916, %v918
      %v920 = vrot.slane %v326, 3
      %v921 = vsel %vm910, %v918, %v920
      %v922 = vrot.slane %v327, 3
      %v923 = vsel %vm910, %v920, %v922
      %v924 = vrot.slane %v328, 3
      %v925 = vsel %vm910, %v922, %v924
      %v926 = vrot.slane %v329, 3
      %v927 = vsel %vm910, %v924, %v926
      %v928 = vrot.slane %v330, 3
      %v929 = vsel %vm910, %v926, %v928
      %v930 = vrot.slane %v331, 3
      %v931 = vsel %vm910, %v928, %v930
      %v932 = vrot.slane %v332, 3
      %v933 = vsel %vm910, %v930, %v932
      %v934 = vrot.slane %v333, 3
      %v935 = vsel %vm910, %v932, %v934
      %v936 = vrot.slane %v334, 3
      %v937 = vsel %vm910, %v934, %v936
      %v938 = vrot.slane %v335, 3
      %v939 = vsel %vm910, %v936, %v938
      %v940 = vrot.slane %v336, 3
      %v941 = vsel %vm910, %v938, %v940
      %v942 = vrot.slane %v593, 3
      %v943 = vsel %vm910, %v940, %v942
      %v944 = vrot.slane %v784, 3
      %v945 = vsel %vm910, %v942, %v944
      %v946 = vrot.slane %v797, 3
      %v947 = vsel %vm910, %v944, %v946
      %v966 = vld [vmem:[%s1] sm:$0xf]
      %v967 = vld [vmem:[%s1 + $0x4] sm:$0xf]
      %v968 = vld [vmem:[%s1 + $0x8] sm:$0xf]
      %v969 = vld [vmem:[%s1 + $0xc] sm:$0xf]
      %v970 = vld [vmem:[%s1 + $0x10] sm:$0xf]
      %v971 = vld [vmem:[%s1 + $0x14] sm:$0xf]
      %v972 = vld [vmem:[%s1 + $0x18] sm:$0xf]
      %v973 = vld [vmem:[%s1 + $0x1c] sm:$0xf]
      %v974 = vld [vmem:[%s1 + $0x20] sm:$0xf]
      %v975 = vld [vmem:[%s1 + $0x24] sm:$0xf]
      %v976 = vld [vmem:[%s1 + $0x28] sm:$0xf]
      %v977 = vld [vmem:[%s1 + $0x2c] sm:$0xf]
      %v978 = vld [vmem:[%s1 + $0x30] sm:$0xf]
      %v979 = vld [vmem:[%s1 + $0x34] sm:$0xf]
      %v980 = vld [vmem:[%s1 + $0x38] sm:$0xf]
      %v981 = vld [vmem:[%s1 + $0x3c] sm:$0xf]
      %v982 = vld [vmem:[%s1 + $0x40] sm:$0xf]
      %v983 = vld [vmem:[%s1 + $0x44] sm:$0xf]
      %v984 = vld [vmem:[%s1 + $0x48] sm:$0xf]
      %v985 = vld [vmem:[%s1 + $0x4c] sm:$0xf]
      %v986 = vld [vmem:[%s1 + $0x50] sm:$0xf]
      %v987 = vld [vmem:[%s1 + $0x54] sm:$0xf]
      %v988 = vld [vmem:[%s1 + $0x58] sm:$0xf]
      %v989 = vld [vmem:[%s1 + $0x5c] sm:$0xf]
      %v990 = vld [vmem:[%s1 + $0x60] sm:$0xf]
      %v991 = vld [vmem:[%s1 + $0x64] sm:$0xf]
      %v992 = vld [vmem:[%s1 + $0x68] sm:$0xf]
      %v993 = vld [vmem:[%s1 + $0x6c] sm:$0xf]
      %v994 = vld [vmem:[%s1 + $0x70] sm:$0xf]
      %v995 = vld [vmem:[%s1 + $0x74] sm:$0xf]
      %v996 = vld [vmem:[%s1 + $0x78] sm:$0xf]
      %v997 = vld [vmem:[%s1 + $0x7c] sm:$0xf]
      %v998 = vld [vmem:[%s1 + $0x80] sm:$0xf]
      %v999 = vld [vmem:[%s1 + $0x84] sm:$0xf]
      %v1000 = vld [vmem:[%s1 + $0x88] sm:$0xf]
      %v1001 = vld [vmem:[%s1 + $0x8c] sm:$0xf]
      %v1002 = vld [vmem:[%s1 + $0x90] sm:$0xf]
      %v1003 = vld [vmem:[%s1 + $0x94] sm:$0xf]
      %v1004 = vld [vmem:[%s1 + $0x98] sm:$0xf]
      %v1005 = vld [vmem:[%s1 + $0x9c] sm:$0xf]
      %v1006 = vld [vmem:[%s1 + $0xa0] sm:$0xf]
      %v1007 = vld [vmem:[%s1 + $0xa4] sm:$0xf]
      %v1008 = vld [vmem:[%s1 + $0xa8] sm:$0xf]
      %v1009 = vld [vmem:[%s1 + $0xac] sm:$0xf]
      %v1010 = vld [vmem:[%s1 + $0xb0] sm:$0xf]
      %v1011 = vld [vmem:[%s1 + $0xb4] sm:$0xf]
      %v1012 = vld [vmem:[%s1 + $0xb8] sm:$0xf]
      %v1013 = vld [vmem:[%s1 + $0xbc] sm:$0xf]
      %v1014 = vld [vmem:[%s1 + $0xc0] sm:$0xf]
      %v1015 = vld [vmem:[%s1 + $0xc4] sm:$0xf]
      %v1016 = vld [vmem:[%s1 + $0xc8] sm:$0xf]
      %v1017 = vld [vmem:[%s1 + $0xcc] sm:$0xf]
      %v1018 = vld [vmem:[%s1 + $0xd0] sm:$0xf]
      %v1019 = vld [vmem:[%s1 + $0xd4] sm:$0xf]
      %v1020 = vld [vmem:[%s1 + $0xd8] sm:$0xf]
      %v1021 = vld [vmem:[%s1 + $0xdc] sm:$0xf]
      %v1022 = vld [vmem:[%s1 + $0xe0] sm:$0xf]
      %v1023 = vld [vmem:[%s1 + $0xe4] sm:$0xf]
      %v1024 = vld [vmem:[%s1 + $0xe8] sm:$0xf]
      %v1025 = vld [vmem:[%s1 + $0xec] sm:$0xf]
      %v1026 = vld [vmem:[%s1 + $0xf0] sm:$0xf]
      %v1027 = vld [vmem:[%s1 + $0xf4] sm:$0xf]
      %v1028 = vld [vmem:[%s1 + $0xf8] sm:$0xf]
      %v1029 = vld [vmem:[%s1 + $0xfc] sm:$0xf]
      %v1030 = vld [vmem:[%s1 + $0x100] sm:$0xf]
      %v1031 = vld [vmem:[%s1 + $0x104] sm:$0xf]
      %v1032 = vld [vmem:[%s1 + $0x108] sm:$0xf]
      %v1033 = vld [vmem:[%s1 + $0x10c] sm:$0xf]
      %v1034 = vld [vmem:[%s1 + $0x110] sm:$0xf]
      %v1035 = vld [vmem:[%s1 + $0x114] sm:$0xf]
      %v1036 = vld [vmem:[%s1 + $0x118] sm:$0xf]
      %v1037 = vld [vmem:[%s1 + $0x11c] sm:$0xf]
      %v1038 = vld [vmem:[%s1 + $0x120] sm:$0xf]
      %v1039 = vld [vmem:[%s1 + $0x124] sm:$0xf]
      %v1040 = vld [vmem:[%s1 + $0x128] sm:$0xf]
      %v1041 = vld [vmem:[%s1 + $0x12c] sm:$0xf]
      %v1042 = vld [vmem:[%s1 + $0x130] sm:$0xf]
      %v1043 = vld [vmem:[%s1 + $0x134] sm:$0xf]
      %v1044 = vld [vmem:[%s1 + $0x138] sm:$0xf]
      %v1045 = vld [vmem:[%s1 + $0x13c] sm:$0xf]
      %v1046 = vld [vmem:[%s1 + $0x140] sm:$0xf]
      %v1047 = vld [vmem:[%s1 + $0x144] sm:$0xf]
      %v1048 = vld [vmem:[%s1 + $0x148] sm:$0xf]
      %v1049 = vld [vmem:[%s1 + $0x14c] sm:$0xf]
      %v1050 = vld [vmem:[%s1 + $0x150] sm:$0xf]
      %v1051 = vld [vmem:[%s1 + $0x154] sm:$0xf]
      %v1052 = vld [vmem:[%s1 + $0x158] sm:$0xf]
      %v1053 = vld [vmem:[%s1 + $0x15c] sm:$0xf]
      %v1054 = vld [vmem:[%s1 + $0x160] sm:$0xf]
      %v1055 = vld [vmem:[%s1 + $0x164] sm:$0xf]
      %v1056 = vld [vmem:[%s1 + $0x168] sm:$0xf]
      %v1057 = vld [vmem:[%s1 + $0x16c] sm:$0xf]
      %v1058 = vld [vmem:[%s1 + $0x170] sm:$0xf]
      %v1059 = vld [vmem:[%s1 + $0x174] sm:$0xf]
      %v1060 = vld [vmem:[%s1 + $0x178] sm:$0xf]
      %v1061 = vld [vmem:[%s1 + $0x17c] sm:$0xf]
      %v1062 = vld [vmem:[%s1 + $0x180] sm:$0xf]
      %v1063 = vld [vmem:[%s1 + $0x184] sm:$0xf]
      %v1064 = vld [vmem:[%s1 + $0x188] sm:$0xf]
      %v1065 = vld [vmem:[%s1 + $0x18c] sm:$0xf]
      %v1066 = vld [vmem:[%s1 + $0x190] sm:$0xf]
      %v1067 = vld [vmem:[%s1 + $0x194] sm:$0xf]
      %v1068 = vld [vmem:[%s1 + $0x198] sm:$0xf]
      %v1069 = vld [vmem:[%s1 + $0x19c] sm:$0xf]
      %v1070 = vld [vmem:[%s1 + $0x1a0] sm:$0xf]
      %v1071 = vld [vmem:[%s1 + $0x1a4] sm:$0xf]
      %v1072 = vld [vmem:[%s1 + $0x1a8] sm:$0xf]
      %v1073 = vld [vmem:[%s1 + $0x1ac] sm:$0xf]
      %v1074 = vld [vmem:[%s1 + $0x1b0] sm:$0xf]
      %v1075 = vld [vmem:[%s1 + $0x1b4] sm:$0xf]
      %v1076 = vld [vmem:[%s1 + $0x1b8] sm:$0xf]
      %v1077 = vld [vmem:[%s1 + $0x1bc] sm:$0xf]
      %v1078 = vld [vmem:[%s1 + $0x1c0] sm:$0xf]
      %v1079 = vld [vmem:[%s1 + $0x1c4] sm:$0xf]
      %v1080 = vld [vmem:[%s1 + $0x1c8] sm:$0xf]
      %v1081 = vld [vmem:[%s1 + $0x1cc] sm:$0xf]
      %v1082 = vld [vmem:[%s1 + $0x1d0] sm:$0xf]
      %v1083 = vld [vmem:[%s1 + $0x1d4] sm:$0xf]
      %v1084 = vld [vmem:[%s1 + $0x1d8] sm:$0xf]
      %v1085 = vld [vmem:[%s1 + $0x1dc] sm:$0xf]
      %v1086 = vld [vmem:[%s1 + $0x1e0] sm:$0xf]
      %v1087 = vld [vmem:[%s1 + $0x1e4] sm:$0xf]
      %v1088 = vld [vmem:[%s1 + $0x1e8] sm:$0xf]
      %v1089 = vld [vmem:[%s1 + $0x1ec] sm:$0xf]
      %v1090 = vld [vmem:[%s1 + $0x1f0] sm:$0xf]
      %v1091 = vld [vmem:[%s1 + $0x1f4] sm:$0xf]
      %v1092 = vld [vmem:[%s1 + $0x1f8] sm:$0xf]
      %v1093 = vld [vmem:[%s1 + $0x1fc] sm:$0xf]
      %v1094 = vld [vmem:[%s1 + $0x200] sm:$0xf]
      %v1095 = vld [vmem:[%s1 + $0x204] sm:$0xf]
      %v1096 = vld [vmem:[%s1 + $0x208] sm:$0xf]
      %v1097 = vld [vmem:[%s1 + $0x20c] sm:$0xf]
      %v1098 = vld [vmem:[%s1 + $0x210] sm:$0xf]
      %v1099 = vld [vmem:[%s1 + $0x214] sm:$0xf]
      %v1100 = vld [vmem:[%s1 + $0x218] sm:$0xf]
      %v1101 = vld [vmem:[%s1 + $0x21c] sm:$0xf]
      %v1102 = vld [vmem:[%s1 + $0x220] sm:$0xf]
      %v1103 = vld [vmem:[%s1 + $0x224] sm:$0xf]
      %v1104 = vld [vmem:[%s1 + $0x228] sm:$0xf]
      %v1105 = vld [vmem:[%s1 + $0x22c] sm:$0xf]
      %v1106 = vld [vmem:[%s1 + $0x230] sm:$0xf]
      %v1107 = vld [vmem:[%s1 + $0x234] sm:$0xf]
      %v1108 = vld [vmem:[%s1 + $0x238] sm:$0xf]
      %v1109 = vld [vmem:[%s1 + $0x23c] sm:$0xf]
      %v1110 = vld [vmem:[%s2] sm:$0x1]
      %v1112 = vlaneseq
      %v1113 = vshrl.u32 %v1112, 7
      %v1114 = vsub.s32 0, %v1113
      %v1115 = vrot.slane %v1110, %v1114
      %v1261 = vunpack.c.l.b16 %v966
      %v1262 = vunpack.c.l.b16 %v967
      %v1263 = vunpack.c.l.b16 %v968
      %v1264 = vunpack.c.l.b16 %v969
      %v1265 = vunpack.c.l.b16 %v970
      %v1266 = vunpack.c.l.b16 %v971
      %v1267 = vunpack.c.l.b16 %v972
      %v1268 = vunpack.c.l.b16 %v973
      %v1269 = vunpack.c.l.b16 %v974
      %v1270 = vunpack.c.l.b16 %v975
      %v1271 = vunpack.c.l.b16 %v976
      %v1272 = vunpack.c.l.b16 %v977
      %v1273 = vunpack.c.l.b16 %v978
      %v1274 = vunpack.c.l.b16 %v979
      %v1275 = vunpack.c.l.b16 %v980
      %v1276 = vunpack.c.l.b16 %v981
      %v1277 = vunpack.c.l.b16 %v982
      %v1278 = vunpack.c.l.b16 %v983
      %v1279 = vunpack.c.l.b16 %v984
      %v1280 = vunpack.c.l.b16 %v985
      %v1281 = vunpack.c.l.b16 %v986
      %v1282 = vunpack.c.l.b16 %v987
      %v1283 = vunpack.c.l.b16 %v988
      %v1284 = vunpack.c.l.b16 %v989
      %v1285 = vunpack.c.l.b16 %v990
      %v1286 = vunpack.c.l.b16 %v991
      %v1287 = vunpack.c.l.b16 %v992
      %v1288 = vunpack.c.l.b16 %v993
      %v1289 = vunpack.c.l.b16 %v994
      %v1290 = vunpack.c.l.b16 %v995
      %v1291 = vunpack.c.l.b16 %v996
      %v1292 = vunpack.c.l.b16 %v997
      %v1293 = vunpack.c.l.b16 %v998
      %v1294 = vunpack.c.l.b16 %v999
      %v1295 = vunpack.c.l.b16 %v1000
      %v1296 = vunpack.c.l.b16 %v1001
      %v1297 = vunpack.c.l.b16 %v1002
      %v1298 = vunpack.c.l.b16 %v1003
      %v1299 = vunpack.c.l.b16 %v1004
      %v1300 = vunpack.c.l.b16 %v1005
      %v1301 = vunpack.c.l.b16 %v1006
      %v1302 = vunpack.c.l.b16 %v1007
      %v1303 = vunpack.c.l.b16 %v1008
      %v1304 = vunpack.c.l.b16 %v1009
      %v1305 = vunpack.c.l.b16 %v1010
      %v1306 = vunpack.c.l.b16 %v1011
      %v1307 = vunpack.c.l.b16 %v1012
      %v1308 = vunpack.c.l.b16 %v1013
      %v1309 = vunpack.c.l.b16 %v1014
      %v1310 = vunpack.c.l.b16 %v1015
      %v1311 = vunpack.c.l.b16 %v1016
      %v1312 = vunpack.c.l.b16 %v1017
      %v1313 = vunpack.c.l.b16 %v1018
      %v1314 = vunpack.c.l.b16 %v1019
      %v1315 = vunpack.c.l.b16 %v1020
      %v1316 = vunpack.c.l.b16 %v1021
      %v1317 = vunpack.c.l.b16 %v1022
      %v1318 = vunpack.c.l.b16 %v1023
      %v1319 = vunpack.c.l.b16 %v1024
      %v1320 = vunpack.c.l.b16 %v1025
      %v1321 = vunpack.c.l.b16 %v1026
      %v1322 = vunpack.c.l.b16 %v1027
      %v1323 = vunpack.c.l.b16 %v1028
      %v1324 = vunpack.c.l.b16 %v1029
      %v1325 = vunpack.c.l.b16 %v1030
      %v1326 = vunpack.c.l.b16 %v1031
      %v1327 = vunpack.c.l.b16 %v1032
      %v1328 = vunpack.c.l.b16 %v1033
      %v1329 = vunpack.c.l.b16 %v1034
      %v1330 = vunpack.c.l.b16 %v1035
      %v1331 = vunpack.c.l.b16 %v1036
      %v1332 = vunpack.c.l.b16 %v1037
      %v1333 = vunpack.c.l.b16 %v1038
      %v1334 = vunpack.c.l.b16 %v1039
      %v1335 = vunpack.c.l.b16 %v1040
      %v1336 = vunpack.c.l.b16 %v1041
      %v1337 = vunpack.c.l.b16 %v1042
      %v1338 = vunpack.c.l.b16 %v1043
      %v1339 = vunpack.c.l.b16 %v1044
      %v1340 = vunpack.c.l.b16 %v1045
      %v1341 = vunpack.c.l.b16 %v1046
      %v1342 = vunpack.c.l.b16 %v1047
      %v1343 = vunpack.c.l.b16 %v1048
      %v1344 = vunpack.c.l.b16 %v1049
      %v1345 = vunpack.c.l.b16 %v1050
      %v1346 = vunpack.c.l.b16 %v1051
      %v1347 = vunpack.c.l.b16 %v1052
      %v1348 = vunpack.c.l.b16 %v1053
      %v1349 = vunpack.c.l.b16 %v1054
      %v1350 = vunpack.c.l.b16 %v1055
      %v1351 = vunpack.c.l.b16 %v1056
      %v1352 = vunpack.c.l.b16 %v1057
      %v1353 = vunpack.c.l.b16 %v1058
      %v1354 = vunpack.c.l.b16 %v1059
      %v1355 = vunpack.c.l.b16 %v1060
      %v1356 = vunpack.c.l.b16 %v1061
      %v1357 = vunpack.c.l.b16 %v1062
      %v1358 = vunpack.c.l.b16 %v1063
      %v1359 = vunpack.c.l.b16 %v1064
      %v1360 = vunpack.c.l.b16 %v1065
      %v1361 = vunpack.c.l.b16 %v1066
      %v1362 = vunpack.c.l.b16 %v1067
      %v1363 = vunpack.c.l.b16 %v1068
      %v1364 = vunpack.c.l.b16 %v1069
      %v1365 = vunpack.c.l.b16 %v1070
      %v1366 = vunpack.c.l.b16 %v1071
      %v1367 = vunpack.c.l.b16 %v1072
      %v1368 = vunpack.c.l.b16 %v1073
      %v1369 = vunpack.c.l.b16 %v1074
      %v1370 = vunpack.c.l.b16 %v1075
      %v1371 = vunpack.c.l.b16 %v1076
      %v1372 = vunpack.c.l.b16 %v1077
      %v1373 = vunpack.c.l.b16 %v1078
      %v1374 = vunpack.c.l.b16 %v1079
      %v1375 = vunpack.c.l.b16 %v1080
      %v1376 = vunpack.c.l.b16 %v1081
      %v1377 = vunpack.c.l.b16 %v1082
      %v1378 = vunpack.c.l.b16 %v1083
      %v1379 = vunpack.c.l.b16 %v1084
      %v1380 = vunpack.c.l.b16 %v1085
      %v1381 = vunpack.c.l.b16 %v1086
      %v1382 = vunpack.c.l.b16 %v1087
      %v1383 = vunpack.c.l.b16 %v1088
      %v1384 = vunpack.c.l.b16 %v1089
      %v1385 = vunpack.c.l.b16 %v1090
      %v1386 = vunpack.c.l.b16 %v1091
      %v1387 = vunpack.c.l.b16 %v1092
      %v1388 = vunpack.c.l.b16 %v1093
      %v1389 = vunpack.c.l.b16 %v1094
      %v1390 = vunpack.c.l.b16 %v1095
      %v1391 = vunpack.c.l.b16 %v1096
      %v1392 = vunpack.c.l.b16 %v1097
      %v1393 = vunpack.c.l.b16 %v1098
      %v1394 = vunpack.c.l.b16 %v1099
      %v1395 = vunpack.c.l.b16 %v1100
      %v1396 = vunpack.c.l.b16 %v1101
      %v1397 = vunpack.c.l.b16 %v1102
      %v1398 = vunpack.c.l.b16 %v1103
      %v1399 = vunpack.c.l.b16 %v1104
      %v1400 = vunpack.c.l.b16 %v1105
      %v1401 = vunpack.c.l.b16 %v1106
      %v1402 = vunpack.c.l.b16 %v1107
      %v1403 = vunpack.c.l.b16 %v1108
      %v1404 = vunpack.c.l.b16 %v1109
      %v1405 = vpack.c.b16 %v1262, %v1261
      %v1406 = vpack.c.b16 %v1264, %v1263
      %v1407 = vpack.c.b16 %v1266, %v1265
      %v1408 = vpack.c.b16 %v1268, %v1267
      %v1409 = vpack.c.b16 %v1270, %v1269
      %v1410 = vpack.c.b16 %v1272, %v1271
      %v1411 = vpack.c.b16 %v1274, %v1273
      %v1412 = vpack.c.b16 %v1276, %v1275
      %v1413 = vpack.c.b16 %v1278, %v1277
      %v1414 = vpack.c.b16 %v1280, %v1279
      %v1415 = vpack.c.b16 %v1282, %v1281
      %v1416 = vpack.c.b16 %v1284, %v1283
      %v1417 = vpack.c.b16 %v1286, %v1285
      %v1418 = vpack.c.b16 %v1288, %v1287
      %v1419 = vpack.c.b16 %v1290, %v1289
      %v1420 = vpack.c.b16 %v1292, %v1291
      %v1421 = vpack.c.b16 %v1294, %v1293
      %v1422 = vpack.c.b16 %v1296, %v1295
      %v1423 = vpack.c.b16 %v1298, %v1297
      %v1424 = vpack.c.b16 %v1300, %v1299
      %v1425 = vpack.c.b16 %v1302, %v1301
      %v1426 = vpack.c.b16 %v1304, %v1303
      %v1427 = vpack.c.b16 %v1306, %v1305
      %v1428 = vpack.c.b16 %v1308, %v1307
      %v1429 = vpack.c.b16 %v1310, %v1309
      %v1430 = vpack.c.b16 %v1312, %v1311
      %v1431 = vpack.c.b16 %v1314, %v1313
      %v1432 = vpack.c.b16 %v1316, %v1315
      %v1433 = vpack.c.b16 %v1318, %v1317
      %v1434 = vpack.c.b16 %v1320, %v1319
      %v1435 = vpack.c.b16 %v1322, %v1321
      %v1436 = vpack.c.b16 %v1324, %v1323
      %v1437 = vpack.c.b16 %v1326, %v1325
      %v1438 = vpack.c.b16 %v1328, %v1327
      %v1439 = vpack.c.b16 %v1330, %v1329
      %v1440 = vpack.c.b16 %v1332, %v1331
      %v1441 = vpack.c.b16 %v1334, %v1333
      %v1442 = vpack.c.b16 %v1336, %v1335
      %v1443 = vpack.c.b16 %v1338, %v1337
      %v1444 = vpack.c.b16 %v1340, %v1339
      %v1445 = vpack.c.b16 %v1342, %v1341
      %v1446 = vpack.c.b16 %v1344, %v1343
      %v1447 = vpack.c.b16 %v1346, %v1345
      %v1448 = vpack.c.b16 %v1348, %v1347
      %v1449 = vpack.c.b16 %v1350, %v1349
      %v1450 = vpack.c.b16 %v1352, %v1351
      %v1451 = vpack.c.b16 %v1354, %v1353
      %v1452 = vpack.c.b16 %v1356, %v1355
      %v1453 = vpack.c.b16 %v1358, %v1357
      %v1454 = vpack.c.b16 %v1360, %v1359
      %v1455 = vpack.c.b16 %v1362, %v1361
      %v1456 = vpack.c.b16 %v1364, %v1363
      %v1457 = vpack.c.b16 %v1366, %v1365
      %v1458 = vpack.c.b16 %v1368, %v1367
      %v1459 = vpack.c.b16 %v1370, %v1369
      %v1460 = vpack.c.b16 %v1372, %v1371
      %v1461 = vpack.c.b16 %v1374, %v1373
      %v1462 = vpack.c.b16 %v1376, %v1375
      %v1463 = vpack.c.b16 %v1378, %v1377
      %v1464 = vpack.c.b16 %v1380, %v1379
      %v1465 = vpack.c.b16 %v1382, %v1381
      %v1466 = vpack.c.b16 %v1384, %v1383
      %v1467 = vpack.c.b16 %v1386, %v1385
      %v1468 = vpack.c.b16 %v1388, %v1387
      %v1469 = vpack.c.b16 %v1390, %v1389
      %v1470 = vpack.c.b16 %v1392, %v1391
      %v1471 = vpack.c.b16 %v1394, %v1393
      %v1472 = vpack.c.b16 %v1396, %v1395
      %v1473 = vpack.c.b16 %v1398, %v1397
      %v1474 = vpack.c.b16 %v1400, %v1399
      %v1475 = vpack.c.b16 %v1402, %v1401
      %v1476 = vpack.c.b16 %v1404, %v1403
      %1549 = vmatprep.subr.bf16.mxu0 0
      %1550 = vmatpush1.bf16.msra.mxu0 %v1412
      %1551 = vmatprep.subr.bf16.mxu0 0
      %1552 = vmatpush1.bf16.msra.mxu0 %v1411
      %1553 = vmatprep.subr.bf16.mxu0 0
      %1554 = vmatpush1.bf16.msra.mxu0 %v1410
      %1555 = vmatprep.subr.bf16.mxu0 0
      %1556 = vmatpush1.bf16.msra.mxu0 %v1409
      %1557 = vmatprep.subr.bf16.mxu0 0
      %1558 = vmatpush1.bf16.msra.mxu0 %v1408
      %1559 = vmatprep.subr.bf16.mxu0 0
      %1560 = vmatpush1.bf16.msra.mxu0 %v1407
      %1561 = vmatprep.subr.bf16.mxu0 0
      %1562 = vmatpush1.bf16.msra.mxu0 %v1406
      %1563 = vmatprep.subr.bf16.mxu0 0
      %1564 = vmatpush1.bf16.msra.mxu0 %v1405
      %1565 = vmatprep.subr.bf16.mxu0 0
      %1566 = vmatpush2.bf16.msra.mxu0 %v1420
      %1567 = vmatprep.subr.bf16.mxu0 0
      %1568 = vmatpush2.bf16.msra.mxu0 %v1419
      %1569 = vmatprep.subr.bf16.mxu0 0
      %1570 = vmatpush2.bf16.msra.mxu0 %v1418
      %1571 = vmatprep.subr.bf16.mxu0 0
      %1572 = vmatpush2.bf16.msra.mxu0 %v1417
      %1573 = vmatprep.subr.bf16.mxu0 0
      %1574 = vmatpush2.bf16.msra.mxu0 %v1416
      %1575 = vmatprep.subr.bf16.mxu0 0
      %1576 = vmatpush2.bf16.msra.mxu0 %v1415
      %1577 = vmatprep.subr.bf16.mxu0 0
      %1578 = vmatpush2.bf16.msra.mxu0 %v1414
      %1579 = vmatprep.subr.bf16.mxu0 0
      %1580 = vmatpush2.bf16.msra.mxu0 %v1413
      %1581 = vmatprep.mubr.bf16.mxu0 %v370
      %1582 = vmatmul.mubr.bf16.gmra.mxu0 %v319
      %v1583 = vpop.f32.mrf.mxu0
      %v1584 = vadd.f32 %v1115, %v1583
      %v1585 = vpop.f32.mrf.mxu0
      %v1586 = vpop.f32.mrf.mxu0
      %v1587 = vadd.f32 %v1115, %v1586
      %v1588 = vpop.f32.mrf.mxu0
      %1589 = vmatprep.mubr.bf16.mxu0 %v378
      %1590 = vmatmul.mubr.bf16.gmra.mxu0 %v320
      %v1591 = vpop.f32.mrf.mxu0
      %v1592 = vadd.f32 %v1115, %v1591
      %v1593 = vpop.f32.mrf.mxu0
      %v1594 = vpop.f32.mrf.mxu0
      %v1595 = vadd.f32 %v1115, %v1594
      %v1596 = vpop.f32.mrf.mxu0
      %1597 = vmatprep.mubr.bf16.mxu0 %v386
      %1598 = vmatmul.mubr.bf16.gmra.mxu0 %v321
      %v1599 = vpop.f32.mrf.mxu0
      %v1600 = vadd.f32 %v1115, %v1599
      %v1601 = vpop.f32.mrf.mxu0
      %v1602 = vpop.f32.mrf.mxu0
      %v1603 = vadd.f32 %v1115, %v1602
      %v1604 = vpop.f32.mrf.mxu0
      %1605 = vmatprep.mubr.bf16.mxu0 %v394
      %1606 = vmatmul.mubr.bf16.gmra.mxu0 %v322
      %v1607 = vpop.f32.mrf.mxu0
      %v1608 = vadd.f32 %v1115, %v1607
      %v1609 = vpop.f32.mrf.mxu0
      %v1610 = vpop.f32.mrf.mxu0
      %v1611 = vadd.f32 %v1115, %v1610
      %v1612 = vpop.f32.mrf.mxu0
      %1613 = vmatprep.mubr.bf16.mxu0 %v402
      %1614 = vmatmul.mubr.bf16.gmra.mxu0 %v323
      %v1615 = vpop.f32.mrf.mxu0
      %v1616 = vadd.f32 %v1115, %v1615
      %v1617 = vpop.f32.mrf.mxu0
      %v1618 = vpop.f32.mrf.mxu0
      %v1619 = vadd.f32 %v1115, %v1618
      %v1620 = vpop.f32.mrf.mxu0
      %1621 = vmatprep.mubr.bf16.mxu0 %v410
      %1622 = vmatmul.mubr.bf16.gmra.mxu0 %v324
      %v1623 = vpop.f32.mrf.mxu0
      %v1624 = vadd.f32 %v1115, %v1623
      %v1625 = vpop.f32.mrf.mxu0
      %v1626 = vpop.f32.mrf.mxu0
      %v1627 = vadd.f32 %v1115, %v1626
      %v1628 = vpop.f32.mrf.mxu0
      %1629 = vmatprep.mubr.bf16.mxu0 %v418
      %1630 = vmatmul.mubr.bf16.gmra.mxu0 %v325
      %v1631 = vpop.f32.mrf.mxu0
      %v1632 = vadd.f32 %v1115, %v1631
      %v1633 = vpop.f32.mrf.mxu0
      %v1634 = vpop.f32.mrf.mxu0
      %v1635 = vadd.f32 %v1115, %v1634
      %v1636 = vpop.f32.mrf.mxu0
      %1637 = vmatprep.mubr.bf16.mxu0 %v426
      %1638 = vmatmul.mubr.bf16.gmra.mxu0 %v326
      %v1639 = vpop.f32.mrf.mxu0
      %v1640 = vadd.f32 %v1115, %v1639
      %v1641 = vpop.f32.mrf.mxu0
      %v1642 = vpop.f32.mrf.mxu0
      %v1643 = vadd.f32 %v1115, %v1642
      %v1644 = vpop.f32.mrf.mxu0
      %1645 = vmatprep.mubr.bf16.mxu0 %v434
      %1646 = vmatmul.mubr.bf16.gmra.mxu0 %v327
      %v1647 = vpop.f32.mrf.mxu0
      %v1648 = vadd.f32 %v1115, %v1647
      %v1649 = vpop.f32.mrf.mxu0
      %v1650 = vpop.f32.mrf.mxu0
      %v1651 = vadd.f32 %v1115, %v1650
      %v1652 = vpop.f32.mrf.mxu0
      %1653 = vmatprep.mubr.bf16.mxu0 %v442
      %1654 = vmatmul.mubr.bf16.gmra.mxu0 %v328
      %v1655 = vpop.f32.mrf.mxu0
      %v1656 = vadd.f32 %v1115, %v1655
      %v1657 = vpop.f32.mrf.mxu0
      %v1658 = vpop.f32.mrf.mxu0
      %v1659 = vadd.f32 %v1115, %v1658
      %v1660 = vpop.f32.mrf.mxu0
      %1661 = vmatprep.mubr.bf16.mxu0 %v450
      %1662 = vmatmul.mubr.bf16.gmra.mxu0 %v329
      %v1663 = vpop.f32.mrf.mxu0
      %v1664 = vadd.f32 %v1115, %v1663
      %v1665 = vpop.f32.mrf.mxu0
      %v1666 = vpop.f32.mrf.mxu0
      %v1667 = vadd.f32 %v1115, %v1666
      %v1668 = vpop.f32.mrf.mxu0
      %1669 = vmatprep.mubr.bf16.mxu0 %v458
      %1670 = vmatmul.mubr.bf16.gmra.mxu0 %v330
      %v1671 = vpop.f32.mrf.mxu0
      %v1672 = vadd.f32 %v1115, %v1671
      %v1673 = vpop.f32.mrf.mxu0
      %v1674 = vpop.f32.mrf.mxu0
      %v1675 = vadd.f32 %v1115, %v1674
      %v1676 = vpop.f32.mrf.mxu0
      %1677 = vmatprep.mubr.bf16.mxu0 %v466
      %1678 = vmatmul.mubr.bf16.gmra.mxu0 %v331
      %v1679 = vpop.f32.mrf.mxu0
      %v1680 = vadd.f32 %v1115, %v1679
      %v1681 = vpop.f32.mrf.mxu0
      %v1682 = vpop.f32.mrf.mxu0
      %v1683 = vadd.f32 %v1115, %v1682
      %v1684 = vpop.f32.mrf.mxu0
      %1685 = vmatprep.mubr.bf16.mxu0 %v474
      %1686 = vmatmul.mubr.bf16.gmra.mxu0 %v332
      %v1687 = vpop.f32.mrf.mxu0
      %v1688 = vadd.f32 %v1115, %v1687
      %v1689 = vpop.f32.mrf.mxu0
      %v1690 = vpop.f32.mrf.mxu0
      %v1691 = vadd.f32 %v1115, %v1690
      %v1692 = vpop.f32.mrf.mxu0
      %1693 = vmatprep.mubr.bf16.mxu0 %v482
      %1694 = vmatmul.mubr.bf16.gmra.mxu0 %v333
      %v1695 = vpop.f32.mrf.mxu0
      %v1696 = vadd.f32 %v1115, %v1695
      %v1697 = vpop.f32.mrf.mxu0
      %v1698 = vpop.f32.mrf.mxu0
      %v1699 = vadd.f32 %v1115, %v1698
      %v1700 = vpop.f32.mrf.mxu0
      %1701 = vmatprep.mubr.bf16.mxu0 %v490
      %1702 = vmatmul.mubr.bf16.gmra.mxu0 %v334
      %v1703 = vpop.f32.mrf.mxu0
      %v1704 = vadd.f32 %v1115, %v1703
      %v1705 = vpop.f32.mrf.mxu0
      %v1706 = vpop.f32.mrf.mxu0
      %v1707 = vadd.f32 %v1115, %v1706
      %v1708 = vpop.f32.mrf.mxu0
      %1709 = vmatprep.mubr.bf16.mxu0 %v498
      %1710 = vmatmul.mubr.bf16.gmra.mxu0 %v335
      %v1711 = vpop.f32.mrf.mxu0
      %v1712 = vadd.f32 %v1115, %v1711
      %v1713 = vpop.f32.mrf.mxu0
      %v1714 = vpop.f32.mrf.mxu0
      %v1715 = vadd.f32 %v1115, %v1714
      %v1716 = vpop.f32.mrf.mxu0
      %1717 = vmatprep.mubr.bf16.mxu0 %v506
      %1718 = vmatmul.mubr.bf16.gmra.mxu0 %v336
      %v1719 = vpop.f32.mrf.mxu0
      %v1720 = vadd.f32 %v1115, %v1719
      %v1721 = vpop.f32.mrf.mxu0
      %v1722 = vpop.f32.mrf.mxu0
      %v1723 = vadd.f32 %v1115, %v1722
      %v1724 = vpop.f32.mrf.mxu0
      %1725 = vdwg.mxu0
      %1726 = vmatprep.subr.bf16.mxu0 0
      %1727 = vmatpush1.bf16.msra.mxu0 %v1428
      %1728 = vmatprep.subr.bf16.mxu0 0
      %1729 = vmatpush1.bf16.msra.mxu0 %v1427
      %1730 = vmatprep.subr.bf16.mxu0 0
      %1731 = vmatpush1.bf16.msra.mxu0 %v1426
      %1732 = vmatprep.subr.bf16.mxu0 0
      %1733 = vmatpush1.bf16.msra.mxu0 %v1425
      %1734 = vmatprep.subr.bf16.mxu0 0
      %1735 = vmatpush1.bf16.msra.mxu0 %v1424
      %1736 = vmatprep.subr.bf16.mxu0 0
      %1737 = vmatpush1.bf16.msra.mxu0 %v1423
      %1738 = vmatprep.subr.bf16.mxu0 0
      %1739 = vmatpush1.bf16.msra.mxu0 %v1422
      %1740 = vmatprep.subr.bf16.mxu0 0
      %1741 = vmatpush1.bf16.msra.mxu0 %v1421
      %1742 = vmatprep.subr.bf16.mxu0 0
      %1743 = vmatpush2.bf16.msra.mxu0 %v1436
      %1744 = vmatprep.subr.bf16.mxu0 0
      %1745 = vmatpush2.bf16.msra.mxu0 %v1435
      %1746 = vmatprep.subr.bf16.mxu0 0
      %1747 = vmatpush2.bf16.msra.mxu0 %v1434
      %1748 = vmatprep.subr.bf16.mxu0 0
      %1749 = vmatpush2.bf16.msra.mxu0 %v1433
      %1750 = vmatprep.subr.bf16.mxu0 0
      %1751 = vmatpush2.bf16.msra.mxu0 %v1432
      %1752 = vmatprep.subr.bf16.mxu0 0
      %1753 = vmatpush2.bf16.msra.mxu0 %v1431
      %1754 = vmatprep.subr.bf16.mxu0 0
      %1755 = vmatpush2.bf16.msra.mxu0 %v1430
      %1756 = vmatprep.subr.bf16.mxu0 0
      %1757 = vmatpush2.bf16.msra.mxu0 %v1429
      %1758 = vmatprep.mubr.bf16.mxu0 %v596
      %1759 = vmatmul.mubr.bf16.gmra.mxu0 %v531
      %v1760 = vpop.f32.mrf.mxu0
      %v1761 = vadd.f32 %v1584, %v1760
      %v1762 = vpop.f32.mrf.mxu0
      %v1763 = vpop.f32.mrf.mxu0
      %v1764 = vadd.f32 %v1587, %v1763
      %v1765 = vpop.f32.mrf.mxu0
      %1766 = vmatprep.mubr.bf16.mxu0 %v535
      %1767 = vmatmul.mubr.bf16.gmra.mxu0 %v533
      %v1768 = vpop.f32.mrf.mxu0
      %v1769 = vadd.f32 %v1592, %v1768
      %v1770 = vpop.f32.mrf.mxu0
      %v1771 = vpop.f32.mrf.mxu0
      %v1772 = vadd.f32 %v1595, %v1771
      %v1773 = vpop.f32.mrf.mxu0
      %1774 = vmatprep.mubr.bf16.mxu0 %v537
      %1775 = vmatmul.mubr.bf16.gmra.mxu0 %v535
      %v1776 = vpop.f32.mrf.mxu0
      %v1777 = vadd.f32 %v1600, %v1776
      %v1778 = vpop.f32.mrf.mxu0
      %v1779 = vpop.f32.mrf.mxu0
      %v1780 = vadd.f32 %v1603, %v1779
      %v1781 = vpop.f32.mrf.mxu0
      %1782 = vmatprep.mubr.bf16.mxu0 %v539
      %1783 = vmatmul.mubr.bf16.gmra.mxu0 %v537
      %v1784 = vpop.f32.mrf.mxu0
      %v1785 = vadd.f32 %v1608, %v1784
      %v1786 = vpop.f32.mrf.mxu0
      %v1787 = vpop.f32.mrf.mxu0
      %v1788 = vadd.f32 %v1611, %v1787
      %v1789 = vpop.f32.mrf.mxu0
      %1790 = vmatprep.mubr.bf16.mxu0 %v541
      %1791 = vmatmul.mubr.bf16.gmra.mxu0 %v539
      %v1792 = vpop.f32.mrf.mxu0
      %v1793 = vadd.f32 %v1616, %v1792
      %v1794 = vpop.f32.mrf.mxu0
      %v1795 = vpop.f32.mrf.mxu0
      %v1796 = vadd.f32 %v1619, %v1795
      %v1797 = vpop.f32.mrf.mxu0
      %1798 = vmatprep.mubr.bf16.mxu0 %v543
      %1799 = vmatmul.mubr.bf16.gmra.mxu0 %v541
      %v1800 = vpop.f32.mrf.mxu0
      %v1801 = vadd.f32 %v1624, %v1800
      %v1802 = vpop.f32.mrf.mxu0
      %v1803 = vpop.f32.mrf.mxu0
      %v1804 = vadd.f32 %v1627, %v1803
      %v1805 = vpop.f32.mrf.mxu0
      %1806 = vmatprep.mubr.bf16.mxu0 %v545
      %1807 = vmatmul.mubr.bf16.gmra.mxu0 %v543
      %v1808 = vpop.f32.mrf.mxu0
      %v1809 = vadd.f32 %v1632, %v1808
      %v1810 = vpop.f32.mrf.mxu0
      %v1811 = vpop.f32.mrf.mxu0
      %v1812 = vadd.f32 %v1635, %v1811
      %v1813 = vpop.f32.mrf.mxu0
      %1814 = vmatprep.mubr.bf16.mxu0 %v547
      %1815 = vmatmul.mubr.bf16.gmra.mxu0 %v545
      %v1816 = vpop.f32.mrf.mxu0
      %v1817 = vadd.f32 %v1640, %v1816
      %v1818 = vpop.f32.mrf.mxu0
      %v1819 = vpop.f32.mrf.mxu0
      %v1820 = vadd.f32 %v1643, %v1819
      %v1821 = vpop.f32.mrf.mxu0
      %1822 = vmatprep.mubr.bf16.mxu0 %v549
      %1823 = vmatmul.mubr.bf16.gmra.mxu0 %v547
      %v1824 = vpop.f32.mrf.mxu0
      %v1825 = vadd.f32 %v1648, %v1824
      %v1826 = vpop.f32.mrf.mxu0
      %v1827 = vpop.f32.mrf.mxu0
      %v1828 = vadd.f32 %v1651, %v1827
      %v1829 = vpop.f32.mrf.mxu0
      %1830 = vmatprep.mubr.bf16.mxu0 %v551
      %1831 = vmatmul.mubr.bf16.gmra.mxu0 %v549
      %v1832 = vpop.f32.mrf.mxu0
      %v1833 = vadd.f32 %v1656, %v1832
      %v1834 = vpop.f32.mrf.mxu0
      %v1835 = vpop.f32.mrf.mxu0
      %v1836 = vadd.f32 %v1659, %v1835
      %v1837 = vpop.f32.mrf.mxu0
      %1838 = vmatprep.mubr.bf16.mxu0 %v553
      %1839 = vmatmul.mubr.bf16.gmra.mxu0 %v551
      %v1840 = vpop.f32.mrf.mxu0
      %v1841 = vadd.f32 %v1664, %v1840
      %v1842 = vpop.f32.mrf.mxu0
      %v1843 = vpop.f32.mrf.mxu0
      %v1844 = vadd.f32 %v1667, %v1843
      %v1845 = vpop.f32.mrf.mxu0
      %1846 = vmatprep.mubr.bf16.mxu0 %v555
      %1847 = vmatmul.mubr.bf16.gmra.mxu0 %v553
      %v1848 = vpop.f32.mrf.mxu0
      %v1849 = vadd.f32 %v1672, %v1848
      %v1850 = vpop.f32.mrf.mxu0
      %v1851 = vpop.f32.mrf.mxu0
      %v1852 = vadd.f32 %v1675, %v1851
      %v1853 = vpop.f32.mrf.mxu0
      %1854 = vmatprep.mubr.bf16.mxu0 %v557
      %1855 = vmatmul.mubr.bf16.gmra.mxu0 %v555
      %v1856 = vpop.f32.mrf.mxu0
      %v1857 = vadd.f32 %v1680, %v1856
      %v1858 = vpop.f32.mrf.mxu0
      %v1859 = vpop.f32.mrf.mxu0
      %v1860 = vadd.f32 %v1683, %v1859
      %v1861 = vpop.f32.mrf.mxu0
      %1862 = vmatprep.mubr.bf16.mxu0 %v559
      %1863 = vmatmul.mubr.bf16.gmra.mxu0 %v557
      %v1864 = vpop.f32.mrf.mxu0
      %v1865 = vadd.f32 %v1688, %v1864
      %v1866 = vpop.f32.mrf.mxu0
      %v1867 = vpop.f32.mrf.mxu0
      %v1868 = vadd.f32 %v1691, %v1867
      %v1869 = vpop.f32.mrf.mxu0
      %1870 = vmatprep.mubr.bf16.mxu0 %v561
      %1871 = vmatmul.mubr.bf16.gmra.mxu0 %v559
      %v1872 = vpop.f32.mrf.mxu0
      %v1873 = vadd.f32 %v1696, %v1872
      %v1874 = vpop.f32.mrf.mxu0
      %v1875 = vpop.f32.mrf.mxu0
      %v1876 = vadd.f32 %v1699, %v1875
      %v1877 = vpop.f32.mrf.mxu0
      %1878 = vmatprep.mubr.bf16.mxu0 %v563
      %1879 = vmatmul.mubr.bf16.gmra.mxu0 %v561
      %v1880 = vpop.f32.mrf.mxu0
      %v1881 = vadd.f32 %v1704, %v1880
      %v1882 = vpop.f32.mrf.mxu0
      %v1883 = vpop.f32.mrf.mxu0
      %v1884 = vadd.f32 %v1707, %v1883
      %v1885 = vpop.f32.mrf.mxu0
      %1886 = vmatprep.mubr.bf16.mxu0 %v598
      %1887 = vmatmul.mubr.bf16.gmra.mxu0 %v563
      %v1888 = vpop.f32.mrf.mxu0
      %v1889 = vadd.f32 %v1712, %v1888
      %v1890 = vpop.f32.mrf.mxu0
      %v1891 = vpop.f32.mrf.mxu0
      %v1892 = vadd.f32 %v1715, %v1891
      %v1893 = vpop.f32.mrf.mxu0
      %1894 = vmatprep.mubr.bf16.mxu0 %v600
      %1895 = vmatmul.mubr.bf16.gmra.mxu0 %v565
      %v1896 = vpop.f32.mrf.mxu0
      %v1897 = vadd.f32 %v1720, %v1896
      %v1898 = vpop.f32.mrf.mxu0
      %v1899 = vpop.f32.mrf.mxu0
      %v1900 = vadd.f32 %v1723, %v1899
      %v1901 = vpop.f32.mrf.mxu0
      %1902 = vdwg.mxu0
      %1903 = vmatprep.subr.bf16.mxu0 0
      %1904 = vmatpush1.bf16.msra.mxu0 %v1444
      %1905 = vmatprep.subr.bf16.mxu0 0
      %1906 = vmatpush1.bf16.msra.mxu0 %v1443
      %1907 = vmatprep.subr.bf16.mxu0 0
      %1908 = vmatpush1.bf16.msra.mxu0 %v1442
      %1909 = vmatprep.subr.bf16.mxu0 0
      %1910 = vmatpush1.bf16.msra.mxu0 %v1441
      %1911 = vmatprep.subr.bf16.mxu0 0
      %1912 = vmatpush1.bf16.msra.mxu0 %v1440
      %1913 = vmatprep.subr.bf16.mxu0 0
      %1914 = vmatpush1.bf16.msra.mxu0 %v1439
      %1915 = vmatprep.subr.bf16.mxu0 0
      %1916 = vmatpush1.bf16.msra.mxu0 %v1438
      %1917 = vmatprep.subr.bf16.mxu0 0
      %1918 = vmatpush1.bf16.msra.mxu0 %v1437
      %1919 = vmatprep.subr.bf16.mxu0 0
      %1920 = vmatpush2.bf16.msra.mxu0 %v1452
      %1921 = vmatprep.subr.bf16.mxu0 0
      %1922 = vmatpush2.bf16.msra.mxu0 %v1451
      %1923 = vmatprep.subr.bf16.mxu0 0
      %1924 = vmatpush2.bf16.msra.mxu0 %v1450
      %1925 = vmatprep.subr.bf16.mxu0 0
      %1926 = vmatpush2.bf16.msra.mxu0 %v1449
      %1927 = vmatprep.subr.bf16.mxu0 0
      %1928 = vmatpush2.bf16.msra.mxu0 %v1448
      %1929 = vmatprep.subr.bf16.mxu0 0
      %1930 = vmatpush2.bf16.msra.mxu0 %v1447
      %1931 = vmatprep.subr.bf16.mxu0 0
      %1932 = vmatpush2.bf16.msra.mxu0 %v1446
      %1933 = vmatprep.subr.bf16.mxu0 0
      %1934 = vmatpush2.bf16.msra.mxu0 %v1445
      %1935 = vmatprep.mubr.bf16.mxu0 %v722
      %1936 = vmatmul.mubr.bf16.gmra.mxu0 %v619
      %v1937 = vpop.f32.mrf.mxu0
      %v1938 = vadd.f32 %v1761, %v1937
      %v1939 = vpop.f32.mrf.mxu0
      %v1940 = vpop.f32.mrf.mxu0
      %v1941 = vadd.f32 %v1764, %v1940
      %v1942 = vpop.f32.mrf.mxu0
      %1943 = vmatprep.mubr.bf16.mxu0 %v724
      %1944 = vmatmul.mubr.bf16.gmra.mxu0 %v623
      %v1945 = vpop.f32.mrf.mxu0
      %v1946 = vadd.f32 %v1769, %v1945
      %v1947 = vpop.f32.mrf.mxu0
      %v1948 = vpop.f32.mrf.mxu0
      %v1949 = vadd.f32 %v1772, %v1948
      %v1950 = vpop.f32.mrf.mxu0
      %1951 = vmatprep.mubr.bf16.mxu0 %v726
      %1952 = vmatmul.mubr.bf16.gmra.mxu0 %v627
      %v1953 = vpop.f32.mrf.mxu0
      %v1954 = vadd.f32 %v1777, %v1953
      %v1955 = vpop.f32.mrf.mxu0
      %v1956 = vpop.f32.mrf.mxu0
      %v1957 = vadd.f32 %v1780, %v1956
      %v1958 = vpop.f32.mrf.mxu0
      %1959 = vmatprep.mubr.bf16.mxu0 %v728
      %1960 = vmatmul.mubr.bf16.gmra.mxu0 %v631
      %v1961 = vpop.f32.mrf.mxu0
      %v1962 = vadd.f32 %v1785, %v1961
      %v1963 = vpop.f32.mrf.mxu0
      %v1964 = vpop.f32.mrf.mxu0
      %v1965 = vadd.f32 %v1788, %v1964
      %v1966 = vpop.f32.mrf.mxu0
      %1967 = vmatprep.mubr.bf16.mxu0 %v730
      %1968 = vmatmul.mubr.bf16.gmra.mxu0 %v635
      %v1969 = vpop.f32.mrf.mxu0
      %v1970 = vadd.f32 %v1793, %v1969
      %v1971 = vpop.f32.mrf.mxu0
      %v1972 = vpop.f32.mrf.mxu0
      %v1973 = vadd.f32 %v1796, %v1972
      %v1974 = vpop.f32.mrf.mxu0
      %1975 = vmatprep.mubr.bf16.mxu0 %v732
      %1976 = vmatmul.mubr.bf16.gmra.mxu0 %v639
      %v1977 = vpop.f32.mrf.mxu0
      %v1978 = vadd.f32 %v1801, %v1977
      %v1979 = vpop.f32.mrf.mxu0
      %v1980 = vpop.f32.mrf.mxu0
      %v1981 = vadd.f32 %v1804, %v1980
      %v1982 = vpop.f32.mrf.mxu0
      %1983 = vmatprep.mubr.bf16.mxu0 %v734
      %1984 = vmatmul.mubr.bf16.gmra.mxu0 %v643
      %v1985 = vpop.f32.mrf.mxu0
      %v1986 = vadd.f32 %v1809, %v1985
      %v1987 = vpop.f32.mrf.mxu0
      %v1988 = vpop.f32.mrf.mxu0
      %v1989 = vadd.f32 %v1812, %v1988
      %v1990 = vpop.f32.mrf.mxu0
      %1991 = vmatprep.mubr.bf16.mxu0 %v736
      %1992 = vmatmul.mubr.bf16.gmra.mxu0 %v647
      %v1993 = vpop.f32.mrf.mxu0
      %v1994 = vadd.f32 %v1817, %v1993
      %v1995 = vpop.f32.mrf.mxu0
      %v1996 = vpop.f32.mrf.mxu0
      %v1997 = vadd.f32 %v1820, %v1996
      %v1998 = vpop.f32.mrf.mxu0
      %1999 = vmatprep.mubr.bf16.mxu0 %v738
      %2000 = vmatmul.mubr.bf16.gmra.mxu0 %v651
      %v2001 = vpop.f32.mrf.mxu0
      %v2002 = vadd.f32 %v1825, %v2001
      %v2003 = vpop.f32.mrf.mxu0
      %v2004 = vpop.f32.mrf.mxu0
      %v2005 = vadd.f32 %v1828, %v2004
      %v2006 = vpop.f32.mrf.mxu0
      %2007 = vmatprep.mubr.bf16.mxu0 %v740
      %2008 = vmatmul.mubr.bf16.gmra.mxu0 %v655
      %v2009 = vpop.f32.mrf.mxu0
      %v2010 = vadd.f32 %v1833, %v2009
      %v2011 = vpop.f32.mrf.mxu0
      %v2012 = vpop.f32.mrf.mxu0
      %v2013 = vadd.f32 %v1836, %v2012
      %v2014 = vpop.f32.mrf.mxu0
      %2015 = vmatprep.mubr.bf16.mxu0 %v742
      %2016 = vmatmul.mubr.bf16.gmra.mxu0 %v659
      %v2017 = vpop.f32.mrf.mxu0
      %v2018 = vadd.f32 %v1841, %v2017
      %v2019 = vpop.f32.mrf.mxu0
      %v2020 = vpop.f32.mrf.mxu0
      %v2021 = vadd.f32 %v1844, %v2020
      %v2022 = vpop.f32.mrf.mxu0
      %2023 = vmatprep.mubr.bf16.mxu0 %v744
      %2024 = vmatmul.mubr.bf16.gmra.mxu0 %v663
      %v2025 = vpop.f32.mrf.mxu0
      %v2026 = vadd.f32 %v1849, %v2025
      %v2027 = vpop.f32.mrf.mxu0
      %v2028 = vpop.f32.mrf.mxu0
      %v2029 = vadd.f32 %v1852, %v2028
      %v2030 = vpop.f32.mrf.mxu0
      %2031 = vmatprep.mubr.bf16.mxu0 %v746
      %2032 = vmatmul.mubr.bf16.gmra.mxu0 %v667
      %v2033 = vpop.f32.mrf.mxu0
      %v2034 = vadd.f32 %v1857, %v2033
      %v2035 = vpop.f32.mrf.mxu0
      %v2036 = vpop.f32.mrf.mxu0
      %v2037 = vadd.f32 %v1860, %v2036
      %v2038 = vpop.f32.mrf.mxu0
      %2039 = vmatprep.mubr.bf16.mxu0 %v748
      %2040 = vmatmul.mubr.bf16.gmra.mxu0 %v671
      %v2041 = vpop.f32.mrf.mxu0
      %v2042 = vadd.f32 %v1865, %v2041
      %v2043 = vpop.f32.mrf.mxu0
      %v2044 = vpop.f32.mrf.mxu0
      %v2045 = vadd.f32 %v1868, %v2044
      %v2046 = vpop.f32.mrf.mxu0
      %2047 = vmatprep.mubr.bf16.mxu0 %v750
      %2048 = vmatmul.mubr.bf16.gmra.mxu0 %v675
      %v2049 = vpop.f32.mrf.mxu0
      %v2050 = vadd.f32 %v1873, %v2049
      %v2051 = vpop.f32.mrf.mxu0
      %v2052 = vpop.f32.mrf.mxu0
      %v2053 = vadd.f32 %v1876, %v2052
      %v2054 = vpop.f32.mrf.mxu0
      %2055 = vmatprep.mubr.bf16.mxu0 %v752
      %2056 = vmatmul.mubr.bf16.gmra.mxu0 %v679
      %v2057 = vpop.f32.mrf.mxu0
      %v2058 = vadd.f32 %v1881, %v2057
      %v2059 = vpop.f32.mrf.mxu0
      %v2060 = vpop.f32.mrf.mxu0
      %v2061 = vadd.f32 %v1884, %v2060
      %v2062 = vpop.f32.mrf.mxu0
      %2063 = vmatprep.mubr.bf16.mxu0 %v754
      %2064 = vmatmul.mubr.bf16.gmra.mxu0 %v688
      %v2065 = vpop.f32.mrf.mxu0
      %v2066 = vadd.f32 %v1889, %v2065
      %v2067 = vpop.f32.mrf.mxu0
      %v2068 = vpop.f32.mrf.mxu0
      %v2069 = vadd.f32 %v1892, %v2068
      %v2070 = vpop.f32.mrf.mxu0
      %2071 = vmatprep.mubr.bf16.mxu0 %v756
      %2072 = vmatmul.mubr.bf16.gmra.mxu0 %v697
      %v2073 = vpop.f32.mrf.mxu0
      %v2074 = vadd.f32 %v1897, %v2073
      %v2075 = vpop.f32.mrf.mxu0
      %v2076 = vpop.f32.mrf.mxu0
      %v2077 = vadd.f32 %v1900, %v2076
      %v2078 = vpop.f32.mrf.mxu0
      %2079 = vdwg.mxu0
      %2080 = vmatprep.subr.bf16.mxu0 0
      %2081 = vmatpush1.bf16.msra.mxu0 %v1460
      %2082 = vmatprep.subr.bf16.mxu0 0
      %2083 = vmatpush1.bf16.msra.mxu0 %v1459
      %2084 = vmatprep.subr.bf16.mxu0 0
      %2085 = vmatpush1.bf16.msra.mxu0 %v1458
      %2086 = vmatprep.subr.bf16.mxu0 0
      %2087 = vmatpush1.bf16.msra.mxu0 %v1457
      %2088 = vmatprep.subr.bf16.mxu0 0
      %2089 = vmatpush1.bf16.msra.mxu0 %v1456
      %2090 = vmatprep.subr.bf16.mxu0 0
      %2091 = vmatpush1.bf16.msra.mxu0 %v1455
      %2092 = vmatprep.subr.bf16.mxu0 0
      %2093 = vmatpush1.bf16.msra.mxu0 %v1454
      %2094 = vmatprep.subr.bf16.mxu0 0
      %2095 = vmatpush1.bf16.msra.mxu0 %v1453
      %2096 = vmatprep.subr.bf16.mxu0 0
      %2097 = vmatpush2.bf16.msra.mxu0 %v1468
      %2098 = vmatprep.subr.bf16.mxu0 0
      %2099 = vmatpush2.bf16.msra.mxu0 %v1467
      %2100 = vmatprep.subr.bf16.mxu0 0
      %2101 = vmatpush2.bf16.msra.mxu0 %v1466
      %2102 = vmatprep.subr.bf16.mxu0 0
      %2103 = vmatpush2.bf16.msra.mxu0 %v1465
      %2104 = vmatprep.subr.bf16.mxu0 0
      %2105 = vmatpush2.bf16.msra.mxu0 %v1464
      %2106 = vmatprep.subr.bf16.mxu0 0
      %2107 = vmatpush2.bf16.msra.mxu0 %v1463
      %2108 = vmatprep.subr.bf16.mxu0 0
      %2109 = vmatpush2.bf16.msra.mxu0 %v1462
      %2110 = vmatprep.subr.bf16.mxu0 0
      %2111 = vmatpush2.bf16.msra.mxu0 %v1461
      %2112 = vmatprep.mubr.bf16.mxu0 %v810
      %2113 = vmatmul.mubr.bf16.gmra.mxu0 %v787
      %v2114 = vpop.f32.mrf.mxu0
      %v2115 = vadd.f32 %v1938, %v2114
      %v2116 = vpop.f32.mrf.mxu0
      %v2117 = vpop.f32.mrf.mxu0
      %v2118 = vadd.f32 %v1941, %v2117
      %v2119 = vpop.f32.mrf.mxu0
      %2120 = vmatprep.mubr.bf16.mxu0 %v814
      %2121 = vmatmul.mubr.bf16.gmra.mxu0 %v726
      %v2122 = vpop.f32.mrf.mxu0
      %v2123 = vadd.f32 %v1946, %v2122
      %v2124 = vpop.f32.mrf.mxu0
      %v2125 = vpop.f32.mrf.mxu0
      %v2126 = vadd.f32 %v1949, %v2125
      %v2127 = vpop.f32.mrf.mxu0
      %2128 = vmatprep.mubr.bf16.mxu0 %v818
      %2129 = vmatmul.mubr.bf16.gmra.mxu0 %v728
      %v2130 = vpop.f32.mrf.mxu0
      %v2131 = vadd.f32 %v1954, %v2130
      %v2132 = vpop.f32.mrf.mxu0
      %v2133 = vpop.f32.mrf.mxu0
      %v2134 = vadd.f32 %v1957, %v2133
      %v2135 = vpop.f32.mrf.mxu0
      %2136 = vmatprep.mubr.bf16.mxu0 %v822
      %2137 = vmatmul.mubr.bf16.gmra.mxu0 %v730
      %v2138 = vpop.f32.mrf.mxu0
      %v2139 = vadd.f32 %v1962, %v2138
      %v2140 = vpop.f32.mrf.mxu0
      %v2141 = vpop.f32.mrf.mxu0
      %v2142 = vadd.f32 %v1965, %v2141
      %v2143 = vpop.f32.mrf.mxu0
      %2144 = vmatprep.mubr.bf16.mxu0 %v826
      %2145 = vmatmul.mubr.bf16.gmra.mxu0 %v732
      %v2146 = vpop.f32.mrf.mxu0
      %v2147 = vadd.f32 %v1970, %v2146
      %v2148 = vpop.f32.mrf.mxu0
      %v2149 = vpop.f32.mrf.mxu0
      %v2150 = vadd.f32 %v1973, %v2149
      %v2151 = vpop.f32.mrf.mxu0
      %2152 = vmatprep.mubr.bf16.mxu0 %v830
      %2153 = vmatmul.mubr.bf16.gmra.mxu0 %v734
      %v2154 = vpop.f32.mrf.mxu0
      %v2155 = vadd.f32 %v1978, %v2154
      %v2156 = vpop.f32.mrf.mxu0
      %v2157 = vpop.f32.mrf.mxu0
      %v2158 = vadd.f32 %v1981, %v2157
      %v2159 = vpop.f32.mrf.mxu0
      %2160 = vmatprep.mubr.bf16.mxu0 %v834
      %2161 = vmatmul.mubr.bf16.gmra.mxu0 %v736
      %v2162 = vpop.f32.mrf.mxu0
      %v2163 = vadd.f32 %v1986, %v2162
      %v2164 = vpop.f32.mrf.mxu0
      %v2165 = vpop.f32.mrf.mxu0
      %v2166 = vadd.f32 %v1989, %v2165
      %v2167 = vpop.f32.mrf.mxu0
      %2168 = vmatprep.mubr.bf16.mxu0 %v838
      %2169 = vmatmul.mubr.bf16.gmra.mxu0 %v738
      %v2170 = vpop.f32.mrf.mxu0
      %v2171 = vadd.f32 %v1994, %v2170
      %v2172 = vpop.f32.mrf.mxu0
      %v2173 = vpop.f32.mrf.mxu0
      %v2174 = vadd.f32 %v1997, %v2173
      %v2175 = vpop.f32.mrf.mxu0
      %2176 = vmatprep.mubr.bf16.mxu0 %v842
      %2177 = vmatmul.mubr.bf16.gmra.mxu0 %v740
      %v2178 = vpop.f32.mrf.mxu0
      %v2179 = vadd.f32 %v2002, %v2178
      %v2180 = vpop.f32.mrf.mxu0
      %v2181 = vpop.f32.mrf.mxu0
      %v2182 = vadd.f32 %v2005, %v2181
      %v2183 = vpop.f32.mrf.mxu0
      %2184 = vmatprep.mubr.bf16.mxu0 %v846
      %2185 = vmatmul.mubr.bf16.gmra.mxu0 %v742
      %v2186 = vpop.f32.mrf.mxu0
      %v2187 = vadd.f32 %v2010, %v2186
      %v2188 = vpop.f32.mrf.mxu0
      %v2189 = vpop.f32.mrf.mxu0
      %v2190 = vadd.f32 %v2013, %v2189
      %v2191 = vpop.f32.mrf.mxu0
      %2192 = vmatprep.mubr.bf16.mxu0 %v850
      %2193 = vmatmul.mubr.bf16.gmra.mxu0 %v744
      %v2194 = vpop.f32.mrf.mxu0
      %v2195 = vadd.f32 %v2018, %v2194
      %v2196 = vpop.f32.mrf.mxu0
      %v2197 = vpop.f32.mrf.mxu0
      %v2198 = vadd.f32 %v2021, %v2197
      %v2199 = vpop.f32.mrf.mxu0
      %2200 = vmatprep.mubr.bf16.mxu0 %v854
      %2201 = vmatmul.mubr.bf16.gmra.mxu0 %v746
      %v2202 = vpop.f32.mrf.mxu0
      %v2203 = vadd.f32 %v2026, %v2202
      %v2204 = vpop.f32.mrf.mxu0
      %v2205 = vpop.f32.mrf.mxu0
      %v2206 = vadd.f32 %v2029, %v2205
      %v2207 = vpop.f32.mrf.mxu0
      %2208 = vmatprep.mubr.bf16.mxu0 %v858
      %2209 = vmatmul.mubr.bf16.gmra.mxu0 %v748
      %v2210 = vpop.f32.mrf.mxu0
      %v2211 = vadd.f32 %v2034, %v2210
      %v2212 = vpop.f32.mrf.mxu0
      %v2213 = vpop.f32.mrf.mxu0
      %v2214 = vadd.f32 %v2037, %v2213
      %v2215 = vpop.f32.mrf.mxu0
      %2216 = vmatprep.mubr.bf16.mxu0 %v862
      %2217 = vmatmul.mubr.bf16.gmra.mxu0 %v750
      %v2218 = vpop.f32.mrf.mxu0
      %v2219 = vadd.f32 %v2042, %v2218
      %v2220 = vpop.f32.mrf.mxu0
      %v2221 = vpop.f32.mrf.mxu0
      %v2222 = vadd.f32 %v2045, %v2221
      %v2223 = vpop.f32.mrf.mxu0
      %2224 = vmatprep.mubr.bf16.mxu0 %v866
      %2225 = vmatmul.mubr.bf16.gmra.mxu0 %v752
      %v2226 = vpop.f32.mrf.mxu0
      %v2227 = vadd.f32 %v2050, %v2226
      %v2228 = vpop.f32.mrf.mxu0
      %v2229 = vpop.f32.mrf.mxu0
      %v2230 = vadd.f32 %v2053, %v2229
      %v2231 = vpop.f32.mrf.mxu0
      %2232 = vmatprep.mubr.bf16.mxu0 %v870
      %2233 = vmatmul.mubr.bf16.gmra.mxu0 %v754
      %v2234 = vpop.f32.mrf.mxu0
      %v2235 = vadd.f32 %v2058, %v2234
      %v2236 = vpop.f32.mrf.mxu0
      %v2237 = vpop.f32.mrf.mxu0
      %v2238 = vadd.f32 %v2061, %v2237
      %v2239 = vpop.f32.mrf.mxu0
      %2240 = vmatprep.mubr.bf16.mxu0 %v879
      %2241 = vmatmul.mubr.bf16.gmra.mxu0 %v789
      %v2242 = vpop.f32.mrf.mxu0
      %v2243 = vadd.f32 %v2066, %v2242
      %v2244 = vpop.f32.mrf.mxu0
      %v2245 = vpop.f32.mrf.mxu0
      %v2246 = vadd.f32 %v2069, %v2245
      %v2247 = vpop.f32.mrf.mxu0
      %2248 = vmatprep.mubr.bf16.mxu0 %v888
      %2249 = vmatmul.mubr.bf16.gmra.mxu0 %v791
      %v2250 = vpop.f32.mrf.mxu0
      %v2251 = vadd.f32 %v2074, %v2250
      %v2252 = vpop.f32.mrf.mxu0
      %v2253 = vpop.f32.mrf.mxu0
      %v2254 = vadd.f32 %v2077, %v2253
      %v2255 = vpop.f32.mrf.mxu0
      %2256 = vdwg.mxu0
      %2257 = vmatprep.subr.bf16.mxu0 0
      %2258 = vmatpush1.bf16.msra.mxu0 %v1476
      %2259 = vmatprep.subr.bf16.mxu0 0
      %2260 = vmatpush1.bf16.msra.mxu0 %v1475
      %2261 = vmatprep.subr.bf16.mxu0 0
      %2262 = vmatpush1.bf16.msra.mxu0 %v1474
      %2263 = vmatprep.subr.bf16.mxu0 0
      %2264 = vmatpush1.bf16.msra.mxu0 %v1473
      %2265 = vmatprep.subr.bf16.mxu0 0
      %2266 = vmatpush1.bf16.msra.mxu0 %v1472
      %2267 = vmatprep.subr.bf16.mxu0 0
      %2268 = vmatpush1.bf16.msra.mxu0 %v1471
      %2269 = vmatprep.subr.bf16.mxu0 0
      %2270 = vmatpush1.bf16.msra.mxu0 %v1470
      %2271 = vmatprep.subr.bf16.mxu0 0
      %2272 = vmatpush1.bf16.msra.mxu0 %v1469
      %2273 = vmatprep.subr.bf16.mxu0 0
      %2274 = vmatpush2.bf16.msra.mxu0 0
      %2275 = vmatprep.subr.bf16.mxu0 0
      %2276 = vmatpush2.bf16.msra.mxu0 0
      %2277 = vmatprep.subr.bf16.mxu0 0
      %2278 = vmatpush2.bf16.msra.mxu0 0
      %2279 = vmatprep.subr.bf16.mxu0 0
      %2280 = vmatpush2.bf16.msra.mxu0 0
      %2281 = vmatprep.subr.bf16.mxu0 0
      %2282 = vmatpush2.bf16.msra.mxu0 0
      %2283 = vmatprep.subr.bf16.mxu0 0
      %2284 = vmatpush2.bf16.msra.mxu0 0
      %2285 = vmatprep.subr.bf16.mxu0 0
      %2286 = vmatpush2.bf16.msra.mxu0 0
      %2287 = vmatprep.subr.bf16.mxu0 0
      %2288 = vmatpush2.bf16.msra.mxu0 0
      %2289 = vmatprep.mubr.bf16.mxu0 0
      %2290 = vmatmul.mubr.bf16.gmra.mxu0 %v913
      %v2291 = vpop.f32.mrf.mxu0
      %v2292 = vadd.f32 %v2115, %v2291
      %v2293 = vpop.f32.mrf.mxu0
      %v2294 = vpop.f32.mrf.mxu0
      %v2295 = vadd.f32 %v2118, %v2294
      %v2296 = vpop.f32.mrf.mxu0
      %2297 = vmatprep.mubr.bf16.mxu0 0
      %2298 = vmatmul.mubr.bf16.gmra.mxu0 %v915
      %v2299 = vpop.f32.mrf.mxu0
      %v2300 = vadd.f32 %v2123, %v2299
      %v2301 = vpop.f32.mrf.mxu0
      %v2302 = vpop.f32.mrf.mxu0
      %v2303 = vadd.f32 %v2126, %v2302
      %v2304 = vpop.f32.mrf.mxu0
      %2305 = vmatprep.mubr.bf16.mxu0 0
      %2306 = vmatmul.mubr.bf16.gmra.mxu0 %v917
      %v2307 = vpop.f32.mrf.mxu0
      %v2308 = vadd.f32 %v2131, %v2307
      %v2309 = vpop.f32.mrf.mxu0
      %v2310 = vpop.f32.mrf.mxu0
      %v2311 = vadd.f32 %v2134, %v2310
      %v2312 = vpop.f32.mrf.mxu0
      %2313 = vmatprep.mubr.bf16.mxu0 0
      %2314 = vmatmul.mubr.bf16.gmra.mxu0 %v919
      %v2315 = vpop.f32.mrf.mxu0
      %v2316 = vadd.f32 %v2139, %v2315
      %v2317 = vpop.f32.mrf.mxu0
      %v2318 = vpop.f32.mrf.mxu0
      %v2319 = vadd.f32 %v2142, %v2318
      %v2320 = vpop.f32.mrf.mxu0
      %2321 = vmatprep.mubr.bf16.mxu0 0
      %2322 = vmatmul.mubr.bf16.gmra.mxu0 %v921
      %v2323 = vpop.f32.mrf.mxu0
      %v2324 = vadd.f32 %v2147, %v2323
      %v2325 = vpop.f32.mrf.mxu0
      %v2326 = vpop.f32.mrf.mxu0
      %v2327 = vadd.f32 %v2150, %v2326
      %v2328 = vpop.f32.mrf.mxu0
      %2329 = vmatprep.mubr.bf16.mxu0 0
      %2330 = vmatmul.mubr.bf16.gmra.mxu0 %v923
      %v2331 = vpop.f32.mrf.mxu0
      %v2332 = vadd.f32 %v2155, %v2331
      %v2333 = vpop.f32.mrf.mxu0
      %v2334 = vpop.f32.mrf.mxu0
      %v2335 = vadd.f32 %v2158, %v2334
      %v2336 = vpop.f32.mrf.mxu0
      %2337 = vmatprep.mubr.bf16.mxu0 0
      %2338 = vmatmul.mubr.bf16.gmra.mxu0 %v925
      %v2339 = vpop.f32.mrf.mxu0
      %v2340 = vadd.f32 %v2163, %v2339
      %v2341 = vpop.f32.mrf.mxu0
      %v2342 = vpop.f32.mrf.mxu0
      %v2343 = vadd.f32 %v2166, %v2342
      %v2344 = vpop.f32.mrf.mxu0
      %2345 = vmatprep.mubr.bf16.mxu0 0
      %2346 = vmatmul.mubr.bf16.gmra.mxu0 %v927
      %v2347 = vpop.f32.mrf.mxu0
      %v2348 = vadd.f32 %v2171, %v2347
      %v2349 = vpop.f32.mrf.mxu0
      %v2350 = vpop.f32.mrf.mxu0
      %v2351 = vadd.f32 %v2174, %v2350
      %v2352 = vpop.f32.mrf.mxu0
      %2353 = vmatprep.mubr.bf16.mxu0 0
      %2354 = vmatmul.mubr.bf16.gmra.mxu0 %v929
      %v2355 = vpop.f32.mrf.mxu0
      %v2356 = vadd.f32 %v2179, %v2355
      %v2357 = vpop.f32.mrf.mxu0
      %v2358 = vpop.f32.mrf.mxu0
      %v2359 = vadd.f32 %v2182, %v2358
      %v2360 = vpop.f32.mrf.mxu0
      %2361 = vmatprep.mubr.bf16.mxu0 0
      %2362 = vmatmul.mubr.bf16.gmra.mxu0 %v931
      %v2363 = vpop.f32.mrf.mxu0
      %v2364 = vadd.f32 %v2187, %v2363
      %v2365 = vpop.f32.mrf.mxu0
      %v2366 = vpop.f32.mrf.mxu0
      %v2367 = vadd.f32 %v2190, %v2366
      %v2368 = vpop.f32.mrf.mxu0
      %2369 = vmatprep.mubr.bf16.mxu0 0
      %2370 = vmatmul.mubr.bf16.gmra.mxu0 %v933
      %v2371 = vpop.f32.mrf.mxu0
      %v2372 = vadd.f32 %v2195, %v2371
      %v2373 = vpop.f32.mrf.mxu0
      %v2374 = vpop.f32.mrf.mxu0
      %v2375 = vadd.f32 %v2198, %v2374
      %v2376 = vpop.f32.mrf.mxu0
      %2377 = vmatprep.mubr.bf16.mxu0 0
      %2378 = vmatmul.mubr.bf16.gmra.mxu0 %v935
      %v2379 = vpop.f32.mrf.mxu0
      %v2380 = vadd.f32 %v2203, %v2379
      %v2381 = vpop.f32.mrf.mxu0
      %v2382 = vpop.f32.mrf.mxu0
      %v2383 = vadd.f32 %v2206, %v2382
      %v2384 = vpop.f32.mrf.mxu0
      %2385 = vmatprep.mubr.bf16.mxu0 0
      %2386 = vmatmul.mubr.bf16.gmra.mxu0 %v937
      %v2387 = vpop.f32.mrf.mxu0
      %v2388 = vadd.f32 %v2211, %v2387
      %v2389 = vpop.f32.mrf.mxu0
      %v2390 = vpop.f32.mrf.mxu0
      %v2391 = vadd.f32 %v2214, %v2390
      %v2392 = vpop.f32.mrf.mxu0
      %2393 = vmatprep.mubr.bf16.mxu0 0
      %2394 = vmatmul.mubr.bf16.gmra.mxu0 %v939
      %v2395 = vpop.f32.mrf.mxu0
      %v2396 = vadd.f32 %v2219, %v2395
      %v2397 = vpop.f32.mrf.mxu0
      %v2398 = vpop.f32.mrf.mxu0
      %v2399 = vadd.f32 %v2222, %v2398
      %v2400 = vpop.f32.mrf.mxu0
      %2401 = vmatprep.mubr.bf16.mxu0 0
      %2402 = vmatmul.mubr.bf16.gmra.mxu0 %v941
      %v2403 = vpop.f32.mrf.mxu0
      %v2404 = vadd.f32 %v2227, %v2403
      %v2405 = vpop.f32.mrf.mxu0
      %v2406 = vpop.f32.mrf.mxu0
      %v2407 = vadd.f32 %v2230, %v2406
      %v2408 = vpop.f32.mrf.mxu0
      %2409 = vmatprep.mubr.bf16.mxu0 0
      %2410 = vmatmul.mubr.bf16.gmra.mxu0 %v943
      %v2411 = vpop.f32.mrf.mxu0
      %v2412 = vadd.f32 %v2235, %v2411
      %v2413 = vpop.f32.mrf.mxu0
      %v2414 = vpop.f32.mrf.mxu0
      %v2415 = vadd.f32 %v2238, %v2414
      %v2416 = vpop.f32.mrf.mxu0
      %2417 = vmatprep.mubr.bf16.mxu0 0
      %2418 = vmatmul.mubr.bf16.gmra.mxu0 %v945
      %v2419 = vpop.f32.mrf.mxu0
      %v2420 = vadd.f32 %v2243, %v2419
      %v2421 = vpop.f32.mrf.mxu0
      %v2422 = vpop.f32.mrf.mxu0
      %v2423 = vadd.f32 %v2246, %v2422
      %v2424 = vpop.f32.mrf.mxu0
      %2425 = vmatprep.mubr.bf16.mxu0 0
      %2426 = vmatmul.mubr.bf16.gmra.mxu0 %v947
      %v2427 = vpop.f32.mrf.mxu0
      %v2428 = vadd.f32 %v2251, %v2427
      %v2429 = vpop.f32.mrf.mxu0
      %v2430 = vpop.f32.mrf.mxu0
      %v2431 = vadd.f32 %v2254, %v2430
      %v2432 = vpop.f32.mrf.mxu0
      %2433 = vdwg.mxu0
      %v2434 = vmax.f32 %v2292, 0.0
      %v2435 = vmax.f32 %v2295, 0.0
      %v2436 = vmax.f32 %v2300, 0.0
      %v2437 = vmax.f32 %v2303, 0.0
      %v2438 = vmax.f32 %v2308, 0.0
      %v2439 = vmax.f32 %v2311, 0.0
      %v2440 = vmax.f32 %v2316, 0.0
      %v2441 = vmax.f32 %v2319, 0.0
      %v2442 = vmax.f32 %v2324, 0.0
      %v2443 = vmax.f32 %v2327, 0.0
      %v2444 = vmax.f32 %v2332, 0.0
      %v2445 = vmax.f32 %v2335, 0.0
      %v2446 = vmax.f32 %v2340, 0.0
      %v2447 = vmax.f32 %v2343, 0.0
      %v2448 = vmax.f32 %v2348, 0.0
      %v2449 = vmax.f32 %v2351, 0.0
      %v2450 = vmax.f32 %v2356, 0.0
      %v2451 = vmax.f32 %v2359, 0.0
      %v2452 = vmax.f32 %v2364, 0.0
      %v2453 = vmax.f32 %v2367, 0.0
      %v2454 = vmax.f32 %v2372, 0.0
      %v2455 = vmax.f32 %v2375, 0.0
      %v2456 = vmax.f32 %v2380, 0.0
      %v2457 = vmax.f32 %v2383, 0.0
      %v2458 = vmax.f32 %v2388, 0.0
      %v2459 = vmax.f32 %v2391, 0.0
      %v2460 = vmax.f32 %v2396, 0.0
      %v2461 = vmax.f32 %v2399, 0.0
      %v2462 = vmax.f32 %v2404, 0.0
      %v2463 = vmax.f32 %v2407, 0.0
      %v2464 = vmax.f32 %v2412, 0.0
      %v2465 = vmax.f32 %v2415, 0.0
      %v2466 = vmax.f32 %v2420, 0.0
      %v2467 = vmax.f32 %v2423, 0.0
      %v2468 = vmax.f32 %v2428, 0.0
      %v2469 = vmax.f32 %v2431, 0.0
      %v2506 = vcombine.high %v2434, %v2434
      %v2508 = vunpack.c.l.s4 1983009808
      %v2509 = vunpack.c.0.s8 %v2508
      %v2510 = vlaneseq
      %v2511 = vshrl.u32 %v2510, 7
      %v2512 = vsub.s32 %v2509, %v2511
      %v2513 = vrot.slane %v2434, %v2512
      %v2515 = vunpack.c.l.s4 1983009808
      %v2516 = vunpack.c.0.s8 %v2515
      %v2517 = vlaneseq
      %v2518 = vshrl.u32 %v2517, 7
      %v2519 = vsub.s32 %v2516, %v2518
      %v2520 = vrot.slane %v2506, %v2519
      %v2521 = vcombine.high %v2513, %v2513
      %v2522 = vcombine.high %v2520, %v2520
      %v2523 = vcombine.high %v2435, %v2435
      %v2525 = vunpack.c.l.s4 1983009808
      %v2526 = vunpack.c.0.s8 %v2525
      %v2527 = vlaneseq
      %v2528 = vshrl.u32 %v2527, 7
      %v2529 = vsub.s32 %v2526, %v2528
      %v2530 = vrot.slane %v2435, %v2529
      %v2532 = vunpack.c.l.s4 1983009808
      %v2533 = vunpack.c.0.s8 %v2532
      %v2534 = vlaneseq
      %v2535 = vshrl.u32 %v2534, 7
      %v2536 = vsub.s32 %v2533, %v2535
      %v2537 = vrot.slane %v2523, %v2536
      %v2538 = vcombine.high %v2530, %v2530
      %v2539 = vcombine.high %v2537, %v2537
      %v2540 = vcombine.high %v2436, %v2436
      %v2542 = vunpack.c.l.s4 1983009808
      %v2543 = vunpack.c.0.s8 %v2542
      %v2544 = vlaneseq
      %v2545 = vshrl.u32 %v2544, 7
      %v2546 = vsub.s32 %v2543, %v2545
      %v2547 = vrot.slane %v2436, %v2546
      %v2549 = vunpack.c.l.s4 1983009808
      %v2550 = vunpack.c.0.s8 %v2549
      %v2551 = vlaneseq
      %v2552 = vshrl.u32 %v2551, 7
      %v2553 = vsub.s32 %v2550, %v2552
      %v2554 = vrot.slane %v2540, %v2553
      %v2555 = vcombine.high %v2547, %v2547
      %v2556 = vcombine.high %v2554, %v2554
      %v2557 = vcombine.high %v2437, %v2437
      %v2559 = vunpack.c.l.s4 1983009808
      %v2560 = vunpack.c.0.s8 %v2559
      %v2561 = vlaneseq
      %v2562 = vshrl.u32 %v2561, 7
      %v2563 = vsub.s32 %v2560, %v2562
      %v2564 = vrot.slane %v2437, %v2563
      %v2566 = vunpack.c.l.s4 1983009808
      %v2567 = vunpack.c.0.s8 %v2566
      %v2568 = vlaneseq
      %v2569 = vshrl.u32 %v2568, 7
      %v2570 = vsub.s32 %v2567, %v2569
      %v2571 = vrot.slane %v2557, %v2570
      %v2572 = vcombine.high %v2564, %v2564
      %v2573 = vcombine.high %v2571, %v2571
      %v2574 = vcombine.high %v2438, %v2438
      %v2576 = vunpack.c.l.s4 1983009808
      %v2577 = vunpack.c.0.s8 %v2576
      %v2578 = vlaneseq
      %v2579 = vshrl.u32 %v2578, 7
      %v2580 = vsub.s32 %v2577, %v2579
      %v2581 = vrot.slane %v2438, %v2580
      %v2583 = vunpack.c.l.s4 1983009808
      %v2584 = vunpack.c.0.s8 %v2583
      %v2585 = vlaneseq
      %v2586 = vshrl.u32 %v2585, 7
      %v2587 = vsub.s32 %v2584, %v2586
      %v2588 = vrot.slane %v2574, %v2587
      %v2589 = vcombine.high %v2588, %v2588
      %v2590 = vcombine.high %v2439, %v2439
      %v2592 = vunpack.c.l.s4 1983009808
      %v2593 = vunpack.c.0.s8 %v2592
      %v2594 = vlaneseq
      %v2595 = vshrl.u32 %v2594, 7
      %v2596 = vsub.s32 %v2593, %v2595
      %v2597 = vrot.slane %v2439, %v2596
      %v2599 = vunpack.c.l.s4 1983009808
      %v2600 = vunpack.c.0.s8 %v2599
      %v2601 = vlaneseq
      %v2602 = vshrl.u32 %v2601, 7
      %v2603 = vsub.s32 %v2600, %v2602
      %v2604 = vrot.slane %v2590, %v2603
      %v2605 = vcombine.high %v2597, %v2597
      %v2606 = vcombine.high %v2604, %v2604
      %v2607 = vcombine.high %v2440, %v2440
      %v2609 = vunpack.c.l.s4 1983009808
      %v2610 = vunpack.c.0.s8 %v2609
      %v2611 = vlaneseq
      %v2612 = vshrl.u32 %v2611, 7
      %v2613 = vsub.s32 %v2610, %v2612
      %v2614 = vrot.slane %v2440, %v2613
      %v2616 = vunpack.c.l.s4 1983009808
      %v2617 = vunpack.c.0.s8 %v2616
      %v2618 = vlaneseq
      %v2619 = vshrl.u32 %v2618, 7
      %v2620 = vsub.s32 %v2617, %v2619
      %v2621 = vrot.slane %v2607, %v2620
      %v2622 = vcombine.high %v2614, %v2614
      %v2623 = vcombine.high %v2621, %v2621
      %v2624 = vcombine.high %v2441, %v2441
      %v2626 = vunpack.c.l.s4 1983009808
      %v2627 = vunpack.c.0.s8 %v2626
      %v2628 = vlaneseq
      %v2629 = vshrl.u32 %v2628, 7
      %v2630 = vsub.s32 %v2627, %v2629
      %v2631 = vrot.slane %v2441, %v2630
      %v2633 = vunpack.c.l.s4 1983009808
      %v2634 = vunpack.c.0.s8 %v2633
      %v2635 = vlaneseq
      %v2636 = vshrl.u32 %v2635, 7
      %v2637 = vsub.s32 %v2634, %v2636
      %v2638 = vrot.slane %v2624, %v2637
      %v2639 = vcombine.high %v2631, %v2631
      %v2640 = vcombine.high %v2638, %v2638
      %v2641 = vcombine.high %v2442, %v2442
      %v2643 = vunpack.c.l.s4 1983009808
      %v2644 = vunpack.c.0.s8 %v2643
      %v2645 = vlaneseq
      %v2646 = vshrl.u32 %v2645, 7
      %v2647 = vsub.s32 %v2644, %v2646
      %v2648 = vrot.slane %v2442, %v2647
      %v2650 = vunpack.c.l.s4 1983009808
      %v2651 = vunpack.c.0.s8 %v2650
      %v2652 = vlaneseq
      %v2653 = vshrl.u32 %v2652, 7
      %v2654 = vsub.s32 %v2651, %v2653
      %v2655 = vrot.slane %v2641, %v2654
      %v2656 = vcombine.high %v2648, %v2648
      %v2657 = vcombine.high %v2443, %v2443
      %v2659 = vunpack.c.l.s4 1983009808
      %v2660 = vunpack.c.0.s8 %v2659
      %v2661 = vlaneseq
      %v2662 = vshrl.u32 %v2661, 7
      %v2663 = vsub.s32 %v2660, %v2662
      %v2664 = vrot.slane %v2443, %v2663
      %v2666 = vunpack.c.l.s4 1983009808
      %v2667 = vunpack.c.0.s8 %v2666
      %v2668 = vlaneseq
      %v2669 = vshrl.u32 %v2668, 7
      %v2670 = vsub.s32 %v2667, %v2669
      %v2671 = vrot.slane %v2657, %v2670
      %v2672 = vcombine.high %v2664, %v2664
      %v2673 = vcombine.high %v2671, %v2671
      %v2674 = vcombine.high %v2444, %v2444
      %v2676 = vunpack.c.l.s4 1983009808
      %v2677 = vunpack.c.0.s8 %v2676
      %v2678 = vlaneseq
      %v2679 = vshrl.u32 %v2678, 7
      %v2680 = vsub.s32 %v2677, %v2679
      %v2681 = vrot.slane %v2444, %v2680
      %v2683 = vunpack.c.l.s4 1983009808
      %v2684 = vunpack.c.0.s8 %v2683
      %v2685 = vlaneseq
      %v2686 = vshrl.u32 %v2685, 7
      %v2687 = vsub.s32 %v2684, %v2686
      %v2688 = vrot.slane %v2674, %v2687
      %v2689 = vcombine.high %v2681, %v2681
      %v2690 = vcombine.high %v2688, %v2688
      %v2691 = vcombine.high %v2445, %v2445
      %v2693 = vunpack.c.l.s4 1983009808
      %v2694 = vunpack.c.0.s8 %v2693
      %v2695 = vlaneseq
      %v2696 = vshrl.u32 %v2695, 7
      %v2697 = vsub.s32 %v2694, %v2696
      %v2698 = vrot.slane %v2445, %v2697
      %v2700 = vunpack.c.l.s4 1983009808
      %v2701 = vunpack.c.0.s8 %v2700
      %v2702 = vlaneseq
      %v2703 = vshrl.u32 %v2702, 7
      %v2704 = vsub.s32 %v2701, %v2703
      %v2705 = vrot.slane %v2691, %v2704
      %v2706 = vcombine.high %v2698, %v2698
      %v2707 = vcombine.high %v2705, %v2705
      %v2708 = vcombine.high %v2446, %v2446
      %v2710 = vunpack.c.l.s4 1983009808
      %v2711 = vunpack.c.0.s8 %v2710
      %v2712 = vlaneseq
      %v2713 = vshrl.u32 %v2712, 7
      %v2714 = vsub.s32 %v2711, %v2713
      %v2715 = vrot.slane %v2446, %v2714
      %v2717 = vunpack.c.l.s4 1983009808
      %v2718 = vunpack.c.0.s8 %v2717
      %v2719 = vlaneseq
      %v2720 = vshrl.u32 %v2719, 7
      %v2721 = vsub.s32 %v2718, %v2720
      %v2722 = vrot.slane %v2708, %v2721
      %v2723 = vcombine.high %v2715, %v2715
      %v2724 = vcombine.high %v2722, %v2722
      %v2725 = vcombine.high %v2447, %v2447
      %v2727 = vunpack.c.l.s4 1983009808
      %v2728 = vunpack.c.0.s8 %v2727
      %v2729 = vlaneseq
      %v2730 = vshrl.u32 %v2729, 7
      %v2731 = vsub.s32 %v2728, %v2730
      %v2732 = vrot.slane %v2447, %v2731
      %v2734 = vunpack.c.l.s4 1983009808
      %v2735 = vunpack.c.0.s8 %v2734
      %v2736 = vlaneseq
      %v2737 = vshrl.u32 %v2736, 7
      %v2738 = vsub.s32 %v2735, %v2737
      %v2739 = vrot.slane %v2725, %v2738
      %v2740 = vcombine.high %v2739, %v2739
      %v2741 = vcombine.high %v2448, %v2448
      %v2743 = vunpack.c.l.s4 1983009808
      %v2744 = vunpack.c.0.s8 %v2743
      %v2745 = vlaneseq
      %v2746 = vshrl.u32 %v2745, 7
      %v2747 = vsub.s32 %v2744, %v2746
      %v2748 = vrot.slane %v2448, %v2747
      %v2750 = vunpack.c.l.s4 1983009808
      %v2751 = vunpack.c.0.s8 %v2750
      %v2752 = vlaneseq
      %v2753 = vshrl.u32 %v2752, 7
      %v2754 = vsub.s32 %v2751, %v2753
      %v2755 = vrot.slane %v2741, %v2754
      %v2756 = vcombine.high %v2748, %v2748
      %v2757 = vcombine.high %v2755, %v2755
      %v2758 = vcombine.high %v2449, %v2449
      %v2760 = vunpack.c.l.s4 1983009808
      %v2761 = vunpack.c.0.s8 %v2760
      %v2762 = vlaneseq
      %v2763 = vshrl.u32 %v2762, 7
      %v2764 = vsub.s32 %v2761, %v2763
      %v2765 = vrot.slane %v2449, %v2764
      %v2767 = vunpack.c.l.s4 1983009808
      %v2768 = vunpack.c.0.s8 %v2767
      %v2769 = vlaneseq
      %v2770 = vshrl.u32 %v2769, 7
      %v2771 = vsub.s32 %v2768, %v2770
      %v2772 = vrot.slane %v2758, %v2771
      %v2773 = vcombine.high %v2765, %v2765
      %v2774 = vcombine.high %v2772, %v2772
      %v2775 = vcombine.high %v2450, %v2450
      %v2777 = vunpack.c.l.s4 1983009808
      %v2778 = vunpack.c.0.s8 %v2777
      %v2779 = vlaneseq
      %v2780 = vshrl.u32 %v2779, 7
      %v2781 = vsub.s32 %v2778, %v2780
      %v2782 = vrot.slane %v2450, %v2781
      %v2784 = vunpack.c.l.s4 1983009808
      %v2785 = vunpack.c.0.s8 %v2784
      %v2786 = vlaneseq
      %v2787 = vshrl.u32 %v2786, 7
      %v2788 = vsub.s32 %v2785, %v2787
      %v2789 = vrot.slane %v2775, %v2788
      %v2790 = vcombine.high %v2782, %v2782
      %v2791 = vcombine.high %v2789, %v2789
      %v2792 = vcombine.high %v2451, %v2451
      %v2794 = vunpack.c.l.s4 1983009808
      %v2795 = vunpack.c.0.s8 %v2794
      %v2796 = vlaneseq
      %v2797 = vshrl.u32 %v2796, 7
      %v2798 = vsub.s32 %v2795, %v2797
      %v2799 = vrot.slane %v2451, %v2798
      %v2801 = vunpack.c.l.s4 1983009808
      %v2802 = vunpack.c.0.s8 %v2801
      %v2803 = vlaneseq
      %v2804 = vshrl.u32 %v2803, 7
      %v2805 = vsub.s32 %v2802, %v2804
      %v2806 = vrot.slane %v2792, %v2805
      %v2807 = vcombine.high %v2799, %v2799
      %v2808 = vcombine.high %v2452, %v2452
      %v2810 = vunpack.c.l.s4 1983009808
      %v2811 = vunpack.c.0.s8 %v2810
      %v2812 = vlaneseq
      %v2813 = vshrl.u32 %v2812, 7
      %v2814 = vsub.s32 %v2811, %v2813
      %v2815 = vrot.slane %v2452, %v2814
      %v2817 = vunpack.c.l.s4 1983009808
      %v2818 = vunpack.c.0.s8 %v2817
      %v2819 = vlaneseq
      %v2820 = vshrl.u32 %v2819, 7
      %v2821 = vsub.s32 %v2818, %v2820
      %v2822 = vrot.slane %v2808, %v2821
      %v2823 = vcombine.high %v2815, %v2815
      %v2824 = vcombine.high %v2822, %v2822
      %v2825 = vcombine.high %v2453, %v2453
      %v2827 = vunpack.c.l.s4 1983009808
      %v2828 = vunpack.c.0.s8 %v2827
      %v2829 = vlaneseq
      %v2830 = vshrl.u32 %v2829, 7
      %v2831 = vsub.s32 %v2828, %v2830
      %v2832 = vrot.slane %v2453, %v2831
      %v2834 = vunpack.c.l.s4 1983009808
      %v2835 = vunpack.c.0.s8 %v2834
      %v2836 = vlaneseq
      %v2837 = vshrl.u32 %v2836, 7
      %v2838 = vsub.s32 %v2835, %v2837
      %v2839 = vrot.slane %v2825, %v2838
      %v2840 = vcombine.high %v2832, %v2832
      %v2841 = vcombine.high %v2839, %v2839
      %v2842 = vcombine.high %v2454, %v2454
      %v2844 = vunpack.c.l.s4 1983009808
      %v2845 = vunpack.c.0.s8 %v2844
      %v2846 = vlaneseq
      %v2847 = vshrl.u32 %v2846, 7
      %v2848 = vsub.s32 %v2845, %v2847
      %v2849 = vrot.slane %v2454, %v2848
      %v2851 = vunpack.c.l.s4 1983009808
      %v2852 = vunpack.c.0.s8 %v2851
      %v2853 = vlaneseq
      %v2854 = vshrl.u32 %v2853, 7
      %v2855 = vsub.s32 %v2852, %v2854
      %v2856 = vrot.slane %v2842, %v2855
      %v2857 = vcombine.high %v2849, %v2849
      %v2858 = vcombine.high %v2856, %v2856
      %v2859 = vcombine.high %v2455, %v2455
      %v2861 = vunpack.c.l.s4 1983009808
      %v2862 = vunpack.c.0.s8 %v2861
      %v2863 = vlaneseq
      %v2864 = vshrl.u32 %v2863, 7
      %v2865 = vsub.s32 %v2862, %v2864
      %v2866 = vrot.slane %v2455, %v2865
      %v2868 = vunpack.c.l.s4 1983009808
      %v2869 = vunpack.c.0.s8 %v2868
      %v2870 = vlaneseq
      %v2871 = vshrl.u32 %v2870, 7
      %v2872 = vsub.s32 %v2869, %v2871
      %v2873 = vrot.slane %v2859, %v2872
      %v2874 = vcombine.high %v2866, %v2866
      %v2875 = vcombine.high %v2873, %v2873
      %v2876 = vcombine.high %v2456, %v2456
      %v2878 = vunpack.c.l.s4 1983009808
      %v2879 = vunpack.c.0.s8 %v2878
      %v2880 = vlaneseq
      %v2881 = vshrl.u32 %v2880, 7
      %v2882 = vsub.s32 %v2879, %v2881
      %v2883 = vrot.slane %v2456, %v2882
      %v2885 = vunpack.c.l.s4 1983009808
      %v2886 = vunpack.c.0.s8 %v2885
      %v2887 = vlaneseq
      %v2888 = vshrl.u32 %v2887, 7
      %v2889 = vsub.s32 %v2886, %v2888
      %v2890 = vrot.slane %v2876, %v2889
      %v2891 = vcombine.high %v2890, %v2890
      %v2892 = vcombine.high %v2457, %v2457
      %v2894 = vunpack.c.l.s4 1983009808
      %v2895 = vunpack.c.0.s8 %v2894
      %v2896 = vlaneseq
      %v2897 = vshrl.u32 %v2896, 7
      %v2898 = vsub.s32 %v2895, %v2897
      %v2899 = vrot.slane %v2457, %v2898
      %v2901 = vunpack.c.l.s4 1983009808
      %v2902 = vunpack.c.0.s8 %v2901
      %v2903 = vlaneseq
      %v2904 = vshrl.u32 %v2903, 7
      %v2905 = vsub.s32 %v2902, %v2904
      %v2906 = vrot.slane %v2892, %v2905
      %v2907 = vcombine.high %v2899, %v2899
      %v2908 = vcombine.high %v2906, %v2906
      %v2909 = vcombine.high %v2458, %v2458
      %v2911 = vunpack.c.l.s4 1983009808
      %v2912 = vunpack.c.0.s8 %v2911
      %v2913 = vlaneseq
      %v2914 = vshrl.u32 %v2913, 7
      %v2915 = vsub.s32 %v2912, %v2914
      %v2916 = vrot.slane %v2458, %v2915
      %v2918 = vunpack.c.l.s4 1983009808
      %v2919 = vunpack.c.0.s8 %v2918
      %v2920 = vlaneseq
      %v2921 = vshrl.u32 %v2920, 7
      %v2922 = vsub.s32 %v2919, %v2921
      %v2923 = vrot.slane %v2909, %v2922
      %v2924 = vcombine.high %v2916, %v2916
      %v2925 = vcombine.high %v2923, %v2923
      %v2926 = vcombine.high %v2459, %v2459
      %v2928 = vunpack.c.l.s4 1983009808
      %v2929 = vunpack.c.0.s8 %v2928
      %v2930 = vlaneseq
      %v2931 = vshrl.u32 %v2930, 7
      %v2932 = vsub.s32 %v2929, %v2931
      %v2933 = vrot.slane %v2459, %v2932
      %v2935 = vunpack.c.l.s4 1983009808
      %v2936 = vunpack.c.0.s8 %v2935
      %v2937 = vlaneseq
      %v2938 = vshrl.u32 %v2937, 7
      %v2939 = vsub.s32 %v2936, %v2938
      %v2940 = vrot.slane %v2926, %v2939
      %v2941 = vcombine.high %v2933, %v2933
      %v2942 = vcombine.high %v2940, %v2940
      %v2943 = vcombine.high %v2460, %v2460
      %v2945 = vunpack.c.l.s4 1983009808
      %v2946 = vunpack.c.0.s8 %v2945
      %v2947 = vlaneseq
      %v2948 = vshrl.u32 %v2947, 7
      %v2949 = vsub.s32 %v2946, %v2948
      %v2950 = vrot.slane %v2460, %v2949
      %v2952 = vunpack.c.l.s4 1983009808
      %v2953 = vunpack.c.0.s8 %v2952
      %v2954 = vlaneseq
      %v2955 = vshrl.u32 %v2954, 7
      %v2956 = vsub.s32 %v2953, %v2955
      %v2957 = vrot.slane %v2943, %v2956
      %v2958 = vcombine.high %v2950, %v2950
      %v2959 = vcombine.high %v2461, %v2461
      %v2961 = vunpack.c.l.s4 1983009808
      %v2962 = vunpack.c.0.s8 %v2961
      %v2963 = vlaneseq
      %v2964 = vshrl.u32 %v2963, 7
      %v2965 = vsub.s32 %v2962, %v2964
      %v2966 = vrot.slane %v2461, %v2965
      %v2968 = vunpack.c.l.s4 1983009808
      %v2969 = vunpack.c.0.s8 %v2968
      %v2970 = vlaneseq
      %v2971 = vshrl.u32 %v2970, 7
      %v2972 = vsub.s32 %v2969, %v2971
      %v2973 = vrot.slane %v2959, %v2972
      %v2974 = vcombine.high %v2966, %v2966
      %v2975 = vcombine.high %v2973, %v2973
      %v2976 = vcombine.high %v2462, %v2462
      %v2978 = vunpack.c.l.s4 1983009808
      %v2979 = vunpack.c.0.s8 %v2978
      %v2980 = vlaneseq
      %v2981 = vshrl.u32 %v2980, 7
      %v2982 = vsub.s32 %v2979, %v2981
      %v2983 = vrot.slane %v2462, %v2982
      %v2985 = vunpack.c.l.s4 1983009808
      %v2986 = vunpack.c.0.s8 %v2985
      %v2987 = vlaneseq
      %v2988 = vshrl.u32 %v2987, 7
      %v2989 = vsub.s32 %v2986, %v2988
      %v2990 = vrot.slane %v2976, %v2989
      %v2991 = vcombine.high %v2983, %v2983
      %v2992 = vcombine.high %v2990, %v2990
      %v2993 = vcombine.high %v2463, %v2463
      %v2995 = vunpack.c.l.s4 1983009808
      %v2996 = vunpack.c.0.s8 %v2995
      %v2997 = vlaneseq
      %v2998 = vshrl.u32 %v2997, 7
      %v2999 = vsub.s32 %v2996, %v2998
      %v3000 = vrot.slane %v2463, %v2999
      %v3002 = vunpack.c.l.s4 1983009808
      %v3003 = vunpack.c.0.s8 %v3002
      %v3004 = vlaneseq
      %v3005 = vshrl.u32 %v3004, 7
      %v3006 = vsub.s32 %v3003, %v3005
      %v3007 = vrot.slane %v2993, %v3006
      %v3008 = vcombine.high %v3000, %v3000
      %v3009 = vcombine.high %v3007, %v3007
      %v3010 = vcombine.high %v2464, %v2464
      %v3012 = vunpack.c.l.s4 1983009808
      %v3013 = vunpack.c.0.s8 %v3012
      %v3014 = vlaneseq
      %v3015 = vshrl.u32 %v3014, 7
      %v3016 = vsub.s32 %v3013, %v3015
      %v3017 = vrot.slane %v2464, %v3016
      %v3019 = vunpack.c.l.s4 1983009808
      %v3020 = vunpack.c.0.s8 %v3019
      %v3021 = vlaneseq
      %v3022 = vshrl.u32 %v3021, 7
      %v3023 = vsub.s32 %v3020, %v3022
      %v3024 = vrot.slane %v3010, %v3023
      %v3025 = vcombine.high %v3017, %v3017
      %v3026 = vcombine.high %v3024, %v3024
      %v3027 = vcombine.high %v2465, %v2465
      %v3029 = vunpack.c.l.s4 1983009808
      %v3030 = vunpack.c.0.s8 %v3029
      %v3031 = vlaneseq
      %v3032 = vshrl.u32 %v3031, 7
      %v3033 = vsub.s32 %v3030, %v3032
      %v3034 = vrot.slane %v2465, %v3033
      %v3036 = vunpack.c.l.s4 1983009808
      %v3037 = vunpack.c.0.s8 %v3036
      %v3038 = vlaneseq
      %v3039 = vshrl.u32 %v3038, 7
      %v3040 = vsub.s32 %v3037, %v3039
      %v3041 = vrot.slane %v3027, %v3040
      %v3042 = vcombine.high %v3041, %v3041
      %v3043 = vcombine.high %v2466, %v2466
      %v3045 = vunpack.c.l.s4 1983009808
      %v3046 = vunpack.c.0.s8 %v3045
      %v3047 = vlaneseq
      %v3048 = vshrl.u32 %v3047, 7
      %v3049 = vsub.s32 %v3046, %v3048
      %v3050 = vrot.slane %v2466, %v3049
      %v3052 = vunpack.c.l.s4 1983009808
      %v3053 = vunpack.c.0.s8 %v3052
      %v3054 = vlaneseq
      %v3055 = vshrl.u32 %v3054, 7
      %v3056 = vsub.s32 %v3053, %v3055
      %v3057 = vrot.slane %v3043, %v3056
      %v3058 = vcombine.high %v3050, %v3050
      %v3059 = vcombine.high %v3057, %v3057
      %v3060 = vcombine.high %v2467, %v2467
      %v3062 = vunpack.c.l.s4 1983009808
      %v3063 = vunpack.c.0.s8 %v3062
      %v3064 = vlaneseq
      %v3065 = vshrl.u32 %v3064, 7
      %v3066 = vsub.s32 %v3063, %v3065
      %v3067 = vrot.slane %v2467, %v3066
      %v3069 = vunpack.c.l.s4 1983009808
      %v3070 = vunpack.c.0.s8 %v3069
      %v3071 = vlaneseq
      %v3072 = vshrl.u32 %v3071, 7
      %v3073 = vsub.s32 %v3070, %v3072
      %v3074 = vrot.slane %v3060, %v3073
      %v3075 = vcombine.high %v3067, %v3067
      %v3076 = vcombine.high %v3074, %v3074
      %v3077 = vcombine.high %v2468, %v2468
      %v3079 = vunpack.c.l.s4 1983009808
      %v3080 = vunpack.c.0.s8 %v3079
      %v3081 = vlaneseq
      %v3082 = vshrl.u32 %v3081, 7
      %v3083 = vsub.s32 %v3080, %v3082
      %v3084 = vrot.slane %v2468, %v3083
      %v3086 = vunpack.c.l.s4 1983009808
      %v3087 = vunpack.c.0.s8 %v3086
      %v3088 = vlaneseq
      %v3089 = vshrl.u32 %v3088, 7
      %v3090 = vsub.s32 %v3087, %v3089
      %v3091 = vrot.slane %v3077, %v3090
      %v3092 = vcombine.high %v3084, %v3084
      %v3093 = vcombine.high %v3091, %v3091
      %v3094 = vcombine.high %v2469, %v2469
      %v3096 = vunpack.c.l.s4 1983009808
      %v3097 = vunpack.c.0.s8 %v3096
      %v3098 = vlaneseq
      %v3099 = vshrl.u32 %v3098, 7
      %v3100 = vsub.s32 %v3097, %v3099
      %v3101 = vrot.slane %v2469, %v3100
      %v3103 = vunpack.c.l.s4 1983009808
      %v3104 = vunpack.c.0.s8 %v3103
      %v3105 = vlaneseq
      %v3106 = vshrl.u32 %v3105, 7
      %v3107 = vsub.s32 %v3104, %v3106
      %v3108 = vrot.slane %v3094, %v3107
      %v3109 = vcombine.high %v3101, %v3101
      %v3110 = vcombine.low %v2513, %v2521
      %v3111 = vcombine.low %v2520, %v2522
      %v3113 = vunpack.c.l.s4 1983009808
      %v3114 = vunpack.c.0.s8 %v3113
      %v3115 = vlaneseq
      %v3116 = vshrl.u32 %v3115, 7
      %v3117 = vsub.s32 %v3114, %v3116
      %v3118 = vrot.slane %v3110, %v3117
      %v3120 = vunpack.c.l.s4 1983009808
      %v3121 = vunpack.c.0.s8 %v3120
      %v3122 = vlaneseq
      %v3123 = vshrl.u32 %v3122, 7
      %v3124 = vsub.s32 %v3121, %v3123
      %v3125 = vrot.slane %v3111, %v3124
      %v3126 = vcombine.low %v3118, %v3125
      %v3127 = vcombine.low %v2530, %v2538
      %v3128 = vcombine.low %v2537, %v2539
      %v3130 = vunpack.c.l.s4 1983009808
      %v3131 = vunpack.c.0.s8 %v3130
      %v3132 = vlaneseq
      %v3133 = vshrl.u32 %v3132, 7
      %v3134 = vsub.s32 %v3131, %v3133
      %v3135 = vrot.slane %v3127, %v3134
      %v3137 = vunpack.c.l.s4 1983009808
      %v3138 = vunpack.c.0.s8 %v3137
      %v3139 = vlaneseq
      %v3140 = vshrl.u32 %v3139, 7
      %v3141 = vsub.s32 %v3138, %v3140
      %v3142 = vrot.slane %v3128, %v3141
      %v3143 = vcombine.low %v3135, %v3142
      %v3144 = vcombine.low %v2555, %v2554
      %v3145 = vcombine.low %v2556, %v2564
      %v3147 = vunpack.c.l.s4 1983009808
      %v3148 = vunpack.c.0.s8 %v3147
      %v3149 = vlaneseq
      %v3150 = vshrl.u32 %v3149, 7
      %v3151 = vsub.s32 %v3148, %v3150
      %v3152 = vrot.slane %v3144, %v3151
      %v3154 = vunpack.c.l.s4 1983009808
      %v3155 = vunpack.c.0.s8 %v3154
      %v3156 = vlaneseq
      %v3157 = vshrl.u32 %v3156, 7
      %v3158 = vsub.s32 %v3155, %v3157
      %v3159 = vrot.slane %v3145, %v3158
      %v3160 = vcombine.low %v3152, %v3159
      %v3161 = vcombine.low %v2572, %v2571
      %v3162 = vcombine.low %v2573, %v2581
      %v3164 = vunpack.c.l.s4 1983009808
      %v3165 = vunpack.c.0.s8 %v3164
      %v3166 = vlaneseq
      %v3167 = vshrl.u32 %v3166, 7
      %v3168 = vsub.s32 %v3165, %v3167
      %v3169 = vrot.slane %v3161, %v3168
      %v3171 = vunpack.c.l.s4 1983009808
      %v3172 = vunpack.c.0.s8 %v3171
      %v3173 = vlaneseq
      %v3174 = vshrl.u32 %v3173, 7
      %v3175 = vsub.s32 %v3172, %v3174
      %v3176 = vrot.slane %v3162, %v3175
      %v3177 = vcombine.low %v3169, %v3176
      %v3178 = vcombine.low %v2588, %v2589
      %v3179 = vcombine.low %v2597, %v2605
      %v3181 = vunpack.c.l.s4 1983009808
      %v3182 = vunpack.c.0.s8 %v3181
      %v3183 = vlaneseq
      %v3184 = vshrl.u32 %v3183, 7
      %v3185 = vsub.s32 %v3182, %v3184
      %v3186 = vrot.slane %v3178, %v3185
      %v3188 = vunpack.c.l.s4 1983009808
      %v3189 = vunpack.c.0.s8 %v3188
      %v3190 = vlaneseq
      %v3191 = vshrl.u32 %v3190, 7
      %v3192 = vsub.s32 %v3189, %v3191
      %v3193 = vrot.slane %v3179, %v3192
      %v3194 = vcombine.low %v3186, %v3193
      %v3195 = vcombine.low %v2604, %v2606
      %v3196 = vcombine.low %v2614, %v2622
      %v3198 = vunpack.c.l.s4 1983009808
      %v3199 = vunpack.c.0.s8 %v3198
      %v3200 = vlaneseq
      %v3201 = vshrl.u32 %v3200, 7
      %v3202 = vsub.s32 %v3199, %v3201
      %v3203 = vrot.slane %v3195, %v3202
      %v3205 = vunpack.c.l.s4 1983009808
      %v3206 = vunpack.c.0.s8 %v3205
      %v3207 = vlaneseq
      %v3208 = vshrl.u32 %v3207, 7
      %v3209 = vsub.s32 %v3206, %v3208
      %v3210 = vrot.slane %v3196, %v3209
      %v3211 = vcombine.low %v3203, %v3210
      %v3212 = vcombine.low %v2623, %v2631
      %v3213 = vcombine.low %v2639, %v2638
      %v3215 = vunpack.c.l.s4 1983009808
      %v3216 = vunpack.c.0.s8 %v3215
      %v3217 = vlaneseq
      %v3218 = vshrl.u32 %v3217, 7
      %v3219 = vsub.s32 %v3216, %v3218
      %v3220 = vrot.slane %v3212, %v3219
      %v3222 = vunpack.c.l.s4 1983009808
      %v3223 = vunpack.c.0.s8 %v3222
      %v3224 = vlaneseq
      %v3225 = vshrl.u32 %v3224, 7
      %v3226 = vsub.s32 %v3223, %v3225
      %v3227 = vrot.slane %v3213, %v3226
      %v3228 = vcombine.low %v3220, %v3227
      %v3229 = vcombine.low %v2640, %v2648
      %v3230 = vcombine.low %v2656, %v2655
      %v3232 = vunpack.c.l.s4 1983009808
      %v3233 = vunpack.c.0.s8 %v3232
      %v3234 = vlaneseq
      %v3235 = vshrl.u32 %v3234, 7
      %v3236 = vsub.s32 %v3233, %v3235
      %v3237 = vrot.slane %v3229, %v3236
      %v3239 = vunpack.c.l.s4 1983009808
      %v3240 = vunpack.c.0.s8 %v3239
      %v3241 = vlaneseq
      %v3242 = vshrl.u32 %v3241, 7
      %v3243 = vsub.s32 %v3240, %v3242
      %v3244 = vrot.slane %v3230, %v3243
      %v3245 = vcombine.low %v3237, %v3244
      %v3246 = vcombine.low %v2664, %v2672
      %v3247 = vcombine.low %v2671, %v2673
      %v3249 = vunpack.c.l.s4 1983009808
      %v3250 = vunpack.c.0.s8 %v3249
      %v3251 = vlaneseq
      %v3252 = vshrl.u32 %v3251, 7
      %v3253 = vsub.s32 %v3250, %v3252
      %v3254 = vrot.slane %v3246, %v3253
      %v3256 = vunpack.c.l.s4 1983009808
      %v3257 = vunpack.c.0.s8 %v3256
      %v3258 = vlaneseq
      %v3259 = vshrl.u32 %v3258, 7
      %v3260 = vsub.s32 %v3257, %v3259
      %v3261 = vrot.slane %v3247, %v3260
      %v3262 = vcombine.low %v3254, %v3261
      %v3263 = vcombine.low %v2681, %v2689
      %v3264 = vcombine.low %v2688, %v2690
      %v3266 = vunpack.c.l.s4 1983009808
      %v3267 = vunpack.c.0.s8 %v3266
      %v3268 = vlaneseq
      %v3269 = vshrl.u32 %v3268, 7
      %v3270 = vsub.s32 %v3267, %v3269
      %v3271 = vrot.slane %v3263, %v3270
      %v3273 = vunpack.c.l.s4 1983009808
      %v3274 = vunpack.c.0.s8 %v3273
      %v3275 = vlaneseq
      %v3276 = vshrl.u32 %v3275, 7
      %v3277 = vsub.s32 %v3274, %v3276
      %v3278 = vrot.slane %v3264, %v3277
      %v3279 = vcombine.low %v3271, %v3278
      %v3280 = vcombine.low %v2706, %v2705
      %v3281 = vcombine.low %v2707, %v2715
      %v3283 = vunpack.c.l.s4 1983009808
      %v3284 = vunpack.c.0.s8 %v3283
      %v3285 = vlaneseq
      %v3286 = vshrl.u32 %v3285, 7
      %v3287 = vsub.s32 %v3284, %v3286
      %v3288 = vrot.slane %v3280, %v3287
      %v3290 = vunpack.c.l.s4 1983009808
      %v3291 = vunpack.c.0.s8 %v3290
      %v3292 = vlaneseq
      %v3293 = vshrl.u32 %v3292, 7
      %v3294 = vsub.s32 %v3291, %v3293
      %v3295 = vrot.slane %v3281, %v3294
      %v3296 = vcombine.low %v3288, %v3295
      %v3297 = vcombine.low %v2723, %v2722
      %v3298 = vcombine.low %v2724, %v2732
      %v3300 = vunpack.c.l.s4 1983009808
      %v3301 = vunpack.c.0.s8 %v3300
      %v3302 = vlaneseq
      %v3303 = vshrl.u32 %v3302, 7
      %v3304 = vsub.s32 %v3301, %v3303
      %v3305 = vrot.slane %v3297, %v3304
      %v3307 = vunpack.c.l.s4 1983009808
      %v3308 = vunpack.c.0.s8 %v3307
      %v3309 = vlaneseq
      %v3310 = vshrl.u32 %v3309, 7
      %v3311 = vsub.s32 %v3308, %v3310
      %v3312 = vrot.slane %v3298, %v3311
      %v3313 = vcombine.low %v3305, %v3312
      %v3314 = vcombine.low %v2739, %v2740
      %v3315 = vcombine.low %v2748, %v2756
      %v3317 = vunpack.c.l.s4 1983009808
      %v3318 = vunpack.c.0.s8 %v3317
      %v3319 = vlaneseq
      %v3320 = vshrl.u32 %v3319, 7
      %v3321 = vsub.s32 %v3318, %v3320
      %v3322 = vrot.slane %v3314, %v3321
      %v3324 = vunpack.c.l.s4 1983009808
      %v3325 = vunpack.c.0.s8 %v3324
      %v3326 = vlaneseq
      %v3327 = vshrl.u32 %v3326, 7
      %v3328 = vsub.s32 %v3325, %v3327
      %v3329 = vrot.slane %v3315, %v3328
      %v3330 = vcombine.low %v3322, %v3329
      %v3331 = vcombine.low %v2755, %v2757
      %v3332 = vcombine.low %v2765, %v2773
      %v3334 = vunpack.c.l.s4 1983009808
      %v3335 = vunpack.c.0.s8 %v3334
      %v3336 = vlaneseq
      %v3337 = vshrl.u32 %v3336, 7
      %v3338 = vsub.s32 %v3335, %v3337
      %v3339 = vrot.slane %v3331, %v3338
      %v3341 = vunpack.c.l.s4 1983009808
      %v3342 = vunpack.c.0.s8 %v3341
      %v3343 = vlaneseq
      %v3344 = vshrl.u32 %v3343, 7
      %v3345 = vsub.s32 %v3342, %v3344
      %v3346 = vrot.slane %v3332, %v3345
      %v3347 = vcombine.low %v3339, %v3346
      %v3348 = vcombine.low %v2774, %v2782
      %v3349 = vcombine.low %v2790, %v2789
      %v3351 = vunpack.c.l.s4 1983009808
      %v3352 = vunpack.c.0.s8 %v3351
      %v3353 = vlaneseq
      %v3354 = vshrl.u32 %v3353, 7
      %v3355 = vsub.s32 %v3352, %v3354
      %v3356 = vrot.slane %v3348, %v3355
      %v3358 = vunpack.c.l.s4 1983009808
      %v3359 = vunpack.c.0.s8 %v3358
      %v3360 = vlaneseq
      %v3361 = vshrl.u32 %v3360, 7
      %v3362 = vsub.s32 %v3359, %v3361
      %v3363 = vrot.slane %v3349, %v3362
      %v3364 = vcombine.low %v3356, %v3363
      %v3365 = vcombine.low %v2791, %v2799
      %v3366 = vcombine.low %v2807, %v2806
      %v3368 = vunpack.c.l.s4 1983009808
      %v3369 = vunpack.c.0.s8 %v3368
      %v3370 = vlaneseq
      %v3371 = vshrl.u32 %v3370, 7
      %v3372 = vsub.s32 %v3369, %v3371
      %v3373 = vrot.slane %v3365, %v3372
      %v3375 = vunpack.c.l.s4 1983009808
      %v3376 = vunpack.c.0.s8 %v3375
      %v3377 = vlaneseq
      %v3378 = vshrl.u32 %v3377, 7
      %v3379 = vsub.s32 %v3376, %v3378
      %v3380 = vrot.slane %v3366, %v3379
      %v3381 = vcombine.low %v3373, %v3380
      %v3382 = vcombine.low %v2815, %v2823
      %v3383 = vcombine.low %v2822, %v2824
      %v3385 = vunpack.c.l.s4 1983009808
      %v3386 = vunpack.c.0.s8 %v3385
      %v3387 = vlaneseq
      %v3388 = vshrl.u32 %v3387, 7
      %v3389 = vsub.s32 %v3386, %v3388
      %v3390 = vrot.slane %v3382, %v3389
      %v3392 = vunpack.c.l.s4 1983009808
      %v3393 = vunpack.c.0.s8 %v3392
      %v3394 = vlaneseq
      %v3395 = vshrl.u32 %v3394, 7
      %v3396 = vsub.s32 %v3393, %v3395
      %v3397 = vrot.slane %v3383, %v3396
      %v3398 = vcombine.low %v3390, %v3397
      %v3399 = vcombine.low %v2832, %v2840
      %v3400 = vcombine.low %v2839, %v2841
      %v3402 = vunpack.c.l.s4 1983009808
      %v3403 = vunpack.c.0.s8 %v3402
      %v3404 = vlaneseq
      %v3405 = vshrl.u32 %v3404, 7
      %v3406 = vsub.s32 %v3403, %v3405
      %v3407 = vrot.slane %v3399, %v3406
      %v3409 = vunpack.c.l.s4 1983009808
      %v3410 = vunpack.c.0.s8 %v3409
      %v3411 = vlaneseq
      %v3412 = vshrl.u32 %v3411, 7
      %v3413 = vsub.s32 %v3410, %v3412
      %v3414 = vrot.slane %v3400, %v3413
      %v3415 = vcombine.low %v3407, %v3414
      %v3416 = vcombine.low %v2857, %v2856
      %v3417 = vcombine.low %v2858, %v2866
      %v3419 = vunpack.c.l.s4 1983009808
      %v3420 = vunpack.c.0.s8 %v3419
      %v3421 = vlaneseq
      %v3422 = vshrl.u32 %v3421, 7
      %v3423 = vsub.s32 %v3420, %v3422
      %v3424 = vrot.slane %v3416, %v3423
      %v3426 = vunpack.c.l.s4 1983009808
      %v3427 = vunpack.c.0.s8 %v3426
      %v3428 = vlaneseq
      %v3429 = vshrl.u32 %v3428, 7
      %v3430 = vsub.s32 %v3427, %v3429
      %v3431 = vrot.slane %v3417, %v3430
      %v3432 = vcombine.low %v3424, %v3431
      %v3433 = vcombine.low %v2874, %v2873
      %v3434 = vcombine.low %v2875, %v2883
      %v3436 = vunpack.c.l.s4 1983009808
      %v3437 = vunpack.c.0.s8 %v3436
      %v3438 = vlaneseq
      %v3439 = vshrl.u32 %v3438, 7
      %v3440 = vsub.s32 %v3437, %v3439
      %v3441 = vrot.slane %v3433, %v3440
      %v3443 = vunpack.c.l.s4 1983009808
      %v3444 = vunpack.c.0.s8 %v3443
      %v3445 = vlaneseq
      %v3446 = vshrl.u32 %v3445, 7
      %v3447 = vsub.s32 %v3444, %v3446
      %v3448 = vrot.slane %v3434, %v3447
      %v3449 = vcombine.low %v3441, %v3448
      %v3450 = vcombine.low %v2890, %v2891
      %v3451 = vcombine.low %v2899, %v2907
      %v3453 = vunpack.c.l.s4 1983009808
      %v3454 = vunpack.c.0.s8 %v3453
      %v3455 = vlaneseq
      %v3456 = vshrl.u32 %v3455, 7
      %v3457 = vsub.s32 %v3454, %v3456
      %v3458 = vrot.slane %v3450, %v3457
      %v3460 = vunpack.c.l.s4 1983009808
      %v3461 = vunpack.c.0.s8 %v3460
      %v3462 = vlaneseq
      %v3463 = vshrl.u32 %v3462, 7
      %v3464 = vsub.s32 %v3461, %v3463
      %v3465 = vrot.slane %v3451, %v3464
      %v3466 = vcombine.low %v3458, %v3465
      %v3467 = vcombine.low %v2906, %v2908
      %v3468 = vcombine.low %v2916, %v2924
      %v3470 = vunpack.c.l.s4 1983009808
      %v3471 = vunpack.c.0.s8 %v3470
      %v3472 = vlaneseq
      %v3473 = vshrl.u32 %v3472, 7
      %v3474 = vsub.s32 %v3471, %v3473
      %v3475 = vrot.slane %v3467, %v3474
      %v3477 = vunpack.c.l.s4 1983009808
      %v3478 = vunpack.c.0.s8 %v3477
      %v3479 = vlaneseq
      %v3480 = vshrl.u32 %v3479, 7
      %v3481 = vsub.s32 %v3478, %v3480
      %v3482 = vrot.slane %v3468, %v3481
      %v3483 = vcombine.low %v3475, %v3482
      %v3484 = vcombine.low %v2925, %v2933
      %v3485 = vcombine.low %v2941, %v2940
      %v3487 = vunpack.c.l.s4 1983009808
      %v3488 = vunpack.c.0.s8 %v3487
      %v3489 = vlaneseq
      %v3490 = vshrl.u32 %v3489, 7
      %v3491 = vsub.s32 %v3488, %v3490
      %v3492 = vrot.slane %v3484, %v3491
      %v3494 = vunpack.c.l.s4 1983009808
      %v3495 = vunpack.c.0.s8 %v3494
      %v3496 = vlaneseq
      %v3497 = vshrl.u32 %v3496, 7
      %v3498 = vsub.s32 %v3495, %v3497
      %v3499 = vrot.slane %v3485, %v3498
      %v3500 = vcombine.low %v3492, %v3499
      %v3501 = vcombine.low %v2942, %v2950
      %v3502 = vcombine.low %v2958, %v2957
      %v3504 = vunpack.c.l.s4 1983009808
      %v3505 = vunpack.c.0.s8 %v3504
      %v3506 = vlaneseq
      %v3507 = vshrl.u32 %v3506, 7
      %v3508 = vsub.s32 %v3505, %v3507
      %v3509 = vrot.slane %v3501, %v3508
      %v3511 = vunpack.c.l.s4 1983009808
      %v3512 = vunpack.c.0.s8 %v3511
      %v3513 = vlaneseq
      %v3514 = vshrl.u32 %v3513, 7
      %v3515 = vsub.s32 %v3512, %v3514
      %v3516 = vrot.slane %v3502, %v3515
      %v3517 = vcombine.low %v3509, %v3516
      %v3518 = vcombine.low %v2966, %v2974
      %v3519 = vcombine.low %v2973, %v2975
      %v3521 = vunpack.c.l.s4 1983009808
      %v3522 = vunpack.c.0.s8 %v3521
      %v3523 = vlaneseq
      %v3524 = vshrl.u32 %v3523, 7
      %v3525 = vsub.s32 %v3522, %v3524
      %v3526 = vrot.slane %v3518, %v3525
      %v3528 = vunpack.c.l.s4 1983009808
      %v3529 = vunpack.c.0.s8 %v3528
      %v3530 = vlaneseq
      %v3531 = vshrl.u32 %v3530, 7
      %v3532 = vsub.s32 %v3529, %v3531
      %v3533 = vrot.slane %v3519, %v3532
      %v3534 = vcombine.low %v3526, %v3533
      %v3535 = vcombine.low %v2983, %v2991
      %v3536 = vcombine.low %v2990, %v2992
      %v3538 = vunpack.c.l.s4 1983009808
      %v3539 = vunpack.c.0.s8 %v3538
      %v3540 = vlaneseq
      %v3541 = vshrl.u32 %v3540, 7
      %v3542 = vsub.s32 %v3539, %v3541
      %v3543 = vrot.slane %v3535, %v3542
      %v3545 = vunpack.c.l.s4 1983009808
      %v3546 = vunpack.c.0.s8 %v3545
      %v3547 = vlaneseq
      %v3548 = vshrl.u32 %v3547, 7
      %v3549 = vsub.s32 %v3546, %v3548
      %v3550 = vrot.slane %v3536, %v3549
      %v3551 = vcombine.low %v3543, %v3550
      %v3552 = vcombine.low %v3008, %v3007
      %v3553 = vcombine.low %v3009, %v3017
      %v3555 = vunpack.c.l.s4 1983009808
      %v3556 = vunpack.c.0.s8 %v3555
      %v3557 = vlaneseq
      %v3558 = vshrl.u32 %v3557, 7
      %v3559 = vsub.s32 %v3556, %v3558
      %v3560 = vrot.slane %v3552, %v3559
      %v3562 = vunpack.c.l.s4 1983009808
      %v3563 = vunpack.c.0.s8 %v3562
      %v3564 = vlaneseq
      %v3565 = vshrl.u32 %v3564, 7
      %v3566 = vsub.s32 %v3563, %v3565
      %v3567 = vrot.slane %v3553, %v3566
      %v3568 = vcombine.low %v3560, %v3567
      %v3569 = vcombine.low %v3025, %v3024
      %v3570 = vcombine.low %v3026, %v3034
      %v3572 = vunpack.c.l.s4 1983009808
      %v3573 = vunpack.c.0.s8 %v3572
      %v3574 = vlaneseq
      %v3575 = vshrl.u32 %v3574, 7
      %v3576 = vsub.s32 %v3573, %v3575
      %v3577 = vrot.slane %v3569, %v3576
      %v3579 = vunpack.c.l.s4 1983009808
      %v3580 = vunpack.c.0.s8 %v3579
      %v3581 = vlaneseq
      %v3582 = vshrl.u32 %v3581, 7
      %v3583 = vsub.s32 %v3580, %v3582
      %v3584 = vrot.slane %v3570, %v3583
      %v3585 = vcombine.low %v3577, %v3584
      %v3586 = vcombine.low %v3041, %v3042
      %v3587 = vcombine.low %v3050, %v3058
      %v3589 = vunpack.c.l.s4 1983009808
      %v3590 = vunpack.c.0.s8 %v3589
      %v3591 = vlaneseq
      %v3592 = vshrl.u32 %v3591, 7
      %v3593 = vsub.s32 %v3590, %v3592
      %v3594 = vrot.slane %v3586, %v3593
      %v3596 = vunpack.c.l.s4 1983009808
      %v3597 = vunpack.c.0.s8 %v3596
      %v3598 = vlaneseq
      %v3599 = vshrl.u32 %v3598, 7
      %v3600 = vsub.s32 %v3597, %v3599
      %v3601 = vrot.slane %v3587, %v3600
      %v3602 = vcombine.low %v3594, %v3601
      %v3603 = vcombine.low %v3057, %v3059
      %v3604 = vcombine.low %v3067, %v3075
      %v3606 = vunpack.c.l.s4 1983009808
      %v3607 = vunpack.c.0.s8 %v3606
      %v3608 = vlaneseq
      %v3609 = vshrl.u32 %v3608, 7
      %v3610 = vsub.s32 %v3607, %v3609
      %v3611 = vrot.slane %v3603, %v3610
      %v3613 = vunpack.c.l.s4 1983009808
      %v3614 = vunpack.c.0.s8 %v3613
      %v3615 = vlaneseq
      %v3616 = vshrl.u32 %v3615, 7
      %v3617 = vsub.s32 %v3614, %v3616
      %v3618 = vrot.slane %v3604, %v3617
      %v3619 = vcombine.low %v3611, %v3618
      %v3620 = vcombine.low %v3076, %v3084
      %v3621 = vcombine.low %v3092, %v3091
      %v3623 = vunpack.c.l.s4 1983009808
      %v3624 = vunpack.c.0.s8 %v3623
      %v3625 = vlaneseq
      %v3626 = vshrl.u32 %v3625, 7
      %v3627 = vsub.s32 %v3624, %v3626
      %v3628 = vrot.slane %v3620, %v3627
      %v3630 = vunpack.c.l.s4 1983009808
      %v3631 = vunpack.c.0.s8 %v3630
      %v3632 = vlaneseq
      %v3633 = vshrl.u32 %v3632, 7
      %v3634 = vsub.s32 %v3631, %v3633
      %v3635 = vrot.slane %v3621, %v3634
      %v3636 = vcombine.low %v3628, %v3635
      %v3637 = vcombine.low %v3093, %v3101
      %v3638 = vcombine.low %v3109, %v3108
      %v3640 = vunpack.c.l.s4 1983009808
      %v3641 = vunpack.c.0.s8 %v3640
      %v3642 = vlaneseq
      %v3643 = vshrl.u32 %v3642, 7
      %v3644 = vsub.s32 %v3641, %v3643
      %v3645 = vrot.slane %v3637, %v3644
      %v3647 = vunpack.c.l.s4 1983009808
      %v3648 = vunpack.c.0.s8 %v3647
      %v3649 = vlaneseq
      %v3650 = vshrl.u32 %v3649, 7
      %v3651 = vsub.s32 %v3648, %v3650
      %v3652 = vrot.slane %v3638, %v3651
      %v3653 = vcombine.low %v3645, %v3652
      %v3686 = vpack.c.bf16 %v3143, %v3126
      %v3687 = vpack.c.bf16 %v3177, %v3160
      %v3688 = vpack.c.bf16 %v3211, %v3194
      %v3689 = vpack.c.bf16 %v3245, %v3228
      %v3690 = vpack.c.bf16 %v3279, %v3262
      %v3691 = vpack.c.bf16 %v3313, %v3296
      %v3692 = vpack.c.bf16 %v3347, %v3330
      %v3693 = vpack.c.bf16 %v3381, %v3364
      %v3694 = vpack.c.bf16 %v3415, %v3398
      %v3695 = vpack.c.bf16 %v3449, %v3432
      %v3696 = vpack.c.bf16 %v3483, %v3466
      %v3697 = vpack.c.bf16 %v3517, %v3500
      %v3698 = vpack.c.bf16 %v3551, %v3534
      %v3699 = vpack.c.bf16 %v3585, %v3568
      %v3700 = vpack.c.bf16 %v3619, %v3602
      %v3701 = vpack.c.bf16 %v3653, %v3636
      %v3718 = vunpack.c.l.b16 %v3686
      %v3719 = vunpack.c.h.b16 %v3686
      %v3720 = vunpack.c.l.b16 %v3687
      %v3721 = vunpack.c.h.b16 %v3687
      %v3722 = vunpack.c.l.b16 %v3688
      %v3723 = vunpack.c.h.b16 %v3688
      %v3724 = vunpack.c.l.b16 %v3689
      %v3725 = vunpack.c.h.b16 %v3689
      %v3726 = vunpack.c.l.b16 %v3690
      %v3727 = vunpack.c.h.b16 %v3690
      %v3728 = vunpack.c.l.b16 %v3691
      %v3729 = vunpack.c.h.b16 %v3691
      %v3730 = vunpack.c.l.b16 %v3692
      %v3731 = vunpack.c.h.b16 %v3692
      %v3732 = vunpack.c.l.b16 %v3693
      %v3733 = vunpack.c.h.b16 %v3693
      %v3734 = vunpack.c.l.b16 %v3694
      %v3735 = vunpack.c.h.b16 %v3694
      %v3736 = vunpack.c.l.b16 %v3695
      %v3737 = vunpack.c.h.b16 %v3695
      %v3738 = vunpack.c.l.b16 %v3696
      %v3739 = vunpack.c.h.b16 %v3696
      %v3740 = vunpack.c.l.b16 %v3697
      %v3741 = vunpack.c.h.b16 %v3697
      %v3742 = vunpack.c.l.b16 %v3698
      %v3743 = vunpack.c.h.b16 %v3698
      %v3744 = vunpack.c.l.b16 %v3699
      %v3745 = vunpack.c.h.b16 %v3699
      %v3746 = vunpack.c.l.b16 %v3700
      %v3747 = vunpack.c.h.b16 %v3700
      %v3748 = vunpack.c.l.b16 %v3701
      %v3749 = vunpack.c.h.b16 %v3701
      %v3750 = vpack.c.b16 %v3718, %v3718
      %v3751 = vpack.c.b16 %v3719, %v3719
      %v3752 = vpack.c.b16 %v3720, %v3720
      %v3753 = vpack.c.b16 %v3721, %v3721
      %v3754 = vpack.c.b16 %v3722, %v3722
      %v3755 = vpack.c.b16 %v3723, %v3723
      %v3756 = vpack.c.b16 %v3724, %v3724
      %v3757 = vpack.c.b16 %v3725, %v3725
      %v3758 = vpack.c.b16 %v3726, %v3726
      %v3759 = vpack.c.b16 %v3727, %v3727
      %v3760 = vpack.c.b16 %v3728, %v3728
      %v3761 = vpack.c.b16 %v3729, %v3729
      %v3762 = vpack.c.b16 %v3730, %v3730
      %v3763 = vpack.c.b16 %v3731, %v3731
      %v3764 = vpack.c.b16 %v3732, %v3732
      %v3765 = vpack.c.b16 %v3733, %v3733
      %v3766 = vpack.c.b16 %v3734, %v3734
      %v3767 = vpack.c.b16 %v3735, %v3735
      %v3768 = vpack.c.b16 %v3736, %v3736
      %v3769 = vpack.c.b16 %v3737, %v3737
      %v3770 = vpack.c.b16 %v3738, %v3738
      %v3771 = vpack.c.b16 %v3739, %v3739
      %v3772 = vpack.c.b16 %v3740, %v3740
      %v3773 = vpack.c.b16 %v3741, %v3741
      %v3774 = vpack.c.b16 %v3742, %v3742
      %v3775 = vpack.c.b16 %v3743, %v3743
      %v3776 = vpack.c.b16 %v3744, %v3744
      %v3777 = vpack.c.b16 %v3745, %v3745
      %v3778 = vpack.c.b16 %v3746, %v3746
      %v3779 = vpack.c.b16 %v3747, %v3747
      %v3780 = vpack.c.b16 %v3748, %v3748
      %v3781 = vpack.c.b16 %v3749, %v3749
      %3814 = vst [vmem:[%s194] sm:$0xf] %v3750
      %3815 = vst [vmem:[%s194 + $0x4] sm:$0xf] %v3751
      %3816 = vst [vmem:[%s194 + $0x8] sm:$0xf] %v3752
      %3817 = vst [vmem:[%s194 + $0xc] sm:$0xf] %v3753
      %3818 = vst [vmem:[%s194 + $0x10] sm:$0xf] %v3754
      %3819 = vst [vmem:[%s194 + $0x14] sm:$0xf] %v3755
      %3820 = vst [vmem:[%s194 + $0x18] sm:$0xf] %v3756
      %3821 = vst [vmem:[%s194 + $0x1c] sm:$0xf] %v3757
      %3822 = vst [vmem:[%s194 + $0x20] sm:$0xf] %v3758
      %3823 = vst [vmem:[%s194 + $0x24] sm:$0xf] %v3759
      %3824 = vst [vmem:[%s194 + $0x28] sm:$0xf] %v3760
      %3825 = vst [vmem:[%s194 + $0x2c] sm:$0xf] %v3761
      %3826 = vst [vmem:[%s194 + $0x30] sm:$0xf] %v3762
      %3827 = vst [vmem:[%s194 + $0x34] sm:$0xf] %v3763
      %3828 = vst [vmem:[%s194 + $0x38] sm:$0xf] %v3764
      %3829 = vst [vmem:[%s194 + $0x3c] sm:$0xf] %v3765
      %3830 = vst [vmem:[%s194 + $0x40] sm:$0xf] %v3766
      %3831 = vst [vmem:[%s194 + $0x44] sm:$0xf] %v3767
      %3832 = vst [vmem:[%s194 + $0x48] sm:$0xf] %v3768
      %3833 = vst [vmem:[%s194 + $0x4c] sm:$0xf] %v3769
      %3834 = vst [vmem:[%s194 + $0x50] sm:$0xf] %v3770
      %3835 = vst [vmem:[%s194 + $0x54] sm:$0xf] %v3771
      %3836 = vst [vmem:[%s194 + $0x58] sm:$0xf] %v3772
      %3837 = vst [vmem:[%s194 + $0x5c] sm:$0xf] %v3773
      %3838 = vst [vmem:[%s194 + $0x60] sm:$0xf] %v3774
      %3839 = vst [vmem:[%s194 + $0x64] sm:$0xf] %v3775
      %3840 = vst [vmem:[%s194 + $0x68] sm:$0xf] %v3776
      %3841 = vst [vmem:[%s194 + $0x6c] sm:$0xf] %v3777
      %3842 = vst [vmem:[%s194 + $0x70] sm:$0xf] %v3778
      %3843 = vst [vmem:[%s194 + $0x74] sm:$0xf] %v3779
      %3844 = vst [vmem:[%s194 + $0x78] sm:$0xf] %v3780
      %3845 = vst [vmem:[%s194 + $0x7c] sm:$0xf] %v3781
      %s3846 = smul.u32 16, %s19
      %p3847 = scmp.lt.s32.totalorder %s18, 1
      %s3848 = scalar_select %p3847, %s18, 1
      %p3849 = scmp.lt.s32.totalorder %s3846, 15
      %s3850 = scalar_select %p3849, %s3846, 15
      %s3851 = smul.addr %s3850, 2
      %s3852 = smul.addr %s3848, 32
      %s3853 = sadd.s32 %s3851, %s3852
      %s3854 = smul.addr %s3853, 4
      %s3855 = scalar_lea.vmem %s3, %s3854
      // Predicated region
      $region33: #{bottleneck_forward.4} parent=31 // pred_check
        %p3856 = pneg %p114
      $region34: #{bottleneck_forward.4} parent=31 // pred_check_branch
        %3858 = sbr.rel (%p3856) target = $region36
      $region35: #{bottleneck_forward.4} parent=31 // pred_region
        %s3859 = smul.u32 16, %s19
      $region36: #{bottleneck_forward.4} parent=31 // pred_fallthru
        _
    $region32: #{bottleneck_forward.4} parent=5 // pred_fallthru
      _
    %p3860 = scmp.le.s32.totalorder 2, %s9
    // Predicated region
    $region37: #{bottleneck_forward.4} parent=5 // pred_check
      %p3861 = pneg %p3860
    $region38: #{bottleneck_forward.4} parent=5 // pred_check_branch
      %3863 = sbr.rel (%p3861) target = $region40
    $region39: #{bottleneck_forward.4} parent=5 // pred_region
      %s3864 = ssub.s32 %s9, 2
      // Predicated region
      $region41: #{bottleneck_forward.4} parent=39 // pred_check
        %p3865 = pneg %p120
      $region42: #{bottleneck_forward.4} parent=39 // pred_check_branch
        %3867 = sbr.rel (%p3865) target = $region44
      $region43: #{bottleneck_forward.4} parent=39 // pred_region
        %s3868 = smul.u32 16, %s21
        %p3869 = scmp.lt.s32.totalorder %s20, 1
        %s3870 = scalar_select %p3869, %s20, 1
        %p3871 = scmp.lt.s32.totalorder %s3868, 15
        %s3872 = scalar_select %p3871, %s3868, 15
        %s3873 = smul.addr %s3872, 2
        %s3874 = smul.addr %s3870, 32
        %s3875 = sadd.s32 %s3873, %s3874
        %s3876 = smul.addr %s3875, 4
        %s3877 = scalar_lea.vmem %s3, %s3876
      $region44: #{bottleneck_forward.4} parent=39 // pred_fallthru
        _
    $region40: #{bottleneck_forward.4} parent=5 // pred_fallthru
      _
  $region6: #{bottleneck_forward.4} parent=0 // loop_footer
    %s13 = sadd.s32 1, %s9
  $region7: #{bottleneck_forward.4} parent=0 // loop_footer_branch
    %8 = sbr.rel target = $region3
  $region8: #{bottleneck_forward.4} parent=0 // loop_exit
    _

</llo_original>
